<compile_context>
chip_gen: v7x
topology: tpu7x:2x2x1
jax: 0.10.0
libtpu: 0.0.40
codegen_flags: <defaults>
</compile_context>

<pallas_src>
import math

import jax
import jax.numpy as jnp
from jax import lax
from jax.experimental import pallas as pl
from jax.experimental.pallas import tpu as pltpu


def _silu(x):
    return x * (1.0 / (1.0 + jnp.exp(-x)))


def _softplus(x):
    return jnp.maximum(x, 0.0) + jnp.log(1.0 + jnp.exp(-jnp.abs(x)))


def _ceil_to(a, m):
    return -(-a // m) * m


def _buf_bytes(rows, cols, itemsize=4):
    """Rough (8,128)-tiled VMEM footprint of a 2-D buffer."""
    return _ceil_to(max(rows, 1), 8) * _ceil_to(max(cols, 1), 128) * itemsize


def _vmem_need(TL, d_model, d_inner, d_state, d_conv, dtr_pad, weight_bufs=2):
    io = 4 * _buf_bytes(TL, d_model, 4)                         # in + out blocks, double-buffered
    weights = weight_bufs * (
        _buf_bytes(2, d_model, 4)                               # ln
        + _buf_bytes(d_model, 2 * d_inner, 2)                   # W_in (bf16)
        + _buf_bytes(d_state + d_conv + 3, d_inner, 4)          # aux
        + _buf_bytes(d_inner, dtr_pad + 2 * d_state, 2)         # W_x (bf16)
        + _buf_bytes(dtr_pad, d_inner, 2)                       # W_dt (bf16)
        + _buf_bytes(d_inner, d_model, 2))                      # W_out (bf16)
    scratch = (_buf_bytes(TL + 8, d_inner, 4)                   # conv window
               + 4 * _buf_bytes(TL, d_inner, 4)                 # dt, u, z, y
               + _buf_bytes(TL, 2 * d_state, 4)                 # [B|C]
               + _buf_bytes(d_state, d_inner, 4))                # h
    return io + weights + scratch


def _pick_l_tile(L, need_fn, cap=1024, budget=24 << 20):
    """Largest multiple-of-8 divisor of L that is <= cap and under the VMEM budget."""
    cands = [t for t in range(8, min(L, cap) + 1, 8) if L % t == 0]
    for t in sorted(cands, reverse=True):
        if need_fn(t) <= budget:
            return t
    if cands:
        return cands[0]
    return L


def _pick_chunk(TL):
    for t in (16, 8, 4, 2, 1):
        if TL % t == 0:
            return t
    return 1


def _make_kernel(TL, T, d_model, d_inner, d_state, d_conv, dtr_pad, eps=1e-5):
    PAD = d_conv - 1
    OFF = 8                      # keeps the bulk xs store sublane-aligned
    n_chunks = TL // T

    # aux row layout (A_T first so its d_state-row slab starts sublane-aligned).
    ROW_A = 0
    ROW_CONVW = d_state
    ROW_CONVB = d_state + d_conv
    ROW_BDT = ROW_CONVB + 1
    ROW_D = ROW_CONVB + 2

    def kernel(x_ref, ln_ref, w_in_ref, aux_ref, w_x_ref, w_dt_ref, w_out_ref,
               out_ref,
               xs_ext, dt_scr, u_scr, z_scr, bc_scr, y_scr, h_scr):
        lt = pl.program_id(1)                                   # L-tile index

        x = x_ref[0]                                            # (TL, d_model) f32

        # ---- LayerNorm(d_model), f32 statistics ----
        gamma = ln_ref[0:1, :]
        beta = ln_ref[1:2, :]
        mean = jnp.mean(x, axis=-1, keepdims=True)
        xc = x - mean
        var = jnp.mean(xc * xc, axis=-1, keepdims=True)
        xn = xc * lax.rsqrt(var + eps) * gamma + beta

        # ---- fused in_proj: one bf16 MXU matmul -> [xs | z] ----
        xz = jnp.dot(xn.astype(jnp.bfloat16), w_in_ref[...],
                     preferred_element_type=jnp.float32)        # (TL, 2*d_inner)
        xs = xz[:, :d_inner]
        z_scr[...] = xz[:, d_inner:]        # park the gate; not live across the scan

        # ---- causal depthwise Conv1d along L via pad-and-slice from a
        #      persistent scratch.  Rows [OFF-PAD, OFF) carry the last PAD rows
        #      of the previous L-tile so causality crosses tile boundaries. ----
        @pl.when(lt == 0)
        def _():
            xs_ext[OFF - PAD:OFF, :] = jnp.zeros((PAD, d_inner), jnp.float32)

        @pl.when(lt > 0)
        def _():
            xs_ext[OFF - PAD:OFF, :] = xs_ext[OFF + TL - PAD:OFF + TL, :]

        xs_ext[OFF:OFF + TL, :] = xs

        # TODO(synk): taps k < PAD read sublane-misaligned rows (XLU relayout);
        # only worth realigning via pltpu.roll if XLU becomes the binding slot.
        conv_w = aux_ref[ROW_CONVW:ROW_CONVW + d_conv, :]       # (d_conv, d_inner)
        x_conv = jnp.zeros((TL, d_inner), jnp.float32)
        for k in range(d_conv):
            lo = OFF - PAD + k
            x_conv = x_conv + xs_ext[lo:lo + TL, :] * conv_w[k:k + 1, :]
        u = _silu(x_conv + aux_ref[ROW_CONVB:ROW_CONVB + 1, :])  # (TL, d_inner)
        u_scr[...] = u

        # ---- x_proj (dt kept low-rank): one bf16 matmul -> [dt_low | B | C],
        #      then a small (TL, dtr_pad) @ (dtr_pad, d_inner) dt_proj matmul ----
        dbc = jnp.dot(u.astype(jnp.bfloat16), w_x_ref[...],
                      preferred_element_type=jnp.float32)       # (TL, dtr_pad+2*d_state)
        dt_pre = jnp.dot(dbc[:, :dtr_pad].astype(jnp.bfloat16), w_dt_ref[...],
                         preferred_element_type=jnp.float32)    # (TL, d_inner)
        dt_scr[...] = _softplus(dt_pre + aux_ref[ROW_BDT:ROW_BDT + 1, :])
        bc_scr[...] = dbc[:, dtr_pad:dtr_pad + 2 * d_state]     # one fused store for B|C

        @pl.when(lt == 0)
        def _():
            h_scr[...] = jnp.zeros((d_state, d_inner), jnp.float32)

        # ---- chunked selective scan.  Per chunk: one small (T, 2*d_state)
        #      transpose.  Per step: two row loads, exp on the EUP computed
        #      per step (no (T, d_state, d_inner) live tensor -> no vreg
        #      spill), and a direct masked row store of y (no concatenate). ----
        def chunk_body(ci, h):
            cs = pl.multiple_of(ci * T, T)
            A_T = aux_ref[ROW_A:ROW_A + d_state, :]             # (d_state, d_inner) = -exp(A_log)^T
            bcT = jnp.transpose(bc_scr[pl.ds(cs, T), :])        # (2*d_state, T)
            bT_c = bcT[0:d_state, :]
            cT_c = bcT[d_state:2 * d_state, :]
            for t in range(T):                                  # unrolled
                r = cs + t
                dt_t = dt_scr[pl.ds(r, 1), :]                   # (1, d_inner)
                dtu_t = dt_t * u_scr[pl.ds(r, 1), :]            # (1, d_inner)
                dA_t = jnp.exp(dt_t * A_T)                      # (d_state, d_inner), per-step EUP
                h = dA_t * h + bT_c[:, t:t + 1] * dtu_t
                y_scr[pl.ds(r, 1), :] = jnp.sum(cT_c[:, t:t + 1] * h,
                                                axis=0, keepdims=True)
            return h

        h_scr[...] = lax.fori_loop(0, n_chunks, chunk_body, h_scr[...])

        # ---- D skip, gating, out_proj (bf16 MXU), residual (re-read from VMEM;
        #      nothing big stays live across the scan loop) ----
        y = (y_scr[...] + aux_ref[ROW_D:ROW_D + 1, :] * u_scr[...]) * _silu(z_scr[...])
        out = jnp.dot(y.astype(jnp.bfloat16), w_out_ref[...],
                      preferred_element_type=jnp.float32)       # (TL, d_model)
        out_ref[0] = out + x_ref[0]                             # MambaLayer residual

    return kernel


def mamba_layer_forward(x, params, *, d_state=16, d_conv=4, expand=2,
                        channel_token=False, l_tile=None):
    """Pallas implementation of MambaLayer.forward (patch-token path by default)."""
    x = x.astype(jnp.float32)
    Bn = x.shape[0]
    if channel_token:
        # TODO(synk): channel_token=True wrapper path is supported but not exercised below.
        L = x.shape[1]
        d_model = math.prod(x.shape[2:])
        x_flat = x.reshape(Bn, L, d_model)
    else:
        d_model = x.shape[1]
        L = math.prod(x.shape[2:])
        x_flat = jnp.transpose(x.reshape(Bn, d_model, L), (0, 2, 1))

    d_inner = expand * d_model
    dt_rank = params["W_xdt"].shape[1]
    dtr_pad = max(8, _ceil_to(dt_rank, 8))       # pad low-rank dt to a sublane multiple

    need_fn = lambda tl: _vmem_need(tl, d_model, d_inner, d_state, d_conv, dtr_pad)
    if l_tile is not None and L % l_tile == 0 and (l_tile % 8 == 0 or l_tile == L):
        TL = l_tile
    else:
        TL = _pick_l_tile(L, need_fn)
    T = _pick_chunk(TL)
    assert L % TL == 0 and TL % T == 0 and TL >= d_conv - 1

    f32, bf16 = jnp.float32, jnp.bfloat16
    # Host-side weight prep: fuse in_proj halves, keep dt_proj LOW-RANK (no
    # W_xdt @ W_dt densification), precompute A = -exp(A_log), pack per-channel
    # vectors into one aux array (A_T first so its slab is sublane-aligned).
    W_in = jnp.concatenate([params["W_in_x"], params["W_in_z"]], axis=1).astype(bf16)
    W_xdt = jnp.pad(params["W_xdt"].astype(f32), ((0, 0), (0, dtr_pad - dt_rank)))
    W_x = jnp.concatenate([W_xdt, params["W_xB"], params["W_xC"]], axis=1).astype(bf16)
    W_dt = jnp.pad(params["W_dt"].astype(f32),
                   ((0, dtr_pad - dt_rank), (0, 0))).astype(bf16)
    W_out = params["W_out"].astype(bf16)
    A_T = -jnp.exp(params["A_log_T"].astype(f32))                          # (d_state, d_inner)
    aux = jnp.concatenate([A_T, params["conv_w"], params["conv_b"],
                           params["b_dt"], params["D"]], axis=0).astype(f32)
    ln = jnp.concatenate([params["gamma"], params["beta"]], axis=0).astype(f32)

    kernel = _make_kernel(TL, T, d_model, d_inner, d_state, d_conv, dtr_pad)
    need = _vmem_need(TL, d_model, d_inner, d_state, d_conv, dtr_pad, weight_bufs=2)
    vmem_limit = int(min(max(need * 13 // 10 + (4 << 20), 32 << 20), 64 << 20))

    def run(single_buffer_weights):
        wkw = dict(pipeline_mode=pl.Buffered(1)) if single_buffer_weights else {}
        const = lambda b, l: (0, 0)
        out_flat = pl.pallas_call(
            kernel,
            out_shape=jax.ShapeDtypeStruct((Bn, L, d_model), jnp.float32),
            grid=(Bn, L // TL),
            in_specs=[
                pl.BlockSpec((1, TL, d_model), lambda b, l: (b, l, 0)),
                pl.BlockSpec(ln.shape, const, **wkw),
                pl.BlockSpec(W_in.shape, const, **wkw),
                pl.BlockSpec(aux.shape, const, **wkw),
                pl.BlockSpec(W_x.shape, const, **wkw),
                pl.BlockSpec(W_dt.shape, const, **wkw),
                pl.BlockSpec(W_out.shape, const, **wkw),
            ],
            out_specs=pl.BlockSpec((1, TL, d_model), lambda b, l: (b, l, 0)),
            scratch_shapes=[
                pltpu.VMEM((TL + 8, d_inner), f32),     # conv window + cross-tile carry
                pltpu.VMEM((TL, d_inner), f32),         # dt
                pltpu.VMEM((TL, d_inner), f32),         # u
                pltpu.VMEM((TL, d_inner), f32),         # z (gate)
                pltpu.VMEM((TL, 2 * d_state), f32),     # [B | C]
                pltpu.VMEM((TL, d_inner), f32),         # y
                pltpu.VMEM((d_state, d_inner), f32),    # scan state carried across L tiles
            ],
            compiler_params=pltpu.CompilerParams(
                dimension_semantics=("parallel", "arbitrary"),
                vmem_limit_bytes=vmem_limit),
        )(x_flat, ln, W_in, aux, W_x, W_dt, W_out)
        return jax.block_until_ready(out_flat)

    # Constant-index weight blocks gain nothing from double buffering; try to
    # single-buffer them (halves weight VMEM; matters for large d_inner / v7x)
    # and fall back cleanly if this jax version rejects pipeline_mode here.
    try:
        out_flat = run(True)
    except Exception:
        out_flat = run(False)

    if channel_token:
        out = out_flat.reshape(x.shape)
    else:
        out = jnp.transpose(out_flat, (0, 2, 1)).reshape(x.shape)
    return out


def init_params(key, d_model, d_state, d_conv, expand):
    """Deterministic synthetic parameters with the same shapes as the PyTorch module."""
    d_inner = expand * d_model
    dt_rank = math.ceil(d_model / 16)
    ks = jax.random.split(key, 9)

    def rnd(k, shape, scale):
        return jax.random.normal(k, shape, jnp.float32) * scale

    params = dict(
        gamma=jnp.ones((1, d_model), jnp.float32),               # LayerNorm weight
        beta=jnp.zeros((1, d_model), jnp.float32),               # LayerNorm bias
        W_in_x=rnd(ks[0], (d_model, d_inner), 1.0 / math.sqrt(d_model)),   # in_proj (x half)
        W_in_z=rnd(ks[1], (d_model, d_inner), 1.0 / math.sqrt(d_model)),   # in_proj (z half)
        conv_w=rnd(ks[2], (d_conv, d_inner), 0.4),               # depthwise conv weight [k, c]
        conv_b=rnd(ks[3], (1, d_inner), 0.1),                    # depthwise conv bias
        W_xdt=rnd(ks[4], (d_inner, dt_rank), 1.0 / math.sqrt(d_inner)),    # x_proj (dt part)
        W_xB=rnd(ks[5], (d_inner, d_state), 1.0 / math.sqrt(d_inner)),     # x_proj (B part)
        W_xC=rnd(ks[6], (d_inner, d_state), 1.0 / math.sqrt(d_inner)),     # x_proj (C part)
        W_dt=rnd(ks[7], (dt_rank, d_inner), 1.0 / math.sqrt(max(dt_rank, 1))),  # dt_proj weight^T
        b_dt=jnp.full((1, d_inner), -1.0, jnp.float32),          # dt_proj bias
        A_log_T=jnp.log(jnp.arange(1, d_state + 1, dtype=jnp.float32))[:, None]
                * jnp.ones((1, d_inner), jnp.float32),           # A_log transposed: [s, c]
        D=jnp.ones((1, d_inner), jnp.float32),                   # D skip
        W_out=rnd(ks[8], (d_inner, d_model), 1.0 / math.sqrt(d_inner)),    # out_proj
    )
    return params, d_inner, dt_rank


def mamba_layer_ref(x, p, *, d_state=16, d_conv=4, expand=2, bf16_matmul=False):
    """Pure-JAX reference (patch-token path).  bf16_matmul=True mirrors the
    kernel's bf16-MXU / f32-accumulation matmuls (low-rank dt path in both)."""
    Bn, d_model = x.shape[0], x.shape[1]
    L = math.prod(x.shape[2:])
    mdt = jnp.bfloat16 if bf16_matmul else jnp.float32

    def mm(a, w):
        return jnp.dot(a.astype(mdt), w.astype(mdt), preferred_element_type=jnp.float32)

    xf = jnp.transpose(x.reshape(Bn, d_model, L), (0, 2, 1)).astype(jnp.float32)
    mean = jnp.mean(xf, axis=-1, keepdims=True)
    var = jnp.mean((xf - mean) ** 2, axis=-1, keepdims=True)
    xn = (xf - mean) * lax.rsqrt(var + 1e-5) * p["gamma"] + p["beta"]
    xs = mm(xn, p["W_in_x"])
    z = mm(xn, p["W_in_z"])
    xs_pad = jnp.pad(xs, ((0, 0), (d_conv - 1, 0), (0, 0)))
    x_conv = sum(xs_pad[:, k:k + L, :] * p["conv_w"][k][None, None, :]
                 for k in range(d_conv))
    u = jax.nn.silu(x_conv + p["conv_b"])
    dt_pre = mm(mm(u, p["W_xdt"]), p["W_dt"])            # low-rank, same as kernel
    dt = jax.nn.softplus(dt_pre + p["b_dt"])
    Bm = mm(u, p["W_xB"])
    Cm = mm(u, p["W_xC"])
    A_T = -jnp.exp(p["A_log_T"])                         # (d_state, d_inner)

    def step(h, inp):
        dt_t, u_t, B_t, C_t = inp
        dA = jnp.exp(dt_t[:, None, :] * A_T[None])       # (B, d_state, d_inner)
        dBu = B_t[:, :, None] * (dt_t * u_t)[:, None, :]
        h = dA * h + dBu
        y = jnp.einsum("bs,bsc->bc", C_t, h)
        return h, y

    d_inner = expand * d_model
    h0 = jnp.zeros((Bn, d_state, d_inner), jnp.float32)
    _, ys = lax.scan(step, h0,
                     (jnp.swapaxes(dt, 0, 1), jnp.swapaxes(u, 0, 1),
                      jnp.swapaxes(Bm, 0, 1), jnp.swapaxes(Cm, 0, 1)))
    y = jnp.swapaxes(ys, 0, 1)
    y = (y + p["D"] * u) * jax.nn.silu(z)
    out = mm(y, p["W_out"]) + xf
    return jnp.transpose(out, (0, 2, 1)).reshape(x.shape)


if __name__ == "__main__":
    key = jax.random.PRNGKey(0)
    d_model, d_state, d_conv, expand = 16, 16, 4, 2      # MambaLayer(dim=16)
    params, d_inner, dt_rank = init_params(jax.random.fold_in(key, 1),
                                           d_model, d_state, d_conv, expand)

    # 3-D UNet-style feature map: (B, C, D, H, W) = (2, 16, 4, 4, 4) -> 64 tokens.
    x = jax.random.normal(jax.random.fold_in(key, 2), (2, d_model, 4, 4, 4), jnp.float32)

    # l_tile=32 exercises the L-tiled grid (conv + scan state carried across tiles).
    out = mamba_layer_forward(x, params, d_state=d_state, d_conv=d_conv,
                              expand=expand, l_tile=32)
    out = jax.block_until_ready(out)
    assert out.shape == x.shape and out.dtype == jnp.float32

    # Tight check vs a reference that mirrors the kernel's bf16 MXU matmuls;
    # loose sanity check vs the fully-f32 PyTorch-faithful reference.
    ref_bf = mamba_layer_ref(x, params, d_state=d_state, d_conv=d_conv,
                             expand=expand, bf16_matmul=True)
    with jax.default_matmul_precision("highest"):
        ref_f32 = mamba_layer_ref(x, params, d_state=d_state, d_conv=d_conv,
                                  expand=expand, bf16_matmul=False)
    ref_bf = jax.block_until_ready(ref_bf)
    ref_f32 = jax.block_until_ready(ref_f32)

    err_tight = float(jnp.max(jnp.abs(out - ref_bf)))
    err_loose = float(jnp.max(jnp.abs(out - ref_f32)))
    if (not bool(jnp.all(jnp.isfinite(out)))) or err_tight > 2e-2 or err_loose > 3e-1:
        raise SystemExit(f"Pallas output mismatch: tight={err_tight}, loose={err_loose}")

    print("KERNEL_OK")
</pallas_src>

<mosaic_0001>
module attributes {stable_mosaic.version = 11 : i64} {
  func.func @kernel(%arg0: i32, %arg1: i32, %arg2: memref<1x32x16xf32, #tpu.memory_space<vmem>>, %arg3: memref<2x16xf32, #tpu.memory_space<vmem>>, %arg4: memref<16x64xbf16, #tpu.memory_space<vmem>>, %arg5: memref<23x32xf32, #tpu.memory_space<vmem>>, %arg6: memref<32x40xbf16, #tpu.memory_space<vmem>>, %arg7: memref<8x32xbf16, #tpu.memory_space<vmem>>, %arg8: memref<32x16xbf16, #tpu.memory_space<vmem>>, %arg9: memref<1x32x16xf32, #tpu.memory_space<vmem>>, %arg10: memref<40x32xf32, #tpu.memory_space<vmem>>, %arg11: memref<32x32xf32, #tpu.memory_space<vmem>>, %arg12: memref<32x32xf32, #tpu.memory_space<vmem>>, %arg13: memref<32x32xf32, #tpu.memory_space<vmem>>, %arg14: memref<32x32xf32, #tpu.memory_space<vmem>>, %arg15: memref<32x32xf32, #tpu.memory_space<vmem>>, %arg16: memref<16x32xf32, #tpu.memory_space<vmem>>) attributes {dimension_semantics = [#tpu.dimension_semantics<parallel>, #tpu.dimension_semantics<arbitrary>], iteration_bounds = array<i64: 2, 2>, scalar_prefetch = 0 : i64, scratch_operands = 7 : i64, tpu.core_type = #tpu.core_type<tc>, window_params = [{transform_indices = @transform_0, window_bounds = array<i64: 1, 32, 16>}, {pipeline_mode = #tpu.pipeline_mode<synchronous>, transform_indices = @transform_1, window_bounds = array<i64: 2, 16>}, {pipeline_mode = #tpu.pipeline_mode<synchronous>, transform_indices = @transform_2, window_bounds = array<i64: 16, 64>}, {pipeline_mode = #tpu.pipeline_mode<synchronous>, transform_indices = @transform_3, window_bounds = array<i64: 23, 32>}, {pipeline_mode = #tpu.pipeline_mode<synchronous>, transform_indices = @transform_4, window_bounds = array<i64: 32, 40>}, {pipeline_mode = #tpu.pipeline_mode<synchronous>, transform_indices = @transform_5, window_bounds = array<i64: 8, 32>}, {pipeline_mode = #tpu.pipeline_mode<synchronous>, transform_indices = @transform_6, window_bounds = array<i64: 32, 16>}, {transform_indices = @transform_7, window_bounds = array<i64: 1, 32, 16>}]} {
    %c0 = arith.constant 0 : index
    %c0_0 = arith.constant 0 : index
    %c0_1 = arith.constant 0 : index
    %0 = vector.load %arg2[%c0, %c0_0, %c0_1] : memref<1x32x16xf32, #tpu.memory_space<vmem>>, vector<1x32x16xf32>
    %1 = vector.shape_cast %0 : vector<1x32x16xf32> to vector<32x16xf32>
    %c0_2 = arith.constant 0 : index
    %c0_3 = arith.constant 0 : index
    %2 = vector.load %arg3[%c0_2, %c0_3] : memref<2x16xf32, #tpu.memory_space<vmem>>, vector<1x16xf32>
    %c1 = arith.constant 1 : index
    %c0_4 = arith.constant 0 : index
    %3 = vector.load %arg3[%c1, %c0_4] : memref<2x16xf32, #tpu.memory_space<vmem>>, vector<1x16xf32>
    %cst = arith.constant dense<0.000000e+00> : vector<32xf32>
    %4 = vector.multi_reduction <add>, %1, %cst [1] : vector<32x16xf32> to vector<32xf32>
    %5 = vector.shape_cast %4 : vector<32xf32> to vector<32x1xf32>
    %cst_5 = arith.constant 1.600000e+01 : f32
    %6 = vector.broadcast %cst_5 : f32 to vector<32x1xf32>
    %7 = arith.divf %5, %6 : vector<32x1xf32>
    %8 = vector.broadcast %7 : vector<32x1xf32> to vector<32x16xf32>
    %9 = arith.subf %1, %8 : vector<32x16xf32>
    %10 = arith.mulf %9, %9 : vector<32x16xf32>
    %cst_6 = arith.constant dense<0.000000e+00> : vector<32xf32>
    %11 = vector.multi_reduction <add>, %10, %cst_6 [1] : vector<32x16xf32> to vector<32xf32>
    %12 = vector.shape_cast %11 : vector<32xf32> to vector<32x1xf32>
    %cst_7 = arith.constant 1.600000e+01 : f32
    %13 = vector.broadcast %cst_7 : f32 to vector<32x1xf32>
    %14 = arith.divf %12, %13 : vector<32x1xf32>
    %cst_8 = arith.constant 9.99999974E-6 : f32
    %15 = vector.broadcast %cst_8 : f32 to vector<32x1xf32>
    %16 = arith.addf %14, %15 : vector<32x1xf32>
    %17 = math.rsqrt %16 : vector<32x1xf32>
    %18 = vector.broadcast %17 : vector<32x1xf32> to vector<32x16xf32>
    %19 = arith.mulf %9, %18 : vector<32x16xf32>
    %20 = vector.broadcast %2 : vector<1x16xf32> to vector<32x16xf32>
    %21 = arith.mulf %19, %20 : vector<32x16xf32>
    %22 = vector.broadcast %3 : vector<1x16xf32> to vector<32x16xf32>
    %23 = arith.addf %21, %22 : vector<32x16xf32>
    %24 = arith.truncf %23 : vector<32x16xf32> to vector<32x16xbf16>
    %c0_9 = arith.constant 0 : index
    %c0_10 = arith.constant 0 : index
    %25 = vector.load %arg4[%c0_9, %c0_10] : memref<16x64xbf16, #tpu.memory_space<vmem>>, vector<16x64xbf16>
    %cst_11 = arith.constant dense<0.000000e+00> : vector<32x64xf32>
    %26 = tpu.matmul %24, %25, %cst_11 {dimension_numbers = #tpu.dot_dimension_numbers<[1], [0], [0], [1], [0, 0, 1, 1], [], []>} : vector<32x16xbf16>, vector<16x64xbf16>, vector<32x64xf32> -> vector<32x64xf32>
    %27 = vector.extract_strided_slice %26 {offsets = [0, 0], sizes = [32, 32], strides = [1, 1]} : vector<32x64xf32> to vector<32x32xf32>
    %28 = vector.extract_strided_slice %26 {offsets = [0, 32], sizes = [32, 32], strides = [1, 1]} : vector<32x64xf32> to vector<32x32xf32>
    %c0_12 = arith.constant 0 : index
    %c0_13 = arith.constant 0 : index
    %29 = vector.load %arg13[%c0_12, %c0_13] : memref<32x32xf32, #tpu.memory_space<vmem>>, vector<32x32xf32>
    tpu.vector_store %arg13[%c0_12, %c0_13], %28 {strides = array<i32>} : memref<32x32xf32, #tpu.memory_space<vmem>>, vector<32x32xf32>,
    %c0_i32 = arith.constant 0 : i32
    %30 = arith.cmpi eq, %arg1, %c0_i32 : i32
    %31 = arith.extui %30 : i1 to i32
    %c0_i32_14 = arith.constant 0 : i32
    %32 = arith.cmpi ne, %31, %c0_i32_14 : i32
    scf.if %32 {
      %cst_72 = arith.constant 0.000000e+00 : f32
      %126 = vector.broadcast %cst_72 : f32 to vector<3x32xf32>
      %c5_73 = arith.constant 5 : index
      %c0_74 = arith.constant 0 : index
      %127 = vector.load %arg10[%c5_73, %c0_74] : memref<40x32xf32, #tpu.memory_space<vmem>>, vector<3x32xf32>
      tpu.vector_store %arg10[%c5_73, %c0_74], %126 {strides = array<i32>} : memref<40x32xf32, #tpu.memory_space<vmem>>, vector<3x32xf32>,
    } else {
    }
    %c0_i32_15 = arith.constant 0 : i32
    %33 = arith.cmpi sgt, %arg1, %c0_i32_15 : i32
    %34 = arith.extui %33 : i1 to i32
    %c0_i32_16 = arith.constant 0 : i32
    %35 = arith.cmpi ne, %34, %c0_i32_16 : i32
    scf.if %35 {
      %c37 = arith.constant 37 : index
      %c0_72 = arith.constant 0 : index
      %126 = vector.load %arg10[%c37, %c0_72] : memref<40x32xf32, #tpu.memory_space<vmem>>, vector<3x32xf32>
      %c5_73 = arith.constant 5 : index
      %c0_74 = arith.constant 0 : index
      %127 = vector.load %arg10[%c5_73, %c0_74] : memref<40x32xf32, #tpu.memory_space<vmem>>, vector<3x32xf32>
      tpu.vector_store %arg10[%c5_73, %c0_74], %126 {strides = array<i32>} : memref<40x32xf32, #tpu.memory_space<vmem>>, vector<3x32xf32>,
    } else {
    }
    %c8 = arith.constant 8 : index
    %c0_17 = arith.constant 0 : index
    %36 = vector.load %arg10[%c8, %c0_17] : memref<40x32xf32, #tpu.memory_space<vmem>>, vector<32x32xf32>
    tpu.vector_store %arg10[%c8, %c0_17], %27 {strides = array<i32>} : memref<40x32xf32, #tpu.memory_space<vmem>>, vector<32x32xf32>,
    %c16 = arith.constant 16 : index
    %c0_18 = arith.constant 0 : index
    %37 = vector.load %arg5[%c16, %c0_18] : memref<23x32xf32, #tpu.memory_space<vmem>>, vector<4x32xf32>
    %cst_19 = arith.constant 0.000000e+00 : f32
    %38 = vector.broadcast %cst_19 : f32 to vector<32x32xf32>
    %c5 = arith.constant 5 : index
    %c0_20 = arith.constant 0 : index
    %39 = vector.load %arg10[%c5, %c0_20] : memref<40x32xf32, #tpu.memory_space<vmem>>, vector<32x32xf32>
    %40 = vector.extract_strided_slice %37 {offsets = [0, 0], sizes = [1, 32], strides = [1, 1]} : vector<4x32xf32> to vector<1x32xf32>
    %41 = vector.broadcast %40 : vector<1x32xf32> to vector<32x32xf32>
    %42 = arith.mulf %39, %41 : vector<32x32xf32>
    %43 = arith.addf %38, %42 : vector<32x32xf32>
    %c6 = arith.constant 6 : index
    %c0_21 = arith.constant 0 : index
    %44 = vector.load %arg10[%c6, %c0_21] : memref<40x32xf32, #tpu.memory_space<vmem>>, vector<32x32xf32>
    %45 = vector.extract_strided_slice %37 {offsets = [1, 0], sizes = [1, 32], strides = [1, 1]} : vector<4x32xf32> to vector<1x32xf32>
    %46 = vector.broadcast %45 : vector<1x32xf32> to vector<32x32xf32>
    %47 = arith.mulf %44, %46 : vector<32x32xf32>
    %48 = arith.addf %43, %47 : vector<32x32xf32>
    %c7 = arith.constant 7 : index
    %c0_22 = arith.constant 0 : index
    %49 = vector.load %arg10[%c7, %c0_22] : memref<40x32xf32, #tpu.memory_space<vmem>>, vector<32x32xf32>
    %50 = vector.extract_strided_slice %37 {offsets = [2, 0], sizes = [1, 32], strides = [1, 1]} : vector<4x32xf32> to vector<1x32xf32>
    %51 = vector.broadcast %50 : vector<1x32xf32> to vector<32x32xf32>
    %52 = arith.mulf %49, %51 : vector<32x32xf32>
    %53 = arith.addf %48, %52 : vector<32x32xf32>
    %c8_23 = arith.constant 8 : index
    %c0_24 = arith.constant 0 : index
    %54 = vector.load %arg10[%c8_23, %c0_24] : memref<40x32xf32, #tpu.memory_space<vmem>>, vector<32x32xf32>
    %55 = vector.extract_strided_slice %37 {offsets = [3, 0], sizes = [1, 32], strides = [1, 1]} : vector<4x32xf32> to vector<1x32xf32>
    %56 = vector.broadcast %55 : vector<1x32xf32> to vector<32x32xf32>
    %57 = arith.mulf %54, %56 : vector<32x32xf32>
    %58 = arith.addf %53, %57 : vector<32x32xf32>
    %c20 = arith.constant 20 : index
    %c0_25 = arith.constant 0 : index
    %59 = vector.load %arg5[%c20, %c0_25] : memref<23x32xf32, #tpu.memory_space<vmem>>, vector<1x32xf32>
    %60 = vector.broadcast %59 : vector<1x32xf32> to vector<32x32xf32>
    %61 = arith.addf %58, %60 : vector<32x32xf32>
    %cst_26 = arith.constant 0.000000e+00 : f32
    %62 = vector.broadcast %cst_26 : f32 to vector<32x32xf32>
    %63 = arith.subf %62, %61 : vector<32x32xf32>
    %64 = math.exp %63 : vector<32x32xf32>
    %cst_27 = arith.constant 1.000000e+00 : f32
    %65 = vector.broadcast %cst_27 : f32 to vector<32x32xf32>
    %66 = arith.addf %65, %64 : vector<32x32xf32>
    %cst_28 = arith.constant 1.000000e+00 : f32
    %67 = vector.broadcast %cst_28 : f32 to vector<32x32xf32>
    %68 = arith.divf %67, %66 : vector<32x32xf32>
    %69 = arith.mulf %61, %68 : vector<32x32xf32>
    %c0_29 = arith.constant 0 : index
    %c0_30 = arith.constant 0 : index
    %70 = vector.load %arg12[%c0_29, %c0_30] : memref<32x32xf32, #tpu.memory_space<vmem>>, vector<32x32xf32>
    tpu.vector_store %arg12[%c0_29, %c0_30], %69 {strides = array<i32>} : memref<32x32xf32, #tpu.memory_space<vmem>>, vector<32x32xf32>,
    %71 = arith.truncf %69 : vector<32x32xf32> to vector<32x32xbf16>
    %c0_31 = arith.constant 0 : index
    %c0_32 = arith.constant 0 : index
    %72 = vector.load %arg6[%c0_31, %c0_32] : memref<32x40xbf16, #tpu.memory_space<vmem>>, vector<32x40xbf16>
    %cst_33 = arith.constant dense<0.000000e+00> : vector<32x40xf32>
    %73 = tpu.matmul %71, %72, %cst_33 {dimension_numbers = #tpu.dot_dimension_numbers<[1], [0], [0], [1], [0, 0, 1, 1], [], []>} : vector<32x32xbf16>, vector<32x40xbf16>, vector<32x40xf32> -> vector<32x40xf32>
    %74 = vector.extract_strided_slice %73 {offsets = [0, 0], sizes = [32, 8], strides = [1, 1]} : vector<32x40xf32> to vector<32x8xf32>
    %75 = arith.truncf %74 : vector<32x8xf32> to vector<32x8xbf16>
    %c0_34 = arith.constant 0 : index
    %c0_35 = arith.constant 0 : index
    %76 = vector.load %arg7[%c0_34, %c0_35] : memref<8x32xbf16, #tpu.memory_space<vmem>>, vector<8x32xbf16>
    %cst_36 = arith.constant dense<0.000000e+00> : vector<32x32xf32>
    %77 = tpu.matmul %75, %76, %cst_36 {dimension_numbers = #tpu.dot_dimension_numbers<[1], [0], [0], [1], [0, 0, 1, 1], [], []>} : vector<32x8xbf16>, vector<8x32xbf16>, vector<32x32xf32> -> vector<32x32xf32>
    %c21 = arith.constant 21 : index
    %c0_37 = arith.constant 0 : index
    %78 = vector.load %arg5[%c21, %c0_37] : memref<23x32xf32, #tpu.memory_space<vmem>>, vector<1x32xf32>
    %79 = vector.broadcast %78 : vector<1x32xf32> to vector<32x32xf32>
    %80 = arith.addf %77, %79 : vector<32x32xf32>
    %cst_38 = arith.constant 0.000000e+00 : f32
    %81 = vector.broadcast %cst_38 : f32 to vector<32x32xf32>
    %82 = arith.maximumf %80, %81 : vector<32x32xf32>
    %83 = math.absf %80 : vector<32x32xf32>
    %cst_39 = arith.constant 0.000000e+00 : f32
    %84 = vector.broadcast %cst_39 : f32 to vector<32x32xf32>
    %85 = arith.subf %84, %83 : vector<32x32xf32>
    %86 = math.exp %85 : vector<32x32xf32>
    %cst_40 = arith.constant 1.000000e+00 : f32
    %87 = vector.broadcast %cst_40 : f32 to vector<32x32xf32>
    %88 = arith.addf %87, %86 : vector<32x32xf32>
    %89 = math.log %88 : vector<32x32xf32>
    %90 = arith.addf %82, %89 : vector<32x32xf32>
    %c0_41 = arith.constant 0 : index
    %c0_42 = arith.constant 0 : index
    %91 = vector.load %arg11[%c0_41, %c0_42] : memref<32x32xf32, #tpu.memory_space<vmem>>, vector<32x32xf32>
    tpu.vector_store %arg11[%c0_41, %c0_42], %90 {strides = array<i32>} : memref<32x32xf32, #tpu.memory_space<vmem>>, vector<32x32xf32>,
    %92 = vector.extract_strided_slice %73 {offsets = [0, 8], sizes = [32, 32], strides = [1, 1]} : vector<32x40xf32> to vector<32x32xf32>
    %c0_43 = arith.constant 0 : index
    %c0_44 = arith.constant 0 : index
    %93 = vector.load %arg14[%c0_43, %c0_44] : memref<32x32xf32, #tpu.memory_space<vmem>>, vector<32x32xf32>
    tpu.vector_store %arg14[%c0_43, %c0_44], %92 {strides = array<i32>} : memref<32x32xf32, #tpu.memory_space<vmem>>, vector<32x32xf32>,
    %c0_i32_45 = arith.constant 0 : i32
    %94 = arith.cmpi eq, %arg1, %c0_i32_45 : i32
    %95 = arith.extui %94 : i1 to i32
    %c0_i32_46 = arith.constant 0 : i32
    %96 = arith.cmpi ne, %95, %c0_i32_46 : i32
    scf.if %96 {
      %cst_72 = arith.constant 0.000000e+00 : f32
      %126 = vector.broadcast %cst_72 : f32 to vector<16x32xf32>
      %c0_73 = arith.constant 0 : index
      %c0_74 = arith.constant 0 : index
      %127 = vector.load %arg16[%c0_73, %c0_74] : memref<16x32xf32, #tpu.memory_space<vmem>>, vector<16x32xf32>
      tpu.vector_store %arg16[%c0_73, %c0_74], %126 {strides = array<i32>} : memref<16x32xf32, #tpu.memory_space<vmem>>, vector<16x32xf32>,
    } else {
    }
    %c0_47 = arith.constant 0 : index
    %c0_48 = arith.constant 0 : index
    %97 = vector.load %arg16[%c0_47, %c0_48] : memref<16x32xf32, #tpu.memory_space<vmem>>, vector<16x32xf32>
    %c0_i32_49 = arith.constant 0 : i32
    %c2_i32 = arith.constant 2 : i32
    %98 = arith.addi %c0_i32_49, %c2_i32 : i32
    %c1_i32 = arith.constant 1 : i32
    %99 = scf.for %arg17 = %c0_i32_49 to %98 step %c1_i32 iter_args(%arg18 = %97) -> (vector<16x32xf32>)  : i32 {
      %c16_i32 = arith.constant 16 : i32
      %126 = arith.muli %arg17, %c16_i32 : i32
      %127 = tpu.assume_multiple %126, 16 : i32
      %c0_72 = arith.constant 0 : index
      %c0_73 = arith.constant 0 : index
      %128 = vector.load %arg5[%c0_72, %c0_73] : memref<23x32xf32, #tpu.memory_space<vmem>>, vector<16x32xf32>
      %129 = arith.index_cast %127 : i32 to index
      %c0_74 = arith.constant 0 : index
      %130 = vector.load %arg14[%129, %c0_74] : memref<32x32xf32, #tpu.memory_space<vmem>>, vector<16x32xf32>
      %131 = tpu.transpose %130, [1, 0] : vector<16x32xf32> -> vector<32x16xf32>
      %132 = vector.extract_strided_slice %131 {offsets = [0, 0], sizes = [16, 16], strides = [1, 1]} : vector<32x16xf32> to vector<16x16xf32>
      %133 = vector.extract_strided_slice %131 {offsets = [16, 0], sizes = [16, 16], strides = [1, 1]} : vector<32x16xf32> to vector<16x16xf32>
      %c0_i32_75 = arith.constant 0 : i32
      %134 = arith.addi %127, %c0_i32_75 : i32
      %135 = arith.index_cast %134 : i32 to index
      %c0_76 = arith.constant 0 : index
      %136 = vector.load %arg11[%135, %c0_76] : memref<32x32xf32, #tpu.memory_space<vmem>>, vector<1x32xf32>
      %137 = arith.index_cast %134 : i32 to index
      %c0_77 = arith.constant 0 : index
      %138 = vector.load %arg12[%137, %c0_77] : memref<32x32xf32, #tpu.memory_space<vmem>>, vector<1x32xf32>
      %139 = arith.mulf %136, %138 : vector<1x32xf32>
      %140 = vector.broadcast %136 : vector<1x32xf32> to vector<16x32xf32>
      %141 = arith.mulf %140, %128 : vector<16x32xf32>
      %142 = math.exp %141 : vector<16x32xf32>
      %143 = arith.mulf %142, %arg18 : vector<16x32xf32>
      %144 = vector.extract_strided_slice %132 {offsets = [0, 0], sizes = [16, 1], strides = [1, 1]} : vector<16x16xf32> to vector<16x1xf32>
      %145 = vector.broadcast %144 : vector<16x1xf32> to vector<16x32xf32>
      %146 = vector.broadcast %139 : vector<1x32xf32> to vector<16x32xf32>
      %147 = arith.mulf %145, %146 : vector<16x32xf32>
      %148 = arith.addf %143, %147 : vector<16x32xf32>
      %149 = vector.extract_strided_slice %133 {offsets = [0, 0], sizes = [16, 1], strides = [1, 1]} : vector<16x16xf32> to vector<16x1xf32>
      %150 = vector.broadcast %149 : vector<16x1xf32> to vector<16x32xf32>
      %151 = arith.mulf %150, %148 : vector<16x32xf32>
      %cst_78 = arith.constant dense<0.000000e+00> : vector<32xf32>
      %152 = vector.multi_reduction <add>, %151, %cst_78 [0] : vector<16x32xf32> to vector<32xf32>
      %153 = vector.shape_cast %152 : vector<32xf32> to vector<1x32xf32>
      %154 = arith.index_cast %134 : i32 to index
      %c0_79 = arith.constant 0 : index
      %155 = vector.load %arg15[%154, %c0_79] : memref<32x32xf32, #tpu.memory_space<vmem>>, vector<1x32xf32>
      tpu.vector_store %arg15[%154, %c0_79], %153 {strides = array<i32>} : memref<32x32xf32, #tpu.memory_space<vmem>>, vector<1x32xf32>,
      %c1_i32_80 = arith.constant 1 : i32
      %156 = arith.addi %127, %c1_i32_80 : i32
      %157 = arith.index_cast %156 : i32 to index
      %c0_81 = arith.constant 0 : index
      %158 = vector.load %arg11[%157, %c0_81] : memref<32x32xf32, #tpu.memory_space<vmem>>, vector<1x32xf32>
      %159 = arith.index_cast %156 : i32 to index
      %c0_82 = arith.constant 0 : index
      %160 = vector.load %arg12[%159, %c0_82] : memref<32x32xf32, #tpu.memory_space<vmem>>, vector<1x32xf32>
      %161 = arith.mulf %158, %160 : vector<1x32xf32>
      %162 = vector.broadcast %158 : vector<1x32xf32> to vector<16x32xf32>
      %163 = arith.mulf %162, %128 : vector<16x32xf32>
      %164 = math.exp %163 : vector<16x32xf32>
      %165 = arith.mulf %164, %148 : vector<16x32xf32>
      %166 = vector.extract_strided_slice %132 {offsets = [0, 1], sizes = [16, 1], strides = [1, 1]} : vector<16x16xf32> to vector<16x1xf32>
      %167 = vector.broadcast %166 : vector<16x1xf32> to vector<16x32xf32>
      %168 = vector.broadcast %161 : vector<1x32xf32> to vector<16x32xf32>
      %169 = arith.mulf %167, %168 : vector<16x32xf32>
      %170 = arith.addf %165, %169 : vector<16x32xf32>
      %171 = vector.extract_strided_slice %133 {offsets = [0, 1], sizes = [16, 1], strides = [1, 1]} : vector<16x16xf32> to vector<16x1xf32>
      %172 = vector.broadcast %171 : vector<16x1xf32> to vector<16x32xf32>
      %173 = arith.mulf %172, %170 : vector<16x32xf32>
      %cst_83 = arith.constant dense<0.000000e+00> : vector<32xf32>
      %174 = vector.multi_reduction <add>, %173, %cst_83 [0] : vector<16x32xf32> to vector<32xf32>
      %175 = vector.shape_cast %174 : vector<32xf32> to vector<1x32xf32>
      %176 = arith.index_cast %156 : i32 to index
      %c0_84 = arith.constant 0 : index
      %177 = vector.load %arg15[%176, %c0_84] : memref<32x32xf32, #tpu.memory_space<vmem>>, vector<1x32xf32>
      tpu.vector_store %arg15[%176, %c0_84], %175 {strides = array<i32>} : memref<32x32xf32, #tpu.memory_space<vmem>>, vector<1x32xf32>,
      %c2_i32_85 = arith.constant 2 : i32
      %178 = arith.addi %127, %c2_i32_85 : i32
      %179 = arith.index_cast %178 : i32 to index
      %c0_86 = arith.constant 0 : index
      %180 = vector.load %arg11[%179, %c0_86] : memref<32x32xf32, #tpu.memory_space<vmem>>, vector<1x32xf32>
      %181 = arith.index_cast %178 : i32 to index
      %c0_87 = arith.constant 0 : index
      %182 = vector.load %arg12[%181, %c0_87] : memref<32x32xf32, #tpu.memory_space<vmem>>, vector<1x32xf32>
      %183 = arith.mulf %180, %182 : vector<1x32xf32>
      %184 = vector.broadcast %180 : vector<1x32xf32> to vector<16x32xf32>
      %185 = arith.mulf %184, %128 : vector<16x32xf32>
      %186 = math.exp %185 : vector<16x32xf32>
      %187 = arith.mulf %186, %170 : vector<16x32xf32>
      %188 = vector.extract_strided_slice %132 {offsets = [0, 2], sizes = [16, 1], strides = [1, 1]} : vector<16x16xf32> to vector<16x1xf32>
      %189 = vector.broadcast %188 : vector<16x1xf32> to vector<16x32xf32>
      %190 = vector.broadcast %183 : vector<1x32xf32> to vector<16x32xf32>
      %191 = arith.mulf %189, %190 : vector<16x32xf32>
      %192 = arith.addf %187, %191 : vector<16x32xf32>
      %193 = vector.extract_strided_slice %133 {offsets = [0, 2], sizes = [16, 1], strides = [1, 1]} : vector<16x16xf32> to vector<16x1xf32>
      %194 = vector.broadcast %193 : vector<16x1xf32> to vector<16x32xf32>
      %195 = arith.mulf %194, %192 : vector<16x32xf32>
      %cst_88 = arith.constant dense<0.000000e+00> : vector<32xf32>
      %196 = vector.multi_reduction <add>, %195, %cst_88 [0] : vector<16x32xf32> to vector<32xf32>
      %197 = vector.shape_cast %196 : vector<32xf32> to vector<1x32xf32>
      %198 = arith.index_cast %178 : i32 to index
      %c0_89 = arith.constant 0 : index
      %199 = vector.load %arg15[%198, %c0_89] : memref<32x32xf32, #tpu.memory_space<vmem>>, vector<1x32xf32>
      tpu.vector_store %arg15[%198, %c0_89], %197 {strides = array<i32>} : memref<32x32xf32, #tpu.memory_space<vmem>>, vector<1x32xf32>,
      %c3_i32 = arith.constant 3 : i32
      %200 = arith.addi %127, %c3_i32 : i32
      %201 = arith.index_cast %200 : i32 to index
      %c0_90 = arith.constant 0 : index
      %202 = vector.load %arg11[%201, %c0_90] : memref<32x32xf32, #tpu.memory_space<vmem>>, vector<1x32xf32>
      %203 = arith.index_cast %200 : i32 to index
      %c0_91 = arith.constant 0 : index
      %204 = vector.load %arg12[%203, %c0_91] : memref<32x32xf32, #tpu.memory_space<vmem>>, vector<1x32xf32>
      %205 = arith.mulf %202, %204 : vector<1x32xf32>
      %206 = vector.broadcast %202 : vector<1x32xf32> to vector<16x32xf32>
      %207 = arith.mulf %206, %128 : vector<16x32xf32>
      %208 = math.exp %207 : vector<16x32xf32>
      %209 = arith.mulf %208, %192 : vector<16x32xf32>
      %210 = vector.extract_strided_slice %132 {offsets = [0, 3], sizes = [16, 1], strides = [1, 1]} : vector<16x16xf32> to vector<16x1xf32>
      %211 = vector.broadcast %210 : vector<16x1xf32> to vector<16x32xf32>
      %212 = vector.broadcast %205 : vector<1x32xf32> to vector<16x32xf32>
      %213 = arith.mulf %211, %212 : vector<16x32xf32>
      %214 = arith.addf %209, %213 : vector<16x32xf32>
      %215 = vector.extract_strided_slice %133 {offsets = [0, 3], sizes = [16, 1], strides = [1, 1]} : vector<16x16xf32> to vector<16x1xf32>
      %216 = vector.broadcast %215 : vector<16x1xf32> to vector<16x32xf32>
      %217 = arith.mulf %216, %214 : vector<16x32xf32>
      %cst_92 = arith.constant dense<0.000000e+00> : vector<32xf32>
      %218 = vector.multi_reduction <add>, %217, %cst_92 [0] : vector<16x32xf32> to vector<32xf32>
      %219 = vector.shape_cast %218 : vector<32xf32> to vector<1x32xf32>
      %220 = arith.index_cast %200 : i32 to index
      %c0_93 = arith.constant 0 : index
      %221 = vector.load %arg15[%220, %c0_93] : memref<32x32xf32, #tpu.memory_space<vmem>>, vector<1x32xf32>
      tpu.vector_store %arg15[%220, %c0_93], %219 {strides = array<i32>} : memref<32x32xf32, #tpu.memory_space<vmem>>, vector<1x32xf32>,
      %c4_i32 = arith.constant 4 : i32
      %222 = arith.addi %127, %c4_i32 : i32
      %223 = arith.index_cast %222 : i32 to index
      %c0_94 = arith.constant 0 : index
      %224 = vector.load %arg11[%223, %c0_94] : memref<32x32xf32, #tpu.memory_space<vmem>>, vector<1x32xf32>
      %225 = arith.index_cast %222 : i32 to index
      %c0_95 = arith.constant 0 : index
      %226 = vector.load %arg12[%225, %c0_95] : memref<32x32xf32, #tpu.memory_space<vmem>>, vector<1x32xf32>
      %227 = arith.mulf %224, %226 : vector<1x32xf32>
      %228 = vector.broadcast %224 : vector<1x32xf32> to vector<16x32xf32>
      %229 = arith.mulf %228, %128 : vector<16x32xf32>
      %230 = math.exp %229 : vector<16x32xf32>
      %231 = arith.mulf %230, %214 : vector<16x32xf32>
      %232 = vector.extract_strided_slice %132 {offsets = [0, 4], sizes = [16, 1], strides = [1, 1]} : vector<16x16xf32> to vector<16x1xf32>
      %233 = vector.broadcast %232 : vector<16x1xf32> to vector<16x32xf32>
      %234 = vector.broadcast %227 : vector<1x32xf32> to vector<16x32xf32>
      %235 = arith.mulf %233, %234 : vector<16x32xf32>
      %236 = arith.addf %231, %235 : vector<16x32xf32>
      %237 = vector.extract_strided_slice %133 {offsets = [0, 4], sizes = [16, 1], strides = [1, 1]} : vector<16x16xf32> to vector<16x1xf32>
      %238 = vector.broadcast %237 : vector<16x1xf32> to vector<16x32xf32>
      %239 = arith.mulf %238, %236 : vector<16x32xf32>
      %cst_96 = arith.constant dense<0.000000e+00> : vector<32xf32>
      %240 = vector.multi_reduction <add>, %239, %cst_96 [0] : vector<16x32xf32> to vector<32xf32>
      %241 = vector.shape_cast %240 : vector<32xf32> to vector<1x32xf32>
      %242 = arith.index_cast %222 : i32 to index
      %c0_97 = arith.constant 0 : index
      %243 = vector.load %arg15[%242, %c0_97] : memref<32x32xf32, #tpu.memory_space<vmem>>, vector<1x32xf32>
      tpu.vector_store %arg15[%242, %c0_97], %241 {strides = array<i32>} : memref<32x32xf32, #tpu.memory_space<vmem>>, vector<1x32xf32>,
      %c5_i32 = arith.constant 5 : i32
      %244 = arith.addi %127, %c5_i32 : i32
      %245 = arith.index_cast %244 : i32 to index
      %c0_98 = arith.constant 0 : index
      %246 = vector.load %arg11[%245, %c0_98] : memref<32x32xf32, #tpu.memory_space<vmem>>, vector<1x32xf32>
      %247 = arith.index_cast %244 : i32 to index
      %c0_99 = arith.constant 0 : index
      %248 = vector.load %arg12[%247, %c0_99] : memref<32x32xf32, #tpu.memory_space<vmem>>, vector<1x32xf32>
      %249 = arith.mulf %246, %248 : vector<1x32xf32>
      %250 = vector.broadcast %246 : vector<1x32xf32> to vector<16x32xf32>
      %251 = arith.mulf %250, %128 : vector<16x32xf32>
      %252 = math.exp %251 : vector<16x32xf32>
      %253 = arith.mulf %252, %236 : vector<16x32xf32>
      %254 = vector.extract_strided_slice %132 {offsets = [0, 5], sizes = [16, 1], strides = [1, 1]} : vector<16x16xf32> to vector<16x1xf32>
      %255 = vector.broadcast %254 : vector<16x1xf32> to vector<16x32xf32>
      %256 = vector.broadcast %249 : vector<1x32xf32> to vector<16x32xf32>
      %257 = arith.mulf %255, %256 : vector<16x32xf32>
      %258 = arith.addf %253, %257 : vector<16x32xf32>
      %259 = vector.extract_strided_slice %133 {offsets = [0, 5], sizes = [16, 1], strides = [1, 1]} : vector<16x16xf32> to vector<16x1xf32>
      %260 = vector.broadcast %259 : vector<16x1xf32> to vector<16x32xf32>
      %261 = arith.mulf %260, %258 : vector<16x32xf32>
      %cst_100 = arith.constant dense<0.000000e+00> : vector<32xf32>
      %262 = vector.multi_reduction <add>, %261, %cst_100 [0] : vector<16x32xf32> to vector<32xf32>
      %263 = vector.shape_cast %262 : vector<32xf32> to vector<1x32xf32>
      %264 = arith.index_cast %244 : i32 to index
      %c0_101 = arith.constant 0 : index
      %265 = vector.load %arg15[%264, %c0_101] : memref<32x32xf32, #tpu.memory_space<vmem>>, vector<1x32xf32>
      tpu.vector_store %arg15[%264, %c0_101], %263 {strides = array<i32>} : memref<32x32xf32, #tpu.memory_space<vmem>>, vector<1x32xf32>,
      %c6_i32 = arith.constant 6 : i32
      %266 = arith.addi %127, %c6_i32 : i32
      %267 = arith.index_cast %266 : i32 to index
      %c0_102 = arith.constant 0 : index
      %268 = vector.load %arg11[%267, %c0_102] : memref<32x32xf32, #tpu.memory_space<vmem>>, vector<1x32xf32>
      %269 = arith.index_cast %266 : i32 to index
      %c0_103 = arith.constant 0 : index
      %270 = vector.load %arg12[%269, %c0_103] : memref<32x32xf32, #tpu.memory_space<vmem>>, vector<1x32xf32>
      %271 = arith.mulf %268, %270 : vector<1x32xf32>
      %272 = vector.broadcast %268 : vector<1x32xf32> to vector<16x32xf32>
      %273 = arith.mulf %272, %128 : vector<16x32xf32>
      %274 = math.exp %273 : vector<16x32xf32>
      %275 = arith.mulf %274, %258 : vector<16x32xf32>
      %276 = vector.extract_strided_slice %132 {offsets = [0, 6], sizes = [16, 1], strides = [1, 1]} : vector<16x16xf32> to vector<16x1xf32>
      %277 = vector.broadcast %276 : vector<16x1xf32> to vector<16x32xf32>
      %278 = vector.broadcast %271 : vector<1x32xf32> to vector<16x32xf32>
      %279 = arith.mulf %277, %278 : vector<16x32xf32>
      %280 = arith.addf %275, %279 : vector<16x32xf32>
      %281 = vector.extract_strided_slice %133 {offsets = [0, 6], sizes = [16, 1], strides = [1, 1]} : vector<16x16xf32> to vector<16x1xf32>
      %282 = vector.broadcast %281 : vector<16x1xf32> to vector<16x32xf32>
      %283 = arith.mulf %282, %280 : vector<16x32xf32>
      %cst_104 = arith.constant dense<0.000000e+00> : vector<32xf32>
      %284 = vector.multi_reduction <add>, %283, %cst_104 [0] : vector<16x32xf32> to vector<32xf32>
      %285 = vector.shape_cast %284 : vector<32xf32> to vector<1x32xf32>
      %286 = arith.index_cast %266 : i32 to index
      %c0_105 = arith.constant 0 : index
      %287 = vector.load %arg15[%286, %c0_105] : memref<32x32xf32, #tpu.memory_space<vmem>>, vector<1x32xf32>
      tpu.vector_store %arg15[%286, %c0_105], %285 {strides = array<i32>} : memref<32x32xf32, #tpu.memory_space<vmem>>, vector<1x32xf32>,
      %c7_i32 = arith.constant 7 : i32
      %288 = arith.addi %127, %c7_i32 : i32
      %289 = arith.index_cast %288 : i32 to index
      %c0_106 = arith.constant 0 : index
      %290 = vector.load %arg11[%289, %c0_106] : memref<32x32xf32, #tpu.memory_space<vmem>>, vector<1x32xf32>
      %291 = arith.index_cast %288 : i32 to index
      %c0_107 = arith.constant 0 : index
      %292 = vector.load %arg12[%291, %c0_107] : memref<32x32xf32, #tpu.memory_space<vmem>>, vector<1x32xf32>
      %293 = arith.mulf %290, %292 : vector<1x32xf32>
      %294 = vector.broadcast %290 : vector<1x32xf32> to vector<16x32xf32>
      %295 = arith.mulf %294, %128 : vector<16x32xf32>
      %296 = math.exp %295 : vector<16x32xf32>
      %297 = arith.mulf %296, %280 : vector<16x32xf32>
      %298 = vector.extract_strided_slice %132 {offsets = [0, 7], sizes = [16, 1], strides = [1, 1]} : vector<16x16xf32> to vector<16x1xf32>
      %299 = vector.broadcast %298 : vector<16x1xf32> to vector<16x32xf32>
      %300 = vector.broadcast %293 : vector<1x32xf32> to vector<16x32xf32>
      %301 = arith.mulf %299, %300 : vector<16x32xf32>
      %302 = arith.addf %297, %301 : vector<16x32xf32>
      %303 = vector.extract_strided_slice %133 {offsets = [0, 7], sizes = [16, 1], strides = [1, 1]} : vector<16x16xf32> to vector<16x1xf32>
      %304 = vector.broadcast %303 : vector<16x1xf32> to vector<16x32xf32>
      %305 = arith.mulf %304, %302 : vector<16x32xf32>
      %cst_108 = arith.constant dense<0.000000e+00> : vector<32xf32>
      %306 = vector.multi_reduction <add>, %305, %cst_108 [0] : vector<16x32xf32> to vector<32xf32>
      %307 = vector.shape_cast %306 : vector<32xf32> to vector<1x32xf32>
      %308 = arith.index_cast %288 : i32 to index
      %c0_109 = arith.constant 0 : index
      %309 = vector.load %arg15[%308, %c0_109] : memref<32x32xf32, #tpu.memory_space<vmem>>, vector<1x32xf32>
      tpu.vector_store %arg15[%308, %c0_109], %307 {strides = array<i32>} : memref<32x32xf32, #tpu.memory_space<vmem>>, vector<1x32xf32>,
      %c8_i32 = arith.constant 8 : i32
      %310 = arith.addi %127, %c8_i32 : i32
      %311 = arith.index_cast %310 : i32 to index
      %c0_110 = arith.constant 0 : index
      %312 = vector.load %arg11[%311, %c0_110] : memref<32x32xf32, #tpu.memory_space<vmem>>, vector<1x32xf32>
      %313 = arith.index_cast %310 : i32 to index
      %c0_111 = arith.constant 0 : index
      %314 = vector.load %arg12[%313, %c0_111] : memref<32x32xf32, #tpu.memory_space<vmem>>, vector<1x32xf32>
      %315 = arith.mulf %312, %314 : vector<1x32xf32>
      %316 = vector.broadcast %312 : vector<1x32xf32> to vector<16x32xf32>
      %317 = arith.mulf %316, %128 : vector<16x32xf32>
      %318 = math.exp %317 : vector<16x32xf32>
      %319 = arith.mulf %318, %302 : vector<16x32xf32>
      %320 = vector.extract_strided_slice %132 {offsets = [0, 8], sizes = [16, 1], strides = [1, 1]} : vector<16x16xf32> to vector<16x1xf32>
      %321 = vector.broadcast %320 : vector<16x1xf32> to vector<16x32xf32>
      %322 = vector.broadcast %315 : vector<1x32xf32> to vector<16x32xf32>
      %323 = arith.mulf %321, %322 : vector<16x32xf32>
      %324 = arith.addf %319, %323 : vector<16x32xf32>
      %325 = vector.extract_strided_slice %133 {offsets = [0, 8], sizes = [16, 1], strides = [1, 1]} : vector<16x16xf32> to vector<16x1xf32>
      %326 = vector.broadcast %325 : vector<16x1xf32> to vector<16x32xf32>
      %327 = arith.mulf %326, %324 : vector<16x32xf32>
      %cst_112 = arith.constant dense<0.000000e+00> : vector<32xf32>
      %328 = vector.multi_reduction <add>, %327, %cst_112 [0] : vector<16x32xf32> to vector<32xf32>
      %329 = vector.shape_cast %328 : vector<32xf32> to vector<1x32xf32>
      %330 = arith.index_cast %310 : i32 to index
      %c0_113 = arith.constant 0 : index
      %331 = vector.load %arg15[%330, %c0_113] : memref<32x32xf32, #tpu.memory_space<vmem>>, vector<1x32xf32>
      tpu.vector_store %arg15[%330, %c0_113], %329 {strides = array<i32>} : memref<32x32xf32, #tpu.memory_space<vmem>>, vector<1x32xf32>,
      %c9_i32 = arith.constant 9 : i32
      %332 = arith.addi %127, %c9_i32 : i32
      %333 = arith.index_cast %332 : i32 to index
      %c0_114 = arith.constant 0 : index
      %334 = vector.load %arg11[%333, %c0_114] : memref<32x32xf32, #tpu.memory_space<vmem>>, vector<1x32xf32>
      %335 = arith.index_cast %332 : i32 to index
      %c0_115 = arith.constant 0 : index
      %336 = vector.load %arg12[%335, %c0_115] : memref<32x32xf32, #tpu.memory_space<vmem>>, vector<1x32xf32>
      %337 = arith.mulf %334, %336 : vector<1x32xf32>
      %338 = vector.broadcast %334 : vector<1x32xf32> to vector<16x32xf32>
      %339 = arith.mulf %338, %128 : vector<16x32xf32>
      %340 = math.exp %339 : vector<16x32xf32>
      %341 = arith.mulf %340, %324 : vector<16x32xf32>
      %342 = vector.extract_strided_slice %132 {offsets = [0, 9], sizes = [16, 1], strides = [1, 1]} : vector<16x16xf32> to vector<16x1xf32>
      %343 = vector.broadcast %342 : vector<16x1xf32> to vector<16x32xf32>
      %344 = vector.broadcast %337 : vector<1x32xf32> to vector<16x32xf32>
      %345 = arith.mulf %343, %344 : vector<16x32xf32>
      %346 = arith.addf %341, %345 : vector<16x32xf32>
      %347 = vector.extract_strided_slice %133 {offsets = [0, 9], sizes = [16, 1], strides = [1, 1]} : vector<16x16xf32> to vector<16x1xf32>
      %348 = vector.broadcast %347 : vector<16x1xf32> to vector<16x32xf32>
      %349 = arith.mulf %348, %346 : vector<16x32xf32>
      %cst_116 = arith.constant dense<0.000000e+00> : vector<32xf32>
      %350 = vector.multi_reduction <add>, %349, %cst_116 [0] : vector<16x32xf32> to vector<32xf32>
      %351 = vector.shape_cast %350 : vector<32xf32> to vector<1x32xf32>
      %352 = arith.index_cast %332 : i32 to index
      %c0_117 = arith.constant 0 : index
      %353 = vector.load %arg15[%352, %c0_117] : memref<32x32xf32, #tpu.memory_space<vmem>>, vector<1x32xf32>
      tpu.vector_store %arg15[%352, %c0_117], %351 {strides = array<i32>} : memref<32x32xf32, #tpu.memory_space<vmem>>, vector<1x32xf32>,
      %c10_i32 = arith.constant 10 : i32
      %354 = arith.addi %127, %c10_i32 : i32
      %355 = arith.index_cast %354 : i32 to index
      %c0_118 = arith.constant 0 : index
      %356 = vector.load %arg11[%355, %c0_118] : memref<32x32xf32, #tpu.memory_space<vmem>>, vector<1x32xf32>
      %357 = arith.index_cast %354 : i32 to index
      %c0_119 = arith.constant 0 : index
      %358 = vector.load %arg12[%357, %c0_119] : memref<32x32xf32, #tpu.memory_space<vmem>>, vector<1x32xf32>
      %359 = arith.mulf %356, %358 : vector<1x32xf32>
      %360 = vector.broadcast %356 : vector<1x32xf32> to vector<16x32xf32>
      %361 = arith.mulf %360, %128 : vector<16x32xf32>
      %362 = math.exp %361 : vector<16x32xf32>
      %363 = arith.mulf %362, %346 : vector<16x32xf32>
      %364 = vector.extract_strided_slice %132 {offsets = [0, 10], sizes = [16, 1], strides = [1, 1]} : vector<16x16xf32> to vector<16x1xf32>
      %365 = vector.broadcast %364 : vector<16x1xf32> to vector<16x32xf32>
      %366 = vector.broadcast %359 : vector<1x32xf32> to vector<16x32xf32>
      %367 = arith.mulf %365, %366 : vector<16x32xf32>
      %368 = arith.addf %363, %367 : vector<16x32xf32>
      %369 = vector.extract_strided_slice %133 {offsets = [0, 10], sizes = [16, 1], strides = [1, 1]} : vector<16x16xf32> to vector<16x1xf32>
      %370 = vector.broadcast %369 : vector<16x1xf32> to vector<16x32xf32>
      %371 = arith.mulf %370, %368 : vector<16x32xf32>
      %cst_120 = arith.constant dense<0.000000e+00> : vector<32xf32>
      %372 = vector.multi_reduction <add>, %371, %cst_120 [0] : vector<16x32xf32> to vector<32xf32>
      %373 = vector.shape_cast %372 : vector<32xf32> to vector<1x32xf32>
      %374 = arith.index_cast %354 : i32 to index
      %c0_121 = arith.constant 0 : index
      %375 = vector.load %arg15[%374, %c0_121] : memref<32x32xf32, #tpu.memory_space<vmem>>, vector<1x32xf32>
      tpu.vector_store %arg15[%374, %c0_121], %373 {strides = array<i32>} : memref<32x32xf32, #tpu.memory_space<vmem>>, vector<1x32xf32>,
      %c11_i32 = arith.constant 11 : i32
      %376 = arith.addi %127, %c11_i32 : i32
      %377 = arith.index_cast %376 : i32 to index
      %c0_122 = arith.constant 0 : index
      %378 = vector.load %arg11[%377, %c0_122] : memref<32x32xf32, #tpu.memory_space<vmem>>, vector<1x32xf32>
      %379 = arith.index_cast %376 : i32 to index
      %c0_123 = arith.constant 0 : index
      %380 = vector.load %arg12[%379, %c0_123] : memref<32x32xf32, #tpu.memory_space<vmem>>, vector<1x32xf32>
      %381 = arith.mulf %378, %380 : vector<1x32xf32>
      %382 = vector.broadcast %378 : vector<1x32xf32> to vector<16x32xf32>
      %383 = arith.mulf %382, %128 : vector<16x32xf32>
      %384 = math.exp %383 : vector<16x32xf32>
      %385 = arith.mulf %384, %368 : vector<16x32xf32>
      %386 = vector.extract_strided_slice %132 {offsets = [0, 11], sizes = [16, 1], strides = [1, 1]} : vector<16x16xf32> to vector<16x1xf32>
      %387 = vector.broadcast %386 : vector<16x1xf32> to vector<16x32xf32>
      %388 = vector.broadcast %381 : vector<1x32xf32> to vector<16x32xf32>
      %389 = arith.mulf %387, %388 : vector<16x32xf32>
      %390 = arith.addf %385, %389 : vector<16x32xf32>
      %391 = vector.extract_strided_slice %133 {offsets = [0, 11], sizes = [16, 1], strides = [1, 1]} : vector<16x16xf32> to vector<16x1xf32>
      %392 = vector.broadcast %391 : vector<16x1xf32> to vector<16x32xf32>
      %393 = arith.mulf %392, %390 : vector<16x32xf32>
      %cst_124 = arith.constant dense<0.000000e+00> : vector<32xf32>
      %394 = vector.multi_reduction <add>, %393, %cst_124 [0] : vector<16x32xf32> to vector<32xf32>
      %395 = vector.shape_cast %394 : vector<32xf32> to vector<1x32xf32>
      %396 = arith.index_cast %376 : i32 to index
      %c0_125 = arith.constant 0 : index
      %397 = vector.load %arg15[%396, %c0_125] : memref<32x32xf32, #tpu.memory_space<vmem>>, vector<1x32xf32>
      tpu.vector_store %arg15[%396, %c0_125], %395 {strides = array<i32>} : memref<32x32xf32, #tpu.memory_space<vmem>>, vector<1x32xf32>,
      %c12_i32 = arith.constant 12 : i32
      %398 = arith.addi %127, %c12_i32 : i32
      %399 = arith.index_cast %398 : i32 to index
      %c0_126 = arith.constant 0 : index
      %400 = vector.load %arg11[%399, %c0_126] : memref<32x32xf32, #tpu.memory_space<vmem>>, vector<1x32xf32>
      %401 = arith.index_cast %398 : i32 to index
      %c0_127 = arith.constant 0 : index
      %402 = vector.load %arg12[%401, %c0_127] : memref<32x32xf32, #tpu.memory_space<vmem>>, vector<1x32xf32>
      %403 = arith.mulf %400, %402 : vector<1x32xf32>
      %404 = vector.broadcast %400 : vector<1x32xf32> to vector<16x32xf32>
      %405 = arith.mulf %404, %128 : vector<16x32xf32>
      %406 = math.exp %405 : vector<16x32xf32>
      %407 = arith.mulf %406, %390 : vector<16x32xf32>
      %408 = vector.extract_strided_slice %132 {offsets = [0, 12], sizes = [16, 1], strides = [1, 1]} : vector<16x16xf32> to vector<16x1xf32>
      %409 = vector.broadcast %408 : vector<16x1xf32> to vector<16x32xf32>
      %410 = vector.broadcast %403 : vector<1x32xf32> to vector<16x32xf32>
      %411 = arith.mulf %409, %410 : vector<16x32xf32>
      %412 = arith.addf %407, %411 : vector<16x32xf32>
      %413 = vector.extract_strided_slice %133 {offsets = [0, 12], sizes = [16, 1], strides = [1, 1]} : vector<16x16xf32> to vector<16x1xf32>
      %414 = vector.broadcast %413 : vector<16x1xf32> to vector<16x32xf32>
      %415 = arith.mulf %414, %412 : vector<16x32xf32>
      %cst_128 = arith.constant dense<0.000000e+00> : vector<32xf32>
      %416 = vector.multi_reduction <add>, %415, %cst_128 [0] : vector<16x32xf32> to vector<32xf32>
      %417 = vector.shape_cast %416 : vector<32xf32> to vector<1x32xf32>
      %418 = arith.index_cast %398 : i32 to index
      %c0_129 = arith.constant 0 : index
      %419 = vector.load %arg15[%418, %c0_129] : memref<32x32xf32, #tpu.memory_space<vmem>>, vector<1x32xf32>
      tpu.vector_store %arg15[%418, %c0_129], %417 {strides = array<i32>} : memref<32x32xf32, #tpu.memory_space<vmem>>, vector<1x32xf32>,
      %c13_i32 = arith.constant 13 : i32
      %420 = arith.addi %127, %c13_i32 : i32
      %421 = arith.index_cast %420 : i32 to index
      %c0_130 = arith.constant 0 : index
      %422 = vector.load %arg11[%421, %c0_130] : memref<32x32xf32, #tpu.memory_space<vmem>>, vector<1x32xf32>
      %423 = arith.index_cast %420 : i32 to index
      %c0_131 = arith.constant 0 : index
      %424 = vector.load %arg12[%423, %c0_131] : memref<32x32xf32, #tpu.memory_space<vmem>>, vector<1x32xf32>
      %425 = arith.mulf %422, %424 : vector<1x32xf32>
      %426 = vector.broadcast %422 : vector<1x32xf32> to vector<16x32xf32>
      %427 = arith.mulf %426, %128 : vector<16x32xf32>
      %428 = math.exp %427 : vector<16x32xf32>
      %429 = arith.mulf %428, %412 : vector<16x32xf32>
      %430 = vector.extract_strided_slice %132 {offsets = [0, 13], sizes = [16, 1], strides = [1, 1]} : vector<16x16xf32> to vector<16x1xf32>
      %431 = vector.broadcast %430 : vector<16x1xf32> to vector<16x32xf32>
      %432 = vector.broadcast %425 : vector<1x32xf32> to vector<16x32xf32>
      %433 = arith.mulf %431, %432 : vector<16x32xf32>
      %434 = arith.addf %429, %433 : vector<16x32xf32>
      %435 = vector.extract_strided_slice %133 {offsets = [0, 13], sizes = [16, 1], strides = [1, 1]} : vector<16x16xf32> to vector<16x1xf32>
      %436 = vector.broadcast %435 : vector<16x1xf32> to vector<16x32xf32>
      %437 = arith.mulf %436, %434 : vector<16x32xf32>
      %cst_132 = arith.constant dense<0.000000e+00> : vector<32xf32>
      %438 = vector.multi_reduction <add>, %437, %cst_132 [0] : vector<16x32xf32> to vector<32xf32>
      %439 = vector.shape_cast %438 : vector<32xf32> to vector<1x32xf32>
      %440 = arith.index_cast %420 : i32 to index
      %c0_133 = arith.constant 0 : index
      %441 = vector.load %arg15[%440, %c0_133] : memref<32x32xf32, #tpu.memory_space<vmem>>, vector<1x32xf32>
      tpu.vector_store %arg15[%440, %c0_133], %439 {strides = array<i32>} : memref<32x32xf32, #tpu.memory_space<vmem>>, vector<1x32xf32>,
      %c14_i32 = arith.constant 14 : i32
      %442 = arith.addi %127, %c14_i32 : i32
      %443 = arith.index_cast %442 : i32 to index
      %c0_134 = arith.constant 0 : index
      %444 = vector.load %arg11[%443, %c0_134] : memref<32x32xf32, #tpu.memory_space<vmem>>, vector<1x32xf32>
      %445 = arith.index_cast %442 : i32 to index
      %c0_135 = arith.constant 0 : index
      %446 = vector.load %arg12[%445, %c0_135] : memref<32x32xf32, #tpu.memory_space<vmem>>, vector<1x32xf32>
      %447 = arith.mulf %444, %446 : vector<1x32xf32>
      %448 = vector.broadcast %444 : vector<1x32xf32> to vector<16x32xf32>
      %449 = arith.mulf %448, %128 : vector<16x32xf32>
      %450 = math.exp %449 : vector<16x32xf32>
      %451 = arith.mulf %450, %434 : vector<16x32xf32>
      %452 = vector.extract_strided_slice %132 {offsets = [0, 14], sizes = [16, 1], strides = [1, 1]} : vector<16x16xf32> to vector<16x1xf32>
      %453 = vector.broadcast %452 : vector<16x1xf32> to vector<16x32xf32>
      %454 = vector.broadcast %447 : vector<1x32xf32> to vector<16x32xf32>
      %455 = arith.mulf %453, %454 : vector<16x32xf32>
      %456 = arith.addf %451, %455 : vector<16x32xf32>
      %457 = vector.extract_strided_slice %133 {offsets = [0, 14], sizes = [16, 1], strides = [1, 1]} : vector<16x16xf32> to vector<16x1xf32>
      %458 = vector.broadcast %457 : vector<16x1xf32> to vector<16x32xf32>
      %459 = arith.mulf %458, %456 : vector<16x32xf32>
      %cst_136 = arith.constant dense<0.000000e+00> : vector<32xf32>
      %460 = vector.multi_reduction <add>, %459, %cst_136 [0] : vector<16x32xf32> to vector<32xf32>
      %461 = vector.shape_cast %460 : vector<32xf32> to vector<1x32xf32>
      %462 = arith.index_cast %442 : i32 to index
      %c0_137 = arith.constant 0 : index
      %463 = vector.load %arg15[%462, %c0_137] : memref<32x32xf32, #tpu.memory_space<vmem>>, vector<1x32xf32>
      tpu.vector_store %arg15[%462, %c0_137], %461 {strides = array<i32>} : memref<32x32xf32, #tpu.memory_space<vmem>>, vector<1x32xf32>,
      %c15_i32 = arith.constant 15 : i32
      %464 = arith.addi %127, %c15_i32 : i32
      %465 = arith.index_cast %464 : i32 to index
      %c0_138 = arith.constant 0 : index
      %466 = vector.load %arg11[%465, %c0_138] : memref<32x32xf32, #tpu.memory_space<vmem>>, vector<1x32xf32>
      %467 = arith.index_cast %464 : i32 to index
      %c0_139 = arith.constant 0 : index
      %468 = vector.load %arg12[%467, %c0_139] : memref<32x32xf32, #tpu.memory_space<vmem>>, vector<1x32xf32>
      %469 = arith.mulf %466, %468 : vector<1x32xf32>
      %470 = vector.broadcast %466 : vector<1x32xf32> to vector<16x32xf32>
      %471 = arith.mulf %470, %128 : vector<16x32xf32>
      %472 = math.exp %471 : vector<16x32xf32>
      %473 = arith.mulf %472, %456 : vector<16x32xf32>
      %474 = vector.extract_strided_slice %132 {offsets = [0, 15], sizes = [16, 1], strides = [1, 1]} : vector<16x16xf32> to vector<16x1xf32>
      %475 = vector.broadcast %474 : vector<16x1xf32> to vector<16x32xf32>
      %476 = vector.broadcast %469 : vector<1x32xf32> to vector<16x32xf32>
      %477 = arith.mulf %475, %476 : vector<16x32xf32>
      %478 = arith.addf %473, %477 : vector<16x32xf32>
      %479 = vector.extract_strided_slice %133 {offsets = [0, 15], sizes = [16, 1], strides = [1, 1]} : vector<16x16xf32> to vector<16x1xf32>
      %480 = vector.broadcast %479 : vector<16x1xf32> to vector<16x32xf32>
      %481 = arith.mulf %480, %478 : vector<16x32xf32>
      %cst_140 = arith.constant dense<0.000000e+00> : vector<32xf32>
      %482 = vector.multi_reduction <add>, %481, %cst_140 [0] : vector<16x32xf32> to vector<32xf32>
      %483 = vector.shape_cast %482 : vector<32xf32> to vector<1x32xf32>
      %484 = arith.index_cast %464 : i32 to index
      %c0_141 = arith.constant 0 : index
      %485 = vector.load %arg15[%484, %c0_141] : memref<32x32xf32, #tpu.memory_space<vmem>>, vector<1x32xf32>
      tpu.vector_store %arg15[%484, %c0_141], %483 {strides = array<i32>} : memref<32x32xf32, #tpu.memory_space<vmem>>, vector<1x32xf32>,
      scf.yield %478 : vector<16x32xf32>
    }
    %c2_i32_50 = arith.constant 2 : i32
    %c0_51 = arith.constant 0 : index
    %c0_52 = arith.constant 0 : index
    %100 = vector.load %arg16[%c0_51, %c0_52] : memref<16x32xf32, #tpu.memory_space<vmem>>, vector<16x32xf32>
    tpu.vector_store %arg16[%c0_51, %c0_52], %99 {strides = array<i32>} : memref<16x32xf32, #tpu.memory_space<vmem>>, vector<16x32xf32>,
    %c0_53 = arith.constant 0 : index
    %c0_54 = arith.constant 0 : index
    %101 = vector.load %arg15[%c0_53, %c0_54] : memref<32x32xf32, #tpu.memory_space<vmem>>, vector<32x32xf32>
    %c22 = arith.constant 22 : index
    %c0_55 = arith.constant 0 : index
    %102 = vector.load %arg5[%c22, %c0_55] : memref<23x32xf32, #tpu.memory_space<vmem>>, vector<1x32xf32>
    %c0_56 = arith.constant 0 : index
    %c0_57 = arith.constant 0 : index
    %103 = vector.load %arg12[%c0_56, %c0_57] : memref<32x32xf32, #tpu.memory_space<vmem>>, vector<32x32xf32>
    %104 = vector.broadcast %102 : vector<1x32xf32> to vector<32x32xf32>
    %105 = arith.mulf %104, %103 : vector<32x32xf32>
    %106 = arith.addf %101, %105 : vector<32x32xf32>
    %c0_58 = arith.constant 0 : index
    %c0_59 = arith.constant 0 : index
    %107 = vector.load %arg13[%c0_58, %c0_59] : memref<32x32xf32, #tpu.memory_space<vmem>>, vector<32x32xf32>
    %cst_60 = arith.constant 0.000000e+00 : f32
    %108 = vector.broadcast %cst_60 : f32 to vector<32x32xf32>
    %109 = arith.subf %108, %107 : vector<32x32xf32>
    %110 = math.exp %109 : vector<32x32xf32>
    %cst_61 = arith.constant 1.000000e+00 : f32
    %111 = vector.broadcast %cst_61 : f32 to vector<32x32xf32>
    %112 = arith.addf %111, %110 : vector<32x32xf32>
    %cst_62 = arith.constant 1.000000e+00 : f32
    %113 = vector.broadcast %cst_62 : f32 to vector<32x32xf32>
    %114 = arith.divf %113, %112 : vector<32x32xf32>
    %115 = arith.mulf %107, %114 : vector<32x32xf32>
    %116 = arith.mulf %106, %115 : vector<32x32xf32>
    %117 = arith.truncf %116 : vector<32x32xf32> to vector<32x32xbf16>
    %c0_63 = arith.constant 0 : index
    %c0_64 = arith.constant 0 : index
    %118 = vector.load %arg8[%c0_63, %c0_64] : memref<32x16xbf16, #tpu.memory_space<vmem>>, vector<32x16xbf16>
    %cst_65 = arith.constant dense<0.000000e+00> : vector<32x16xf32>
    %119 = tpu.matmul %117, %118, %cst_65 {dimension_numbers = #tpu.dot_dimension_numbers<[1], [0], [0], [1], [0, 0, 1, 1], [], []>} : vector<32x32xbf16>, vector<32x16xbf16>, vector<32x16xf32> -> vector<32x16xf32>
    %c0_66 = arith.constant 0 : index
    %c0_67 = arith.constant 0 : index
    %c0_68 = arith.constant 0 : index
    %120 = vector.load %arg2[%c0_66, %c0_67, %c0_68] : memref<1x32x16xf32, #tpu.memory_space<vmem>>, vector<1x32x16xf32>
    %121 = vector.shape_cast %120 : vector<1x32x16xf32> to vector<32x16xf32>
    %122 = arith.addf %119, %121 : vector<32x16xf32>
    %c0_69 = arith.constant 0 : index
    %c0_70 = arith.constant 0 : index
    %c0_71 = arith.constant 0 : index
    %123 = vector.load %arg9[%c0_69, %c0_70, %c0_71] : memref<1x32x16xf32, #tpu.memory_space<vmem>>, vector<1x32x16xf32>
    %124 = vector.shape_cast %123 : vector<1x32x16xf32> to vector<32x16xf32>
    %125 = vector.shape_cast %122 : vector<32x16xf32> to vector<1x32x16xf32>
    tpu.vector_store %arg9[%c0_69, %c0_70, %c0_71], %125 {strides = array<i32>} : memref<1x32x16xf32, #tpu.memory_space<vmem>>, vector<1x32x16xf32>,
    return
  }
  func.func @transform_0(%arg0: i32, %arg1: i32) -> (i32, i32, i32) {
    %c0_i32 = arith.constant 0 : i32
    %c0_i32_0 = arith.constant 0 : i32
    return %arg0, %arg1, %c0_i32 : i32, i32, i32
  }
  func.func @transform_1(%arg0: i32, %arg1: i32) -> (i32, i32) {
    %c0_i32 = arith.constant 0 : i32
    %c0_i32_0 = arith.constant 0 : i32
    %c0_i32_1 = arith.constant 0 : i32
    return %c0_i32, %c0_i32_0 : i32, i32
  }
  func.func @transform_2(%arg0: i32, %arg1: i32) -> (i32, i32) {
    %c0_i32 = arith.constant 0 : i32
    %c0_i32_0 = arith.constant 0 : i32
    %c0_i32_1 = arith.constant 0 : i32
    return %c0_i32, %c0_i32_0 : i32, i32
  }
  func.func @transform_3(%arg0: i32, %arg1: i32) -> (i32, i32) {
    %c0_i32 = arith.constant 0 : i32
    %c0_i32_0 = arith.constant 0 : i32
    %c0_i32_1 = arith.constant 0 : i32
    return %c0_i32, %c0_i32_0 : i32, i32
  }
  func.func @transform_4(%arg0: i32, %arg1: i32) -> (i32, i32) {
    %c0_i32 = arith.constant 0 : i32
    %c0_i32_0 = arith.constant 0 : i32
    %c0_i32_1 = arith.constant 0 : i32
    return %c0_i32, %c0_i32_0 : i32, i32
  }
  func.func @transform_5(%arg0: i32, %arg1: i32) -> (i32, i32) {
    %c0_i32 = arith.constant 0 : i32
    %c0_i32_0 = arith.constant 0 : i32
    %c0_i32_1 = arith.constant 0 : i32
    return %c0_i32, %c0_i32_0 : i32, i32
  }
  func.func @transform_6(%arg0: i32, %arg1: i32) -> (i32, i32) {
    %c0_i32 = arith.constant 0 : i32
    %c0_i32_0 = arith.constant 0 : i32
    %c0_i32_1 = arith.constant 0 : i32
    return %c0_i32, %c0_i32_0 : i32, i32
  }
  func.func @transform_7(%arg0: i32, %arg1: i32) -> (i32, i32, i32) {
    %c0_i32 = arith.constant 0 : i32
    %c0_i32_0 = arith.constant 0 : i32
    return %arg0, %arg1, %c0_i32 : i32, i32, i32
  }
}

module attributes {stable_mosaic.version = 11 : i64} {
  func.func @kernel(%arg0: i32, %arg1: i32, %arg2: memref<1x32x16xf32, #tpu.memory_space<vmem>>, %arg3: memref<2x16xf32, #tpu.memory_space<vmem>>, %arg4: memref<16x64xbf16, #tpu.memory_space<vmem>>, %arg5: memref<23x32xf32, #tpu.memory_space<vmem>>, %arg6: memref<32x40xbf16, #tpu.memory_space<vmem>>, %arg7: memref<8x32xbf16, #tpu.memory_space<vmem>>, %arg8: memref<32x16xbf16, #tpu.memory_space<vmem>>, %arg9: memref<1x32x16xf32, #tpu.memory_space<vmem>>, %arg10: memref<40x32xf32, #tpu.memory_space<vmem>>, %arg11: memref<32x32xf32, #tpu.memory_space<vmem>>, %arg12: memref<32x32xf32, #tpu.memory_space<vmem>>, %arg13: memref<32x32xf32, #tpu.memory_space<vmem>>, %arg14: memref<32x32xf32, #tpu.memory_space<vmem>>, %arg15: memref<32x32xf32, #tpu.memory_space<vmem>>, %arg16: memref<16x32xf32, #tpu.memory_space<vmem>>) attributes {dimension_semantics = [#tpu.dimension_semantics<parallel>, #tpu.dimension_semantics<arbitrary>], iteration_bounds = array<i64: 2, 2>, scalar_prefetch = 0 : i64, scratch_operands = 7 : i64, tpu.core_type = #tpu.core_type<tc>, window_params = [{transform_indices = @transform_0, window_bounds = array<i64: 1, 32, 16>}, {pipeline_mode = #tpu.pipeline_mode<synchronous>, transform_indices = @transform_1, window_bounds = array<i64: 2, 16>}, {pipeline_mode = #tpu.pipeline_mode<synchronous>, transform_indices = @transform_2, window_bounds = array<i64: 16, 64>}, {pipeline_mode = #tpu.pipeline_mode<synchronous>, transform_indices = @transform_3, window_bounds = array<i64: 23, 32>}, {pipeline_mode = #tpu.pipeline_mode<synchronous>, transform_indices = @transform_4, window_bounds = array<i64: 32, 40>}, {pipeline_mode = #tpu.pipeline_mode<synchronous>, transform_indices = @transform_5, window_bounds = array<i64: 8, 32>}, {pipeline_mode = #tpu.pipeline_mode<synchronous>, transform_indices = @transform_6, window_bounds = array<i64: 32, 16>}, {transform_indices = @transform_7, window_bounds = array<i64: 1, 32, 16>}]} {
    %c0 = arith.constant 0 : index
    %c0_0 = arith.constant 0 : index
    %c0_1 = arith.constant 0 : index
    %0 = vector.load %arg2[%c0, %c0_0, %c0_1] : memref<1x32x16xf32, #tpu.memory_space<vmem>>, vector<1x32x16xf32>
    %1 = vector.shape_cast %0 : vector<1x32x16xf32> to vector<32x16xf32>
    %c0_2 = arith.constant 0 : index
    %c0_3 = arith.constant 0 : index
    %2 = vector.load %arg3[%c0_2, %c0_3] : memref<2x16xf32, #tpu.memory_space<vmem>>, vector<1x16xf32>
    %c1 = arith.constant 1 : index
    %c0_4 = arith.constant 0 : index
    %3 = vector.load %arg3[%c1, %c0_4] : memref<2x16xf32, #tpu.memory_space<vmem>>, vector<1x16xf32>
    %cst = arith.constant dense<0.000000e+00> : vector<32xf32>
    %4 = vector.multi_reduction <add>, %1, %cst [1] : vector<32x16xf32> to vector<32xf32>
    %5 = vector.shape_cast %4 : vector<32xf32> to vector<32x1xf32>
    %cst_5 = arith.constant 1.600000e+01 : f32
    %6 = vector.broadcast %cst_5 : f32 to vector<32x1xf32>
    %7 = arith.divf %5, %6 : vector<32x1xf32>
    %8 = vector.broadcast %7 : vector<32x1xf32> to vector<32x16xf32>
    %9 = arith.subf %1, %8 : vector<32x16xf32>
    %10 = arith.mulf %9, %9 : vector<32x16xf32>
    %cst_6 = arith.constant dense<0.000000e+00> : vector<32xf32>
    %11 = vector.multi_reduction <add>, %10, %cst_6 [1] : vector<32x16xf32> to vector<32xf32>
    %12 = vector.shape_cast %11 : vector<32xf32> to vector<32x1xf32>
    %cst_7 = arith.constant 1.600000e+01 : f32
    %13 = vector.broadcast %cst_7 : f32 to vector<32x1xf32>
    %14 = arith.divf %12, %13 : vector<32x1xf32>
    %cst_8 = arith.constant 9.99999974E-6 : f32
    %15 = vector.broadcast %cst_8 : f32 to vector<32x1xf32>
    %16 = arith.addf %14, %15 : vector<32x1xf32>
    %17 = math.rsqrt %16 : vector<32x1xf32>
    %18 = vector.broadcast %17 : vector<32x1xf32> to vector<32x16xf32>
    %19 = arith.mulf %9, %18 : vector<32x16xf32>
    %20 = vector.broadcast %2 : vector<1x16xf32> to vector<32x16xf32>
    %21 = arith.mulf %19, %20 : vector<32x16xf32>
    %22 = vector.broadcast %3 : vector<1x16xf32> to vector<32x16xf32>
    %23 = arith.addf %21, %22 : vector<32x16xf32>
    %24 = arith.truncf %23 : vector<32x16xf32> to vector<32x16xbf16>
    %c0_9 = arith.constant 0 : index
    %c0_10 = arith.constant 0 : index
    %25 = vector.load %arg4[%c0_9, %c0_10] : memref<16x64xbf16, #tpu.memory_space<vmem>>, vector<16x64xbf16>
    %cst_11 = arith.constant dense<0.000000e+00> : vector<32x64xf32>
    %26 = tpu.matmul %24, %25, %cst_11 {dimension_numbers = #tpu.dot_dimension_numbers<[1], [0], [0], [1], [0, 0, 1, 1], [], []>} : vector<32x16xbf16>, vector<16x64xbf16>, vector<32x64xf32> -> vector<32x64xf32>
    %27 = vector.extract_strided_slice %26 {offsets = [0, 0], sizes = [32, 32], strides = [1, 1]} : vector<32x64xf32> to vector<32x32xf32>
    %28 = vector.extract_strided_slice %26 {offsets = [0, 32], sizes = [32, 32], strides = [1, 1]} : vector<32x64xf32> to vector<32x32xf32>
    %c0_12 = arith.constant 0 : index
    %c0_13 = arith.constant 0 : index
    %29 = vector.load %arg13[%c0_12, %c0_13] : memref<32x32xf32, #tpu.memory_space<vmem>>, vector<32x32xf32>
    tpu.vector_store %arg13[%c0_12, %c0_13], %28 {strides = array<i32>} : memref<32x32xf32, #tpu.memory_space<vmem>>, vector<32x32xf32>,
    %c0_i32 = arith.constant 0 : i32
    %30 = arith.cmpi eq, %arg1, %c0_i32 : i32
    %31 = arith.extui %30 : i1 to i32
    %c0_i32_14 = arith.constant 0 : i32
    %32 = arith.cmpi ne, %31, %c0_i32_14 : i32
    scf.if %32 {
      %cst_72 = arith.constant 0.000000e+00 : f32
      %126 = vector.broadcast %cst_72 : f32 to vector<3x32xf32>
      %c5_73 = arith.constant 5 : index
      %c0_74 = arith.constant 0 : index
      %127 = vector.load %arg10[%c5_73, %c0_74] : memref<40x32xf32, #tpu.memory_space<vmem>>, vector<3x32xf32>
      tpu.vector_store %arg10[%c5_73, %c0_74], %126 {strides = array<i32>} : memref<40x32xf32, #tpu.memory_space<vmem>>, vector<3x32xf32>,
    } else {
    }
    %c0_i32_15 = arith.constant 0 : i32
    %33 = arith.cmpi sgt, %arg1, %c0_i32_15 : i32
    %34 = arith.extui %33 : i1 to i32
    %c0_i32_16 = arith.constant 0 : i32
    %35 = arith.cmpi ne, %34, %c0_i32_16 : i32
    scf.if %35 {
      %c37 = arith.constant 37 : index
      %c0_72 = arith.constant 0 : index
      %126 = vector.load %arg10[%c37, %c0_72] : memref<40x32xf32, #tpu.memory_space<vmem>>, vector<3x32xf32>
      %c5_73 = arith.constant 5 : index
      %c0_74 = arith.constant 0 : index
      %127 = vector.load %arg10[%c5_73, %c0_74] : memref<40x32xf32, #tpu.memory_space<vmem>>, vector<3x32xf32>
      tpu.vector_store %arg10[%c5_73, %c0_74], %126 {strides = array<i32>} : memref<40x32xf32, #tpu.memory_space<vmem>>, vector<3x32xf32>,
    } else {
    }
    %c8 = arith.constant 8 : index
    %c0_17 = arith.constant 0 : index
    %36 = vector.load %arg10[%c8, %c0_17] : memref<40x32xf32, #tpu.memory_space<vmem>>, vector<32x32xf32>
    tpu.vector_store %arg10[%c8, %c0_17], %27 {strides = array<i32>} : memref<40x32xf32, #tpu.memory_space<vmem>>, vector<32x32xf32>,
    %c16 = arith.constant 16 : index
    %c0_18 = arith.constant 0 : index
    %37 = vector.load %arg5[%c16, %c0_18] : memref<23x32xf32, #tpu.memory_space<vmem>>, vector<4x32xf32>
    %cst_19 = arith.constant 0.000000e+00 : f32
    %38 = vector.broadcast %cst_19 : f32 to vector<32x32xf32>
    %c5 = arith.constant 5 : index
    %c0_20 = arith.constant 0 : index
    %39 = vector.load %arg10[%c5, %c0_20] : memref<40x32xf32, #tpu.memory_space<vmem>>, vector<32x32xf32>
    %40 = vector.extract_strided_slice %37 {offsets = [0, 0], sizes = [1, 32], strides = [1, 1]} : vector<4x32xf32> to vector<1x32xf32>
    %41 = vector.broadcast %40 : vector<1x32xf32> to vector<32x32xf32>
    %42 = arith.mulf %39, %41 : vector<32x32xf32>
    %43 = arith.addf %38, %42 : vector<32x32xf32>
    %c6 = arith.constant 6 : index
    %c0_21 = arith.constant 0 : index
    %44 = vector.load %arg10[%c6, %c0_21] : memref<40x32xf32, #tpu.memory_space<vmem>>, vector<32x32xf32>
    %45 = vector.extract_strided_slice %37 {offsets = [1, 0], sizes = [1, 32], strides = [1, 1]} : vector<4x32xf32> to vector<1x32xf32>
    %46 = vector.broadcast %45 : vector<1x32xf32> to vector<32x32xf32>
    %47 = arith.mulf %44, %46 : vector<32x32xf32>
    %48 = arith.addf %43, %47 : vector<32x32xf32>
    %c7 = arith.constant 7 : index
    %c0_22 = arith.constant 0 : index
    %49 = vector.load %arg10[%c7, %c0_22] : memref<40x32xf32, #tpu.memory_space<vmem>>, vector<32x32xf32>
    %50 = vector.extract_strided_slice %37 {offsets = [2, 0], sizes = [1, 32], strides = [1, 1]} : vector<4x32xf32> to vector<1x32xf32>
    %51 = vector.broadcast %50 : vector<1x32xf32> to vector<32x32xf32>
    %52 = arith.mulf %49, %51 : vector<32x32xf32>
    %53 = arith.addf %48, %52 : vector<32x32xf32>
    %c8_23 = arith.constant 8 : index
    %c0_24 = arith.constant 0 : index
    %54 = vector.load %arg10[%c8_23, %c0_24] : memref<40x32xf32, #tpu.memory_space<vmem>>, vector<32x32xf32>
    %55 = vector.extract_strided_slice %37 {offsets = [3, 0], sizes = [1, 32], strides = [1, 1]} : vector<4x32xf32> to vector<1x32xf32>
    %56 = vector.broadcast %55 : vector<1x32xf32> to vector<32x32xf32>
    %57 = arith.mulf %54, %56 : vector<32x32xf32>
    %58 = arith.addf %53, %57 : vector<32x32xf32>
    %c20 = arith.constant 20 : index
    %c0_25 = arith.constant 0 : index
    %59 = vector.load %arg5[%c20, %c0_25] : memref<23x32xf32, #tpu.memory_space<vmem>>, vector<1x32xf32>
    %60 = vector.broadcast %59 : vector<1x32xf32> to vector<32x32xf32>
    %61 = arith.addf %58, %60 : vector<32x32xf32>
    %cst_26 = arith.constant 0.000000e+00 : f32
    %62 = vector.broadcast %cst_26 : f32 to vector<32x32xf32>
    %63 = arith.subf %62, %61 : vector<32x32xf32>
    %64 = math.exp %63 : vector<32x32xf32>
    %cst_27 = arith.constant 1.000000e+00 : f32
    %65 = vector.broadcast %cst_27 : f32 to vector<32x32xf32>
    %66 = arith.addf %65, %64 : vector<32x32xf32>
    %cst_28 = arith.constant 1.000000e+00 : f32
    %67 = vector.broadcast %cst_28 : f32 to vector<32x32xf32>
    %68 = arith.divf %67, %66 : vector<32x32xf32>
    %69 = arith.mulf %61, %68 : vector<32x32xf32>
    %c0_29 = arith.constant 0 : index
    %c0_30 = arith.constant 0 : index
    %70 = vector.load %arg12[%c0_29, %c0_30] : memref<32x32xf32, #tpu.memory_space<vmem>>, vector<32x32xf32>
    tpu.vector_store %arg12[%c0_29, %c0_30], %69 {strides = array<i32>} : memref<32x32xf32, #tpu.memory_space<vmem>>, vector<32x32xf32>,
    %71 = arith.truncf %69 : vector<32x32xf32> to vector<32x32xbf16>
    %c0_31 = arith.constant 0 : index
    %c0_32 = arith.constant 0 : index
    %72 = vector.load %arg6[%c0_31, %c0_32] : memref<32x40xbf16, #tpu.memory_space<vmem>>, vector<32x40xbf16>
    %cst_33 = arith.constant dense<0.000000e+00> : vector<32x40xf32>
    %73 = tpu.matmul %71, %72, %cst_33 {dimension_numbers = #tpu.dot_dimension_numbers<[1], [0], [0], [1], [0, 0, 1, 1], [], []>} : vector<32x32xbf16>, vector<32x40xbf16>, vector<32x40xf32> -> vector<32x40xf32>
    %74 = vector.extract_strided_slice %73 {offsets = [0, 0], sizes = [32, 8], strides = [1, 1]} : vector<32x40xf32> to vector<32x8xf32>
    %75 = arith.truncf %74 : vector<32x8xf32> to vector<32x8xbf16>
    %c0_34 = arith.constant 0 : index
    %c0_35 = arith.constant 0 : index
    %76 = vector.load %arg7[%c0_34, %c0_35] : memref<8x32xbf16, #tpu.memory_space<vmem>>, vector<8x32xbf16>
    %cst_36 = arith.constant dense<0.000000e+00> : vector<32x32xf32>
    %77 = tpu.matmul %75, %76, %cst_36 {dimension_numbers = #tpu.dot_dimension_numbers<[1], [0], [0], [1], [0, 0, 1, 1], [], []>} : vector<32x8xbf16>, vector<8x32xbf16>, vector<32x32xf32> -> vector<32x32xf32>
    %c21 = arith.constant 21 : index
    %c0_37 = arith.constant 0 : index
    %78 = vector.load %arg5[%c21, %c0_37] : memref<23x32xf32, #tpu.memory_space<vmem>>, vector<1x32xf32>
    %79 = vector.broadcast %78 : vector<1x32xf32> to vector<32x32xf32>
    %80 = arith.addf %77, %79 : vector<32x32xf32>
    %cst_38 = arith.constant 0.000000e+00 : f32
    %81 = vector.broadcast %cst_38 : f32 to vector<32x32xf32>
    %82 = arith.maximumf %80, %81 : vector<32x32xf32>
    %83 = math.absf %80 : vector<32x32xf32>
    %cst_39 = arith.constant 0.000000e+00 : f32
    %84 = vector.broadcast %cst_39 : f32 to vector<32x32xf32>
    %85 = arith.subf %84, %83 : vector<32x32xf32>
    %86 = math.exp %85 : vector<32x32xf32>
    %cst_40 = arith.constant 1.000000e+00 : f32
    %87 = vector.broadcast %cst_40 : f32 to vector<32x32xf32>
    %88 = arith.addf %87, %86 : vector<32x32xf32>
    %89 = math.log %88 : vector<32x32xf32>
    %90 = arith.addf %82, %89 : vector<32x32xf32>
    %c0_41 = arith.constant 0 : index
    %c0_42 = arith.constant 0 : index
    %91 = vector.load %arg11[%c0_41, %c0_42] : memref<32x32xf32, #tpu.memory_space<vmem>>, vector<32x32xf32>
    tpu.vector_store %arg11[%c0_41, %c0_42], %90 {strides = array<i32>} : memref<32x32xf32, #tpu.memory_space<vmem>>, vector<32x32xf32>,
    %92 = vector.extract_strided_slice %73 {offsets = [0, 8], sizes = [32, 32], strides = [1, 1]} : vector<32x40xf32> to vector<32x32xf32>
    %c0_43 = arith.constant 0 : index
    %c0_44 = arith.constant 0 : index
    %93 = vector.load %arg14[%c0_43, %c0_44] : memref<32x32xf32, #tpu.memory_space<vmem>>, vector<32x32xf32>
    tpu.vector_store %arg14[%c0_43, %c0_44], %92 {strides = array<i32>} : memref<32x32xf32, #tpu.memory_space<vmem>>, vector<32x32xf32>,
    %c0_i32_45 = arith.constant 0 : i32
    %94 = arith.cmpi eq, %arg1, %c0_i32_45 : i32
    %95 = arith.extui %94 : i1 to i32
    %c0_i32_46 = arith.constant 0 : i32
    %96 = arith.cmpi ne, %95, %c0_i32_46 : i32
    scf.if %96 {
      %cst_72 = arith.constant 0.000000e+00 : f32
      %126 = vector.broadcast %cst_72 : f32 to vector<16x32xf32>
      %c0_73 = arith.constant 0 : index
      %c0_74 = arith.constant 0 : index
      %127 = vector.load %arg16[%c0_73, %c0_74] : memref<16x32xf32, #tpu.memory_space<vmem>>, vector<16x32xf32>
      tpu.vector_store %arg16[%c0_73, %c0_74], %126 {strides = array<i32>} : memref<16x32xf32, #tpu.memory_space<vmem>>, vector<16x32xf32>,
    } else {
    }
    %c0_47 = arith.constant 0 : index
    %c0_48 = arith.constant 0 : index
    %97 = vector.load %arg16[%c0_47, %c0_48] : memref<16x32xf32, #tpu.memory_space<vmem>>, vector<16x32xf32>
    %c0_i32_49 = arith.constant 0 : i32
    %c2_i32 = arith.constant 2 : i32
    %98 = arith.addi %c0_i32_49, %c2_i32 : i32
    %c1_i32 = arith.constant 1 : i32
    %99 = scf.for %arg17 = %c0_i32_49 to %98 step %c1_i32 iter_args(%arg18 = %97) -> (vector<16x32xf32>)  : i32 {
      %c16_i32 = arith.constant 16 : i32
      %126 = arith.muli %arg17, %c16_i32 : i32
      %127 = tpu.assume_multiple %126, 16 : i32
      %c0_72 = arith.constant 0 : index
      %c0_73 = arith.constant 0 : index
      %128 = vector.load %arg5[%c0_72, %c0_73] : memref<23x32xf32, #tpu.memory_space<vmem>>, vector<16x32xf32>
      %129 = arith.index_cast %127 : i32 to index
      %c0_74 = arith.constant 0 : index
      %130 = vector.load %arg14[%129, %c0_74] : memref<32x32xf32, #tpu.memory_space<vmem>>, vector<16x32xf32>
      %131 = tpu.transpose %130, [1, 0] : vector<16x32xf32> -> vector<32x16xf32>
      %132 = vector.extract_strided_slice %131 {offsets = [0, 0], sizes = [16, 16], strides = [1, 1]} : vector<32x16xf32> to vector<16x16xf32>
      %133 = vector.extract_strided_slice %131 {offsets = [16, 0], sizes = [16, 16], strides = [1, 1]} : vector<32x16xf32> to vector<16x16xf32>
      %c0_i32_75 = arith.constant 0 : i32
      %134 = arith.addi %127, %c0_i32_75 : i32
      %135 = arith.index_cast %134 : i32 to index
      %c0_76 = arith.constant 0 : index
      %136 = vector.load %arg11[%135, %c0_76] : memref<32x32xf32, #tpu.memory_space<vmem>>, vector<1x32xf32>
      %137 = arith.index_cast %134 : i32 to index
      %c0_77 = arith.constant 0 : index
      %138 = vector.load %arg12[%137, %c0_77] : memref<32x32xf32, #tpu.memory_space<vmem>>, vector<1x32xf32>
      %139 = arith.mulf %136, %138 : vector<1x32xf32>
      %140 = vector.broadcast %136 : vector<1x32xf32> to vector<16x32xf32>
      %141 = arith.mulf %140, %128 : vector<16x32xf32>
      %142 = math.exp %141 : vector<16x32xf32>
      %143 = arith.mulf %142, %arg18 : vector<16x32xf32>
      %144 = vector.extract_strided_slice %132 {offsets = [0, 0], sizes = [16, 1], strides = [1, 1]} : vector<16x16xf32> to vector<16x1xf32>
      %145 = vector.broadcast %144 : vector<16x1xf32> to vector<16x32xf32>
      %146 = vector.broadcast %139 : vector<1x32xf32> to vector<16x32xf32>
      %147 = arith.mulf %145, %146 : vector<16x32xf32>
      %148 = arith.addf %143, %147 : vector<16x32xf32>
      %149 = vector.extract_strided_slice %133 {offsets = [0, 0], sizes = [16, 1], strides = [1, 1]} : vector<16x16xf32> to vector<16x1xf32>
      %150 = vector.broadcast %149 : vector<16x1xf32> to vector<16x32xf32>
      %151 = arith.mulf %150, %148 : vector<16x32xf32>
      %cst_78 = arith.constant dense<0.000000e+00> : vector<32xf32>
      %152 = vector.multi_reduction <add>, %151, %cst_78 [0] : vector<16x32xf32> to vector<32xf32>
      %153 = vector.shape_cast %152 : vector<32xf32> to vector<1x32xf32>
      %154 = arith.index_cast %134 : i32 to index
      %c0_79 = arith.constant 0 : index
      %155 = vector.load %arg15[%154, %c0_79] : memref<32x32xf32, #tpu.memory_space<vmem>>, vector<1x32xf32>
      tpu.vector_store %arg15[%154, %c0_79], %153 {strides = array<i32>} : memref<32x32xf32, #tpu.memory_space<vmem>>, vector<1x32xf32>,
      %c1_i32_80 = arith.constant 1 : i32
      %156 = arith.addi %127, %c1_i32_80 : i32
      %157 = arith.index_cast %156 : i32 to index
      %c0_81 = arith.constant 0 : index
      %158 = vector.load %arg11[%157, %c0_81] : memref<32x32xf32, #tpu.memory_space<vmem>>, vector<1x32xf32>
      %159 = arith.index_cast %156 : i32 to index
      %c0_82 = arith.constant 0 : index
      %160 = vector.load %arg12[%159, %c0_82] : memref<32x32xf32, #tpu.memory_space<vmem>>, vector<1x32xf32>
      %161 = arith.mulf %158, %160 : vector<1x32xf32>
      %162 = vector.broadcast %158 : vector<1x32xf32> to vector<16x32xf32>
      %163 = arith.mulf %162, %128 : vector<16x32xf32>
      %164 = math.exp %163 : vector<16x32xf32>
      %165 = arith.mulf %164, %148 : vector<16x32xf32>
      %166 = vector.extract_strided_slice %132 {offsets = [0, 1], sizes = [16, 1], strides = [1, 1]} : vector<16x16xf32> to vector<16x1xf32>
      %167 = vector.broadcast %166 : vector<16x1xf32> to vector<16x32xf32>
      %168 = vector.broadcast %161 : vector<1x32xf32> to vector<16x32xf32>
      %169 = arith.mulf %167, %168 : vector<16x32xf32>
      %170 = arith.addf %165, %169 : vector<16x32xf32>
      %171 = vector.extract_strided_slice %133 {offsets = [0, 1], sizes = [16, 1], strides = [1, 1]} : vector<16x16xf32> to vector<16x1xf32>
      %172 = vector.broadcast %171 : vector<16x1xf32> to vector<16x32xf32>
      %173 = arith.mulf %172, %170 : vector<16x32xf32>
      %cst_83 = arith.constant dense<0.000000e+00> : vector<32xf32>
      %174 = vector.multi_reduction <add>, %173, %cst_83 [0] : vector<16x32xf32> to vector<32xf32>
      %175 = vector.shape_cast %174 : vector<32xf32> to vector<1x32xf32>
      %176 = arith.index_cast %156 : i32 to index
      %c0_84 = arith.constant 0 : index
      %177 = vector.load %arg15[%176, %c0_84] : memref<32x32xf32, #tpu.memory_space<vmem>>, vector<1x32xf32>
      tpu.vector_store %arg15[%176, %c0_84], %175 {strides = array<i32>} : memref<32x32xf32, #tpu.memory_space<vmem>>, vector<1x32xf32>,
      %c2_i32_85 = arith.constant 2 : i32
      %178 = arith.addi %127, %c2_i32_85 : i32
      %179 = arith.index_cast %178 : i32 to index
      %c0_86 = arith.constant 0 : index
      %180 = vector.load %arg11[%179, %c0_86] : memref<32x32xf32, #tpu.memory_space<vmem>>, vector<1x32xf32>
      %181 = arith.index_cast %178 : i32 to index
      %c0_87 = arith.constant 0 : index
      %182 = vector.load %arg12[%181, %c0_87] : memref<32x32xf32, #tpu.memory_space<vmem>>, vector<1x32xf32>
      %183 = arith.mulf %180, %182 : vector<1x32xf32>
      %184 = vector.broadcast %180 : vector<1x32xf32> to vector<16x32xf32>
      %185 = arith.mulf %184, %128 : vector<16x32xf32>
      %186 = math.exp %185 : vector<16x32xf32>
      %187 = arith.mulf %186, %170 : vector<16x32xf32>
      %188 = vector.extract_strided_slice %132 {offsets = [0, 2], sizes = [16, 1], strides = [1, 1]} : vector<16x16xf32> to vector<16x1xf32>
      %189 = vector.broadcast %188 : vector<16x1xf32> to vector<16x32xf32>
      %190 = vector.broadcast %183 : vector<1x32xf32> to vector<16x32xf32>
      %191 = arith.mulf %189, %190 : vector<16x32xf32>
      %192 = arith.addf %187, %191 : vector<16x32xf32>
      %193 = vector.extract_strided_slice %133 {offsets = [0, 2], sizes = [16, 1], strides = [1, 1]} : vector<16x16xf32> to vector<16x1xf32>
      %194 = vector.broadcast %193 : vector<16x1xf32> to vector<16x32xf32>
      %195 = arith.mulf %194, %192 : vector<16x32xf32>
      %cst_88 = arith.constant dense<0.000000e+00> : vector<32xf32>
      %196 = vector.multi_reduction <add>, %195, %cst_88 [0] : vector<16x32xf32> to vector<32xf32>
      %197 = vector.shape_cast %196 : vector<32xf32> to vector<1x32xf32>
      %198 = arith.index_cast %178 : i32 to index
      %c0_89 = arith.constant 0 : index
      %199 = vector.load %arg15[%198, %c0_89] : memref<32x32xf32, #tpu.memory_space<vmem>>, vector<1x32xf32>
      tpu.vector_store %arg15[%198, %c0_89], %197 {strides = array<i32>} : memref<32x32xf32, #tpu.memory_space<vmem>>, vector<1x32xf32>,
      %c3_i32 = arith.constant 3 : i32
      %200 = arith.addi %127, %c3_i32 : i32
      %201 = arith.index_cast %200 : i32 to index
      %c0_90 = arith.constant 0 : index
      %202 = vector.load %arg11[%201, %c0_90] : memref<32x32xf32, #tpu.memory_space<vmem>>, vector<1x32xf32>
      %203 = arith.index_cast %200 : i32 to index
      %c0_91 = arith.constant 0 : index
      %204 = vector.load %arg12[%203, %c0_91] : memref<32x32xf32, #tpu.memory_space<vmem>>, vector<1x32xf32>
      %205 = arith.mulf %202, %204 : vector<1x32xf32>
      %206 = vector.broadcast %202 : vector<1x32xf32> to vector<16x32xf32>
      %207 = arith.mulf %206, %128 : vector<16x32xf32>
      %208 = math.exp %207 : vector<16x32xf32>
      %209 = arith.mulf %208, %192 : vector<16x32xf32>
      %210 = vector.extract_strided_slice %132 {offsets = [0, 3], sizes = [16, 1], strides = [1, 1]} : vector<16x16xf32> to vector<16x1xf32>
      %211 = vector.broadcast %210 : vector<16x1xf32> to vector<16x32xf32>
      %212 = vector.broadcast %205 : vector<1x32xf32> to vector<16x32xf32>
      %213 = arith.mulf %211, %212 : vector<16x32xf32>
      %214 = arith.addf %209, %213 : vector<16x32xf32>
      %215 = vector.extract_strided_slice %133 {offsets = [0, 3], sizes = [16, 1], strides = [1, 1]} : vector<16x16xf32> to vector<16x1xf32>
      %216 = vector.broadcast %215 : vector<16x1xf32> to vector<16x32xf32>
      %217 = arith.mulf %216, %214 : vector<16x32xf32>
      %cst_92 = arith.constant dense<0.000000e+00> : vector<32xf32>
      %218 = vector.multi_reduction <add>, %217, %cst_92 [0] : vector<16x32xf32> to vector<32xf32>
      %219 = vector.shape_cast %218 : vector<32xf32> to vector<1x32xf32>
      %220 = arith.index_cast %200 : i32 to index
      %c0_93 = arith.constant 0 : index
      %221 = vector.load %arg15[%220, %c0_93] : memref<32x32xf32, #tpu.memory_space<vmem>>, vector<1x32xf32>
      tpu.vector_store %arg15[%220, %c0_93], %219 {strides = array<i32>} : memref<32x32xf32, #tpu.memory_space<vmem>>, vector<1x32xf32>,
      %c4_i32 = arith.constant 4 : i32
      %222 = arith.addi %127, %c4_i32 : i32
      %223 = arith.index_cast %222 : i32 to index
      %c0_94 = arith.constant 0 : index
      %224 = vector.load %arg11[%223, %c0_94] : memref<32x32xf32, #tpu.memory_space<vmem>>, vector<1x32xf32>
      %225 = arith.index_cast %222 : i32 to index
      %c0_95 = arith.constant 0 : index
      %226 = vector.load %arg12[%225, %c0_95] : memref<32x32xf32, #tpu.memory_space<vmem>>, vector<1x32xf32>
      %227 = arith.mulf %224, %226 : vector<1x32xf32>
      %228 = vector.broadcast %224 : vector<1x32xf32> to vector<16x32xf32>
      %229 = arith.mulf %228, %128 : vector<16x32xf32>
      %230 = math.exp %229 : vector<16x32xf32>
      %231 = arith.mulf %230, %214 : vector<16x32xf32>
      %232 = vector.extract_strided_slice %132 {offsets = [0, 4], sizes = [16, 1], strides = [1, 1]} : vector<16x16xf32> to vector<16x1xf32>
      %233 = vector.broadcast %232 : vector<16x1xf32> to vector<16x32xf32>
      %234 = vector.broadcast %227 : vector<1x32xf32> to vector<16x32xf32>
      %235 = arith.mulf %233, %234 : vector<16x32xf32>
      %236 = arith.addf %231, %235 : vector<16x32xf32>
      %237 = vector.extract_strided_slice %133 {offsets = [0, 4], sizes = [16, 1], strides = [1, 1]} : vector<16x16xf32> to vector<16x1xf32>
      %238 = vector.broadcast %237 : vector<16x1xf32> to vector<16x32xf32>
      %239 = arith.mulf %238, %236 : vector<16x32xf32>
      %cst_96 = arith.constant dense<0.000000e+00> : vector<32xf32>
      %240 = vector.multi_reduction <add>, %239, %cst_96 [0] : vector<16x32xf32> to vector<32xf32>
      %241 = vector.shape_cast %240 : vector<32xf32> to vector<1x32xf32>
      %242 = arith.index_cast %222 : i32 to index
      %c0_97 = arith.constant 0 : index
      %243 = vector.load %arg15[%242, %c0_97] : memref<32x32xf32, #tpu.memory_space<vmem>>, vector<1x32xf32>
      tpu.vector_store %arg15[%242, %c0_97], %241 {strides = array<i32>} : memref<32x32xf32, #tpu.memory_space<vmem>>, vector<1x32xf32>,
      %c5_i32 = arith.constant 5 : i32
      %244 = arith.addi %127, %c5_i32 : i32
      %245 = arith.index_cast %244 : i32 to index
      %c0_98 = arith.constant 0 : index
      %246 = vector.load %arg11[%245, %c0_98] : memref<32x32xf32, #tpu.memory_space<vmem>>, vector<1x32xf32>
      %247 = arith.index_cast %244 : i32 to index
      %c0_99 = arith.constant 0 : index
      %248 = vector.load %arg12[%247, %c0_99] : memref<32x32xf32, #tpu.memory_space<vmem>>, vector<1x32xf32>
      %249 = arith.mulf %246, %248 : vector<1x32xf32>
      %250 = vector.broadcast %246 : vector<1x32xf32> to vector<16x32xf32>
      %251 = arith.mulf %250, %128 : vector<16x32xf32>
      %252 = math.exp %251 : vector<16x32xf32>
      %253 = arith.mulf %252, %236 : vector<16x32xf32>
      %254 = vector.extract_strided_slice %132 {offsets = [0, 5], sizes = [16, 1], strides = [1, 1]} : vector<16x16xf32> to vector<16x1xf32>
      %255 = vector.broadcast %254 : vector<16x1xf32> to vector<16x32xf32>
      %256 = vector.broadcast %249 : vector<1x32xf32> to vector<16x32xf32>
      %257 = arith.mulf %255, %256 : vector<16x32xf32>
      %258 = arith.addf %253, %257 : vector<16x32xf32>
      %259 = vector.extract_strided_slice %133 {offsets = [0, 5], sizes = [16, 1], strides = [1, 1]} : vector<16x16xf32> to vector<16x1xf32>
      %260 = vector.broadcast %259 : vector<16x1xf32> to vector<16x32xf32>
      %261 = arith.mulf %260, %258 : vector<16x32xf32>
      %cst_100 = arith.constant dense<0.000000e+00> : vector<32xf32>
      %262 = vector.multi_reduction <add>, %261, %cst_100 [0] : vector<16x32xf32> to vector<32xf32>
      %263 = vector.shape_cast %262 : vector<32xf32> to vector<1x32xf32>
      %264 = arith.index_cast %244 : i32 to index
      %c0_101 = arith.constant 0 : index
      %265 = vector.load %arg15[%264, %c0_101] : memref<32x32xf32, #tpu.memory_space<vmem>>, vector<1x32xf32>
      tpu.vector_store %arg15[%264, %c0_101], %263 {strides = array<i32>} : memref<32x32xf32, #tpu.memory_space<vmem>>, vector<1x32xf32>,
      %c6_i32 = arith.constant 6 : i32
      %266 = arith.addi %127, %c6_i32 : i32
      %267 = arith.index_cast %266 : i32 to index
      %c0_102 = arith.constant 0 : index
      %268 = vector.load %arg11[%267, %c0_102] : memref<32x32xf32, #tpu.memory_space<vmem>>, vector<1x32xf32>
      %269 = arith.index_cast %266 : i32 to index
      %c0_103 = arith.constant 0 : index
      %270 = vector.load %arg12[%269, %c0_103] : memref<32x32xf32, #tpu.memory_space<vmem>>, vector<1x32xf32>
      %271 = arith.mulf %268, %270 : vector<1x32xf32>
      %272 = vector.broadcast %268 : vector<1x32xf32> to vector<16x32xf32>
      %273 = arith.mulf %272, %128 : vector<16x32xf32>
      %274 = math.exp %273 : vector<16x32xf32>
      %275 = arith.mulf %274, %258 : vector<16x32xf32>
      %276 = vector.extract_strided_slice %132 {offsets = [0, 6], sizes = [16, 1], strides = [1, 1]} : vector<16x16xf32> to vector<16x1xf32>
      %277 = vector.broadcast %276 : vector<16x1xf32> to vector<16x32xf32>
      %278 = vector.broadcast %271 : vector<1x32xf32> to vector<16x32xf32>
      %279 = arith.mulf %277, %278 : vector<16x32xf32>
      %280 = arith.addf %275, %279 : vector<16x32xf32>
      %281 = vector.extract_strided_slice %133 {offsets = [0, 6], sizes = [16, 1], strides = [1, 1]} : vector<16x16xf32> to vector<16x1xf32>
      %282 = vector.broadcast %281 : vector<16x1xf32> to vector<16x32xf32>
      %283 = arith.mulf %282, %280 : vector<16x32xf32>
      %cst_104 = arith.constant dense<0.000000e+00> : vector<32xf32>
      %284 = vector.multi_reduction <add>, %283, %cst_104 [0] : vector<16x32xf32> to vector<32xf32>
      %285 = vector.shape_cast %284 : vector<32xf32> to vector<1x32xf32>
      %286 = arith.index_cast %266 : i32 to index
      %c0_105 = arith.constant 0 : index
      %287 = vector.load %arg15[%286, %c0_105] : memref<32x32xf32, #tpu.memory_space<vmem>>, vector<1x32xf32>
      tpu.vector_store %arg15[%286, %c0_105], %285 {strides = array<i32>} : memref<32x32xf32, #tpu.memory_space<vmem>>, vector<1x32xf32>,
      %c7_i32 = arith.constant 7 : i32
      %288 = arith.addi %127, %c7_i32 : i32
      %289 = arith.index_cast %288 : i32 to index
      %c0_106 = arith.constant 0 : index
      %290 = vector.load %arg11[%289, %c0_106] : memref<32x32xf32, #tpu.memory_space<vmem>>, vector<1x32xf32>
      %291 = arith.index_cast %288 : i32 to index
      %c0_107 = arith.constant 0 : index
      %292 = vector.load %arg12[%291, %c0_107] : memref<32x32xf32, #tpu.memory_space<vmem>>, vector<1x32xf32>
      %293 = arith.mulf %290, %292 : vector<1x32xf32>
      %294 = vector.broadcast %290 : vector<1x32xf32> to vector<16x32xf32>
      %295 = arith.mulf %294, %128 : vector<16x32xf32>
      %296 = math.exp %295 : vector<16x32xf32>
      %297 = arith.mulf %296, %280 : vector<16x32xf32>
      %298 = vector.extract_strided_slice %132 {offsets = [0, 7], sizes = [16, 1], strides = [1, 1]} : vector<16x16xf32> to vector<16x1xf32>
      %299 = vector.broadcast %298 : vector<16x1xf32> to vector<16x32xf32>
      %300 = vector.broadcast %293 : vector<1x32xf32> to vector<16x32xf32>
      %301 = arith.mulf %299, %300 : vector<16x32xf32>
      %302 = arith.addf %297, %301 : vector<16x32xf32>
      %303 = vector.extract_strided_slice %133 {offsets = [0, 7], sizes = [16, 1], strides = [1, 1]} : vector<16x16xf32> to vector<16x1xf32>
      %304 = vector.broadcast %303 : vector<16x1xf32> to vector<16x32xf32>
      %305 = arith.mulf %304, %302 : vector<16x32xf32>
      %cst_108 = arith.constant dense<0.000000e+00> : vector<32xf32>
      %306 = vector.multi_reduction <add>, %305, %cst_108 [0] : vector<16x32xf32> to vector<32xf32>
      %307 = vector.shape_cast %306 : vector<32xf32> to vector<1x32xf32>
      %308 = arith.index_cast %288 : i32 to index
      %c0_109 = arith.constant 0 : index
      %309 = vector.load %arg15[%308, %c0_109] : memref<32x32xf32, #tpu.memory_space<vmem>>, vector<1x32xf32>
      tpu.vector_store %arg15[%308, %c0_109], %307 {strides = array<i32>} : memref<32x32xf32, #tpu.memory_space<vmem>>, vector<1x32xf32>,
      %c8_i32 = arith.constant 8 : i32
      %310 = arith.addi %127, %c8_i32 : i32
      %311 = arith.index_cast %310 : i32 to index
      %c0_110 = arith.constant 0 : index
      %312 = vector.load %arg11[%311, %c0_110] : memref<32x32xf32, #tpu.memory_space<vmem>>, vector<1x32xf32>
      %313 = arith.index_cast %310 : i32 to index
      %c0_111 = arith.constant 0 : index
      %314 = vector.load %arg12[%313, %c0_111] : memref<32x32xf32, #tpu.memory_space<vmem>>, vector<1x32xf32>
      %315 = arith.mulf %312, %314 : vector<1x32xf32>
      %316 = vector.broadcast %312 : vector<1x32xf32> to vector<16x32xf32>
      %317 = arith.mulf %316, %128 : vector<16x32xf32>
      %318 = math.exp %317 : vector<16x32xf32>
      %319 = arith.mulf %318, %302 : vector<16x32xf32>
      %320 = vector.extract_strided_slice %132 {offsets = [0, 8], sizes = [16, 1], strides = [1, 1]} : vector<16x16xf32> to vector<16x1xf32>
      %321 = vector.broadcast %320 : vector<16x1xf32> to vector<16x32xf32>
      %322 = vector.broadcast %315 : vector<1x32xf32> to vector<16x32xf32>
      %323 = arith.mulf %321, %322 : vector<16x32xf32>
      %324 = arith.addf %319, %323 : vector<16x32xf32>
      %325 = vector.extract_strided_slice %133 {offsets = [0, 8], sizes = [16, 1], strides = [1, 1]} : vector<16x16xf32> to vector<16x1xf32>
      %326 = vector.broadcast %325 : vector<16x1xf32> to vector<16x32xf32>
      %327 = arith.mulf %326, %324 : vector<16x32xf32>
      %cst_112 = arith.constant dense<0.000000e+00> : vector<32xf32>
      %328 = vector.multi_reduction <add>, %327, %cst_112 [0] : vector<16x32xf32> to vector<32xf32>
      %329 = vector.shape_cast %328 : vector<32xf32> to vector<1x32xf32>
      %330 = arith.index_cast %310 : i32 to index
      %c0_113 = arith.constant 0 : index
      %331 = vector.load %arg15[%330, %c0_113] : memref<32x32xf32, #tpu.memory_space<vmem>>, vector<1x32xf32>
      tpu.vector_store %arg15[%330, %c0_113], %329 {strides = array<i32>} : memref<32x32xf32, #tpu.memory_space<vmem>>, vector<1x32xf32>,
      %c9_i32 = arith.constant 9 : i32
      %332 = arith.addi %127, %c9_i32 : i32
      %333 = arith.index_cast %332 : i32 to index
      %c0_114 = arith.constant 0 : index
      %334 = vector.load %arg11[%333, %c0_114] : memref<32x32xf32, #tpu.memory_space<vmem>>, vector<1x32xf32>
      %335 = arith.index_cast %332 : i32 to index
      %c0_115 = arith.constant 0 : index
      %336 = vector.load %arg12[%335, %c0_115] : memref<32x32xf32, #tpu.memory_space<vmem>>, vector<1x32xf32>
      %337 = arith.mulf %334, %336 : vector<1x32xf32>
      %338 = vector.broadcast %334 : vector<1x32xf32> to vector<16x32xf32>
      %339 = arith.mulf %338, %128 : vector<16x32xf32>
      %340 = math.exp %339 : vector<16x32xf32>
      %341 = arith.mulf %340, %324 : vector<16x32xf32>
      %342 = vector.extract_strided_slice %132 {offsets = [0, 9], sizes = [16, 1], strides = [1, 1]} : vector<16x16xf32> to vector<16x1xf32>
      %343 = vector.broadcast %342 : vector<16x1xf32> to vector<16x32xf32>
      %344 = vector.broadcast %337 : vector<1x32xf32> to vector<16x32xf32>
      %345 = arith.mulf %343, %344 : vector<16x32xf32>
      %346 = arith.addf %341, %345 : vector<16x32xf32>
      %347 = vector.extract_strided_slice %133 {offsets = [0, 9], sizes = [16, 1], strides = [1, 1]} : vector<16x16xf32> to vector<16x1xf32>
      %348 = vector.broadcast %347 : vector<16x1xf32> to vector<16x32xf32>
      %349 = arith.mulf %348, %346 : vector<16x32xf32>
      %cst_116 = arith.constant dense<0.000000e+00> : vector<32xf32>
      %350 = vector.multi_reduction <add>, %349, %cst_116 [0] : vector<16x32xf32> to vector<32xf32>
      %351 = vector.shape_cast %350 : vector<32xf32> to vector<1x32xf32>
      %352 = arith.index_cast %332 : i32 to index
      %c0_117 = arith.constant 0 : index
      %353 = vector.load %arg15[%352, %c0_117] : memref<32x32xf32, #tpu.memory_space<vmem>>, vector<1x32xf32>
      tpu.vector_store %arg15[%352, %c0_117], %351 {strides = array<i32>} : memref<32x32xf32, #tpu.memory_space<vmem>>, vector<1x32xf32>,
      %c10_i32 = arith.constant 10 : i32
      %354 = arith.addi %127, %c10_i32 : i32
      %355 = arith.index_cast %354 : i32 to index
      %c0_118 = arith.constant 0 : index
      %356 = vector.load %arg11[%355, %c0_118] : memref<32x32xf32, #tpu.memory_space<vmem>>, vector<1x32xf32>
      %357 = arith.index_cast %354 : i32 to index
      %c0_119 = arith.constant 0 : index
      %358 = vector.load %arg12[%357, %c0_119] : memref<32x32xf32, #tpu.memory_space<vmem>>, vector<1x32xf32>
      %359 = arith.mulf %356, %358 : vector<1x32xf32>
      %360 = vector.broadcast %356 : vector<1x32xf32> to vector<16x32xf32>
      %361 = arith.mulf %360, %128 : vector<16x32xf32>
      %362 = math.exp %361 : vector<16x32xf32>
      %363 = arith.mulf %362, %346 : vector<16x32xf32>
      %364 = vector.extract_strided_slice %132 {offsets = [0, 10], sizes = [16, 1], strides = [1, 1]} : vector<16x16xf32> to vector<16x1xf32>
      %365 = vector.broadcast %364 : vector<16x1xf32> to vector<16x32xf32>
      %366 = vector.broadcast %359 : vector<1x32xf32> to vector<16x32xf32>
      %367 = arith.mulf %365, %366 : vector<16x32xf32>
      %368 = arith.addf %363, %367 : vector<16x32xf32>
      %369 = vector.extract_strided_slice %133 {offsets = [0, 10], sizes = [16, 1], strides = [1, 1]} : vector<16x16xf32> to vector<16x1xf32>
      %370 = vector.broadcast %369 : vector<16x1xf32> to vector<16x32xf32>
      %371 = arith.mulf %370, %368 : vector<16x32xf32>
      %cst_120 = arith.constant dense<0.000000e+00> : vector<32xf32>
      %372 = vector.multi_reduction <add>, %371, %cst_120 [0] : vector<16x32xf32> to vector<32xf32>
      %373 = vector.shape_cast %372 : vector<32xf32> to vector<1x32xf32>
      %374 = arith.index_cast %354 : i32 to index
      %c0_121 = arith.constant 0 : index
      %375 = vector.load %arg15[%374, %c0_121] : memref<32x32xf32, #tpu.memory_space<vmem>>, vector<1x32xf32>
      tpu.vector_store %arg15[%374, %c0_121], %373 {strides = array<i32>} : memref<32x32xf32, #tpu.memory_space<vmem>>, vector<1x32xf32>,
      %c11_i32 = arith.constant 11 : i32
      %376 = arith.addi %127, %c11_i32 : i32
      %377 = arith.index_cast %376 : i32 to index
      %c0_122 = arith.constant 0 : index
      %378 = vector.load %arg11[%377, %c0_122] : memref<32x32xf32, #tpu.memory_space<vmem>>, vector<1x32xf32>
      %379 = arith.index_cast %376 : i32 to index
      %c0_123 = arith.constant 0 : index
      %380 = vector.load %arg12[%379, %c0_123] : memref<32x32xf32, #tpu.memory_space<vmem>>, vector<1x32xf32>
      %381 = arith.mulf %378, %380 : vector<1x32xf32>
      %382 = vector.broadcast %378 : vector<1x32xf32> to vector<16x32xf32>
      %383 = arith.mulf %382, %128 : vector<16x32xf32>
      %384 = math.exp %383 : vector<16x32xf32>
      %385 = arith.mulf %384, %368 : vector<16x32xf32>
      %386 = vector.extract_strided_slice %132 {offsets = [0, 11], sizes = [16, 1], strides = [1, 1]} : vector<16x16xf32> to vector<16x1xf32>
      %387 = vector.broadcast %386 : vector<16x1xf32> to vector<16x32xf32>
      %388 = vector.broadcast %381 : vector<1x32xf32> to vector<16x32xf32>
      %389 = arith.mulf %387, %388 : vector<16x32xf32>
      %390 = arith.addf %385, %389 : vector<16x32xf32>
      %391 = vector.extract_strided_slice %133 {offsets = [0, 11], sizes = [16, 1], strides = [1, 1]} : vector<16x16xf32> to vector<16x1xf32>
      %392 = vector.broadcast %391 : vector<16x1xf32> to vector<16x32xf32>
      %393 = arith.mulf %392, %390 : vector<16x32xf32>
      %cst_124 = arith.constant dense<0.000000e+00> : vector<32xf32>
      %394 = vector.multi_reduction <add>, %393, %cst_124 [0] : vector<16x32xf32> to vector<32xf32>
      %395 = vector.shape_cast %394 : vector<32xf32> to vector<1x32xf32>
      %396 = arith.index_cast %376 : i32 to index
      %c0_125 = arith.constant 0 : index
      %397 = vector.load %arg15[%396, %c0_125] : memref<32x32xf32, #tpu.memory_space<vmem>>, vector<1x32xf32>
      tpu.vector_store %arg15[%396, %c0_125], %395 {strides = array<i32>} : memref<32x32xf32, #tpu.memory_space<vmem>>, vector<1x32xf32>,
      %c12_i32 = arith.constant 12 : i32
      %398 = arith.addi %127, %c12_i32 : i32
      %399 = arith.index_cast %398 : i32 to index
      %c0_126 = arith.constant 0 : index
      %400 = vector.load %arg11[%399, %c0_126] : memref<32x32xf32, #tpu.memory_space<vmem>>, vector<1x32xf32>
      %401 = arith.index_cast %398 : i32 to index
      %c0_127 = arith.constant 0 : index
      %402 = vector.load %arg12[%401, %c0_127] : memref<32x32xf32, #tpu.memory_space<vmem>>, vector<1x32xf32>
      %403 = arith.mulf %400, %402 : vector<1x32xf32>
      %404 = vector.broadcast %400 : vector<1x32xf32> to vector<16x32xf32>
      %405 = arith.mulf %404, %128 : vector<16x32xf32>
      %406 = math.exp %405 : vector<16x32xf32>
      %407 = arith.mulf %406, %390 : vector<16x32xf32>
      %408 = vector.extract_strided_slice %132 {offsets = [0, 12], sizes = [16, 1], strides = [1, 1]} : vector<16x16xf32> to vector<16x1xf32>
      %409 = vector.broadcast %408 : vector<16x1xf32> to vector<16x32xf32>
      %410 = vector.broadcast %403 : vector<1x32xf32> to vector<16x32xf32>
      %411 = arith.mulf %409, %410 : vector<16x32xf32>
      %412 = arith.addf %407, %411 : vector<16x32xf32>
      %413 = vector.extract_strided_slice %133 {offsets = [0, 12], sizes = [16, 1], strides = [1, 1]} : vector<16x16xf32> to vector<16x1xf32>
      %414 = vector.broadcast %413 : vector<16x1xf32> to vector<16x32xf32>
      %415 = arith.mulf %414, %412 : vector<16x32xf32>
      %cst_128 = arith.constant dense<0.000000e+00> : vector<32xf32>
      %416 = vector.multi_reduction <add>, %415, %cst_128 [0] : vector<16x32xf32> to vector<32xf32>
      %417 = vector.shape_cast %416 : vector<32xf32> to vector<1x32xf32>
      %418 = arith.index_cast %398 : i32 to index
      %c0_129 = arith.constant 0 : index
      %419 = vector.load %arg15[%418, %c0_129] : memref<32x32xf32, #tpu.memory_space<vmem>>, vector<1x32xf32>
      tpu.vector_store %arg15[%418, %c0_129], %417 {strides = array<i32>} : memref<32x32xf32, #tpu.memory_space<vmem>>, vector<1x32xf32>,
      %c13_i32 = arith.constant 13 : i32
      %420 = arith.addi %127, %c13_i32 : i32
      %421 = arith.index_cast %420 : i32 to index
      %c0_130 = arith.constant 0 : index
      %422 = vector.load %arg11[%421, %c0_130] : memref<32x32xf32, #tpu.memory_space<vmem>>, vector<1x32xf32>
      %423 = arith.index_cast %420 : i32 to index
      %c0_131 = arith.constant 0 : index
      %424 = vector.load %arg12[%423, %c0_131] : memref<32x32xf32, #tpu.memory_space<vmem>>, vector<1x32xf32>
      %425 = arith.mulf %422, %424 : vector<1x32xf32>
      %426 = vector.broadcast %422 : vector<1x32xf32> to vector<16x32xf32>
      %427 = arith.mulf %426, %128 : vector<16x32xf32>
      %428 = math.exp %427 : vector<16x32xf32>
      %429 = arith.mulf %428, %412 : vector<16x32xf32>
      %430 = vector.extract_strided_slice %132 {offsets = [0, 13], sizes = [16, 1], strides = [1, 1]} : vector<16x16xf32> to vector<16x1xf32>
      %431 = vector.broadcast %430 : vector<16x1xf32> to vector<16x32xf32>
      %432 = vector.broadcast %425 : vector<1x32xf32> to vector<16x32xf32>
      %433 = arith.mulf %431, %432 : vector<16x32xf32>
      %434 = arith.addf %429, %433 : vector<16x32xf32>
      %435 = vector.extract_strided_slice %133 {offsets = [0, 13], sizes = [16, 1], strides = [1, 1]} : vector<16x16xf32> to vector<16x1xf32>
      %436 = vector.broadcast %435 : vector<16x1xf32> to vector<16x32xf32>
      %437 = arith.mulf %436, %434 : vector<16x32xf32>
      %cst_132 = arith.constant dense<0.000000e+00> : vector<32xf32>
      %438 = vector.multi_reduction <add>, %437, %cst_132 [0] : vector<16x32xf32> to vector<32xf32>
      %439 = vector.shape_cast %438 : vector<32xf32> to vector<1x32xf32>
      %440 = arith.index_cast %420 : i32 to index
      %c0_133 = arith.constant 0 : index
      %441 = vector.load %arg15[%440, %c0_133] : memref<32x32xf32, #tpu.memory_space<vmem>>, vector<1x32xf32>
      tpu.vector_store %arg15[%440, %c0_133], %439 {strides = array<i32>} : memref<32x32xf32, #tpu.memory_space<vmem>>, vector<1x32xf32>,
      %c14_i32 = arith.constant 14 : i32
      %442 = arith.addi %127, %c14_i32 : i32
      %443 = arith.index_cast %442 : i32 to index
      %c0_134 = arith.constant 0 : index
      %444 = vector.load %arg11[%443, %c0_134] : memref<32x32xf32, #tpu.memory_space<vmem>>, vector<1x32xf32>
      %445 = arith.index_cast %442 : i32 to index
      %c0_135 = arith.constant 0 : index
      %446 = vector.load %arg12[%445, %c0_135] : memref<32x32xf32, #tpu.memory_space<vmem>>, vector<1x32xf32>
      %447 = arith.mulf %444, %446 : vector<1x32xf32>
      %448 = vector.broadcast %444 : vector<1x32xf32> to vector<16x32xf32>
      %449 = arith.mulf %448, %128 : vector<16x32xf32>
      %450 = math.exp %449 : vector<16x32xf32>
      %451 = arith.mulf %450, %434 : vector<16x32xf32>
      %452 = vector.extract_strided_slice %132 {offsets = [0, 14], sizes = [16, 1], strides = [1, 1]} : vector<16x16xf32> to vector<16x1xf32>
      %453 = vector.broadcast %452 : vector<16x1xf32> to vector<16x32xf32>
      %454 = vector.broadcast %447 : vector<1x32xf32> to vector<16x32xf32>
      %455 = arith.mulf %453, %454 : vector<16x32xf32>
      %456 = arith.addf %451, %455 : vector<16x32xf32>
      %457 = vector.extract_strided_slice %133 {offsets = [0, 14], sizes = [16, 1], strides = [1, 1]} : vector<16x16xf32> to vector<16x1xf32>
      %458 = vector.broadcast %457 : vector<16x1xf32> to vector<16x32xf32>
      %459 = arith.mulf %458, %456 : vector<16x32xf32>
      %cst_136 = arith.constant dense<0.000000e+00> : vector<32xf32>
      %460 = vector.multi_reduction <add>, %459, %cst_136 [0] : vector<16x32xf32> to vector<32xf32>
      %461 = vector.shape_cast %460 : vector<32xf32> to vector<1x32xf32>
      %462 = arith.index_cast %442 : i32 to index
      %c0_137 = arith.constant 0 : index
      %463 = vector.load %arg15[%462, %c0_137] : memref<32x32xf32, #tpu.memory_space<vmem>>, vector<1x32xf32>
      tpu.vector_store %arg15[%462, %c0_137], %461 {strides = array<i32>} : memref<32x32xf32, #tpu.memory_space<vmem>>, vector<1x32xf32>,
      %c15_i32 = arith.constant 15 : i32
      %464 = arith.addi %127, %c15_i32 : i32
      %465 = arith.index_cast %464 : i32 to index
      %c0_138 = arith.constant 0 : index
      %466 = vector.load %arg11[%465, %c0_138] : memref<32x32xf32, #tpu.memory_space<vmem>>, vector<1x32xf32>
      %467 = arith.index_cast %464 : i32 to index
      %c0_139 = arith.constant 0 : index
      %468 = vector.load %arg12[%467, %c0_139] : memref<32x32xf32, #tpu.memory_space<vmem>>, vector<1x32xf32>
      %469 = arith.mulf %466, %468 : vector<1x32xf32>
      %470 = vector.broadcast %466 : vector<1x32xf32> to vector<16x32xf32>
      %471 = arith.mulf %470, %128 : vector<16x32xf32>
      %472 = math.exp %471 : vector<16x32xf32>
      %473 = arith.mulf %472, %456 : vector<16x32xf32>
      %474 = vector.extract_strided_slice %132 {offsets = [0, 15], sizes = [16, 1], strides = [1, 1]} : vector<16x16xf32> to vector<16x1xf32>
      %475 = vector.broadcast %474 : vector<16x1xf32> to vector<16x32xf32>
      %476 = vector.broadcast %469 : vector<1x32xf32> to vector<16x32xf32>
      %477 = arith.mulf %475, %476 : vector<16x32xf32>
      %478 = arith.addf %473, %477 : vector<16x32xf32>
      %479 = vector.extract_strided_slice %133 {offsets = [0, 15], sizes = [16, 1], strides = [1, 1]} : vector<16x16xf32> to vector<16x1xf32>
      %480 = vector.broadcast %479 : vector<16x1xf32> to vector<16x32xf32>
      %481 = arith.mulf %480, %478 : vector<16x32xf32>
      %cst_140 = arith.constant dense<0.000000e+00> : vector<32xf32>
      %482 = vector.multi_reduction <add>, %481, %cst_140 [0] : vector<16x32xf32> to vector<32xf32>
      %483 = vector.shape_cast %482 : vector<32xf32> to vector<1x32xf32>
      %484 = arith.index_cast %464 : i32 to index
      %c0_141 = arith.constant 0 : index
      %485 = vector.load %arg15[%484, %c0_141] : memref<32x32xf32, #tpu.memory_space<vmem>>, vector<1x32xf32>
      tpu.vector_store %arg15[%484, %c0_141], %483 {strides = array<i32>} : memref<32x32xf32, #tpu.memory_space<vmem>>, vector<1x32xf32>,
      scf.yield %478 : vector<16x32xf32>
    }
    %c2_i32_50 = arith.constant 2 : i32
    %c0_51 = arith.constant 0 : index
    %c0_52 = arith.constant 0 : index
    %100 = vector.load %arg16[%c0_51, %c0_52] : memref<16x32xf32, #tpu.memory_space<vmem>>, vector<16x32xf32>
    tpu.vector_store %arg16[%c0_51, %c0_52], %99 {strides = array<i32>} : memref<16x32xf32, #tpu.memory_space<vmem>>, vector<16x32xf32>,
    %c0_53 = arith.constant 0 : index
    %c0_54 = arith.constant 0 : index
    %101 = vector.load %arg15[%c0_53, %c0_54] : memref<32x32xf32, #tpu.memory_space<vmem>>, vector<32x32xf32>
    %c22 = arith.constant 22 : index
    %c0_55 = arith.constant 0 : index
    %102 = vector.load %arg5[%c22, %c0_55] : memref<23x32xf32, #tpu.memory_space<vmem>>, vector<1x32xf32>
    %c0_56 = arith.constant 0 : index
    %c0_57 = arith.constant 0 : index
    %103 = vector.load %arg12[%c0_56, %c0_57] : memref<32x32xf32, #tpu.memory_space<vmem>>, vector<32x32xf32>
    %104 = vector.broadcast %102 : vector<1x32xf32> to vector<32x32xf32>
    %105 = arith.mulf %104, %103 : vector<32x32xf32>
    %106 = arith.addf %101, %105 : vector<32x32xf32>
    %c0_58 = arith.constant 0 : index
    %c0_59 = arith.constant 0 : index
    %107 = vector.load %arg13[%c0_58, %c0_59] : memref<32x32xf32, #tpu.memory_space<vmem>>, vector<32x32xf32>
    %cst_60 = arith.constant 0.000000e+00 : f32
    %108 = vector.broadcast %cst_60 : f32 to vector<32x32xf32>
    %109 = arith.subf %108, %107 : vector<32x32xf32>
    %110 = math.exp %109 : vector<32x32xf32>
    %cst_61 = arith.constant 1.000000e+00 : f32
    %111 = vector.broadcast %cst_61 : f32 to vector<32x32xf32>
    %112 = arith.addf %111, %110 : vector<32x32xf32>
    %cst_62 = arith.constant 1.000000e+00 : f32
    %113 = vector.broadcast %cst_62 : f32 to vector<32x32xf32>
    %114 = arith.divf %113, %112 : vector<32x32xf32>
    %115 = arith.mulf %107, %114 : vector<32x32xf32>
    %116 = arith.mulf %106, %115 : vector<32x32xf32>
    %117 = arith.truncf %116 : vector<32x32xf32> to vector<32x32xbf16>
    %c0_63 = arith.constant 0 : index
    %c0_64 = arith.constant 0 : index
    %118 = vector.load %arg8[%c0_63, %c0_64] : memref<32x16xbf16, #tpu.memory_space<vmem>>, vector<32x16xbf16>
    %cst_65 = arith.constant dense<0.000000e+00> : vector<32x16xf32>
    %119 = tpu.matmul %117, %118, %cst_65 {dimension_numbers = #tpu.dot_dimension_numbers<[1], [0], [0], [1], [0, 0, 1, 1], [], []>} : vector<32x32xbf16>, vector<32x16xbf16>, vector<32x16xf32> -> vector<32x16xf32>
    %c0_66 = arith.constant 0 : index
    %c0_67 = arith.constant 0 : index
    %c0_68 = arith.constant 0 : index
    %120 = vector.load %arg2[%c0_66, %c0_67, %c0_68] : memref<1x32x16xf32, #tpu.memory_space<vmem>>, vector<1x32x16xf32>
    %121 = vector.shape_cast %120 : vector<1x32x16xf32> to vector<32x16xf32>
    %122 = arith.addf %119, %121 : vector<32x16xf32>
    %c0_69 = arith.constant 0 : index
    %c0_70 = arith.constant 0 : index
    %c0_71 = arith.constant 0 : index
    %123 = vector.load %arg9[%c0_69, %c0_70, %c0_71] : memref<1x32x16xf32, #tpu.memory_space<vmem>>, vector<1x32x16xf32>
    %124 = vector.shape_cast %123 : vector<1x32x16xf32> to vector<32x16xf32>
    %125 = vector.shape_cast %122 : vector<32x16xf32> to vector<1x32x16xf32>
    tpu.vector_store %arg9[%c0_69, %c0_70, %c0_71], %125 {strides = array<i32>} : memref<1x32x16xf32, #tpu.memory_space<vmem>>, vector<1x32x16xf32>,
    return
  }
  func.func @transform_0(%arg0: i32, %arg1: i32) -> (i32, i32, i32) {
    %c0_i32 = arith.constant 0 : i32
    %c0_i32_0 = arith.constant 0 : i32
    return %arg0, %arg1, %c0_i32 : i32, i32, i32
  }
  func.func @transform_1(%arg0: i32, %arg1: i32) -> (i32, i32) {
    %c0_i32 = arith.constant 0 : i32
    %c0_i32_0 = arith.constant 0 : i32
    %c0_i32_1 = arith.constant 0 : i32
    return %c0_i32, %c0_i32_0 : i32, i32
  }
  func.func @transform_2(%arg0: i32, %arg1: i32) -> (i32, i32) {
    %c0_i32 = arith.constant 0 : i32
    %c0_i32_0 = arith.constant 0 : i32
    %c0_i32_1 = arith.constant 0 : i32
    return %c0_i32, %c0_i32_0 : i32, i32
  }
  func.func @transform_3(%arg0: i32, %arg1: i32) -> (i32, i32) {
    %c0_i32 = arith.constant 0 : i32
    %c0_i32_0 = arith.constant 0 : i32
    %c0_i32_1 = arith.constant 0 : i32
    return %c0_i32, %c0_i32_0 : i32, i32
  }
  func.func @transform_4(%arg0: i32, %arg1: i32) -> (i32, i32) {
    %c0_i32 = arith.constant 0 : i32
    %c0_i32_0 = arith.constant 0 : i32
    %c0_i32_1 = arith.constant 0 : i32
    return %c0_i32, %c0_i32_0 : i32, i32
  }
  func.func @transform_5(%arg0: i32, %arg1: i32) -> (i32, i32) {
    %c0_i32 = arith.constant 0 : i32
    %c0_i32_0 = arith.constant 0 : i32
    %c0_i32_1 = arith.constant 0 : i32
    return %c0_i32, %c0_i32_0 : i32, i32
  }
  func.func @transform_6(%arg0: i32, %arg1: i32) -> (i32, i32) {
    %c0_i32 = arith.constant 0 : i32
    %c0_i32_0 = arith.constant 0 : i32
    %c0_i32_1 = arith.constant 0 : i32
    return %c0_i32, %c0_i32_0 : i32, i32
  }
  func.func @transform_7(%arg0: i32, %arg1: i32) -> (i32, i32, i32) {
    %c0_i32 = arith.constant 0 : i32
    %c0_i32_0 = arith.constant 0 : i32
    return %arg0, %arg1, %c0_i32 : i32, i32, i32
  }
}

</mosaic_0001>

<llo_original>
// kernel: tpu_custom_call.1
$region0: #{tpu_custom_call.1}
  #allocation0 [shape = 'u32[]', space=smem, size = 0x4, offset = 0x4, fixed_abs, tag = 'smem constant byte address 0x4 - core index']
  #allocation1 [shape = 'u32[144,128]{1,0:T(1,128)}', space=vmem, size = 0x12000, scoped, tag = 'internal scratch']
  #allocation2 [shape = 'f32[40,32]{1,0:T(8,128)}', space=vmem, size = 0x5000, scoped, tag = 'scratch operand']
  #allocation3 [shape = 'f32[32,32]{1,0:T(8,128)}', space=vmem, size = 0x4000, scoped, tag = 'scratch operand']
  #allocation4 [shape = 'f32[32,32]{1,0:T(8,128)}', space=vmem, size = 0x4000, scoped, tag = 'scratch operand']
  #allocation5 [shape = 'f32[32,32]{1,0:T(8,128)}', space=vmem, size = 0x4000, scoped, tag = 'scratch operand']
  #allocation6 [shape = 'f32[32,32]{1,0:T(8,128)}', space=vmem, size = 0x4000, scoped, tag = 'scratch operand']
  #allocation7 [shape = 'f32[32,32]{1,0:T(8,128)}', space=vmem, size = 0x4000, scoped, tag = 'scratch operand']
  #allocation8 [shape = 'f32[16,32]{1,0:T(8,128)}', space=vmem, size = 0x2000, scoped, tag = 'scratch operand']
  %s0 = inlined_call_operand.vmem [shape: f32[2,64,16], index: 0, kind: input, shape index: {}]
  %s1 = inlined_call_operand.vmem [shape: f32[2,16], index: 1, kind: input, shape index: {}]
  %s2 = inlined_call_operand.vmem [shape: bf16[16,64], index: 2, kind: input, shape index: {}]
  %s3 = inlined_call_operand.vmem [shape: f32[23,32], index: 3, kind: input, shape index: {}]
  %s4 = inlined_call_operand.vmem [shape: bf16[32,40], index: 4, kind: input, shape index: {}]
  %s5 = inlined_call_operand.vmem [shape: bf16[8,32], index: 5, kind: input, shape index: {}]
  %s6 = inlined_call_operand.vmem [shape: bf16[32,16], index: 6, kind: input, shape index: {}]
  %s7 = inlined_call_operand.vmem [shape: f32[2,64,16], index: 7, kind: output, shape index: {}]
  %s8 = sld [smem:[#allocation0]]
  $region80: #{tpu_custom_call.1} parent=0
    _
  %s10 = ssub.s32 1, %s8
  %s11 = scalar_select 0, %s10, %s8
  loop: start=0, step=1, limit=6
  $region2: #{tpu_custom_call.1} parent=0 // loop_pre_header
    _
  $region3: #{tpu_custom_call.1} parent=0 // loop_header
    %s13 = sphi 0, %s17
    %p14 = scmp.ge.s32.totalorder %s13, 6
    %s20 = sphi 0, %s32
    %s21 = sphi 0, %s28
    %s22 = sphi 0, %s20
    %s23 = sphi 0, %s21
    %s24 = sphi 0, %s22
    %s25 = sphi 0, %s23
    %s37 = sphi 0, %s39
    %s40 = sphi 0, %s37
    %s41 = sphi 0, %s40
    %s57 = sphi 0, %s41
    %s61 = sphi 0, %s61
    %s63 = sphi 0, %s61
    %s64 = sphi 0, %s63
    %s78 = sphi 0, %s64
    %s82 = sphi 0, %s82
    %s84 = sphi 0, %s82
    %s85 = sphi 0, %s84
    %s99 = sphi 0, %s85
    %s103 = sphi 0, %s103
    %s105 = sphi 0, %s103
    %s106 = sphi 0, %s105
    %s120 = sphi 0, %s106
    %s124 = sphi 0, %s124
    %s126 = sphi 0, %s124
    %s127 = sphi 0, %s126
    %s141 = sphi 0, %s127
    %s145 = sphi 0, %s145
    %s147 = sphi 0, %s145
    %s148 = sphi 0, %s147
    %s162 = sphi 0, %s148
    %s166 = sphi 0, %s166
    %s168 = sphi 0, %s166
    %s169 = sphi 0, %s168
    %s183 = sphi 0, %s169
    %s191 = sphi 0, %s193
    %s194 = sphi 0, %s191
    %s195 = sphi 0, %s194
    %s211 = sphi 0, %s195
  $region4: #{tpu_custom_call.1} parent=0 // loop_header_branch
    %16 = sbr.rel (%p14) target = $region8
  $region5: #{tpu_custom_call.1} parent=0 // loop_body
    %s18 = ssub.s32 %s13, 1
    %s19 = ssub.s32 %s13, 2
    %s26 = sadd.s32 1, %s21
    %p27 = scmp.ge.s32.totalorder %s26, 2
    %s28 = scalar_select %p27, 0, %s26
    %s29 = sadd.s32 1, %s20
    %s30 = scalar_select %p27, %s29, %s20
    %p31 = scmp.ge.s32.totalorder %s30, 2
    %s32 = scalar_select %p31, 0, %s30
    %s33 = ssub.s32 %s20, %s32
    %s34 = ssub.s32 %s21, %s28
    %s35 = sor.u32 %s33, %s34
    %p36 = scmp.eq.s32.totalorder %s35, 0
    %s38 = sadd.s32 %s37, 1
    %s39 = scalar_select %p36, %s37, %s38
    %p42 = pneg %p36
    %p43 = scmp.eq.s32.totalorder %s13, 3
    %p44 = por %p42, %p43
    %p45 = scmp.ne.s32.totalorder %s37, %s40
    %p46 = scmp.eq.s32.totalorder %s13, 0
    %p47 = por %p45, %p46
    %p48 = scmp.ne.s32.totalorder %s37, %s40
    %p49 = scmp.eq.s32.totalorder %s18, 3
    %p50 = por %p48, %p49
    %p51 = scmp.ne.s32.totalorder %s40, %s41
    %p52 = scmp.eq.s32.totalorder %s18, 0
    %p53 = por %p51, %p52
    %p54 = scmp.ne.s32.totalorder %s40, %s41
    %p55 = scmp.eq.s32.totalorder %s19, 3
    %p56 = por %p54, %p55
    %p58 = scmp.ne.s32.totalorder %s41, %s57
    %p59 = scmp.eq.s32.totalorder %s19, 0
    %p60 = por %p58, %p59
    %s62 = sadd.s32 %s61, 1
    %p65 = scmp.eq.s32.totalorder %s13, 3
    %p66 = scmp.ne.s32.totalorder %s61, %s63
    %p67 = scmp.eq.s32.totalorder %s13, 0
    %p68 = por %p66, %p67
    %p69 = scmp.ne.s32.totalorder %s61, %s63
    %p70 = scmp.eq.s32.totalorder %s18, 3
    %p71 = por %p69, %p70
    %p72 = scmp.ne.s32.totalorder %s63, %s64
    %p73 = scmp.eq.s32.totalorder %s18, 0
    %p74 = por %p72, %p73
    %p75 = scmp.ne.s32.totalorder %s63, %s64
    %p76 = scmp.eq.s32.totalorder %s19, 3
    %p77 = por %p75, %p76
    %p79 = scmp.ne.s32.totalorder %s64, %s78
    %p80 = scmp.eq.s32.totalorder %s19, 0
    %p81 = por %p79, %p80
    %s83 = sadd.s32 %s82, 1
    %p86 = scmp.eq.s32.totalorder %s13, 3
    %p87 = scmp.ne.s32.totalorder %s82, %s84
    %p88 = scmp.eq.s32.totalorder %s13, 0
    %p89 = por %p87, %p88
    %p90 = scmp.ne.s32.totalorder %s82, %s84
    %p91 = scmp.eq.s32.totalorder %s18, 3
    %p92 = por %p90, %p91
    %p93 = scmp.ne.s32.totalorder %s84, %s85
    %p94 = scmp.eq.s32.totalorder %s18, 0
    %p95 = por %p93, %p94
    %p96 = scmp.ne.s32.totalorder %s84, %s85
    %p97 = scmp.eq.s32.totalorder %s19, 3
    %p98 = por %p96, %p97
    %p100 = scmp.ne.s32.totalorder %s85, %s99
    %p101 = scmp.eq.s32.totalorder %s19, 0
    %p102 = por %p100, %p101
    %s104 = sadd.s32 %s103, 1
    %p107 = scmp.eq.s32.totalorder %s13, 3
    %p108 = scmp.ne.s32.totalorder %s103, %s105
    %p109 = scmp.eq.s32.totalorder %s13, 0
    %p110 = por %p108, %p109
    %p111 = scmp.ne.s32.totalorder %s103, %s105
    %p112 = scmp.eq.s32.totalorder %s18, 3
    %p113 = por %p111, %p112
    %p114 = scmp.ne.s32.totalorder %s105, %s106
    %p115 = scmp.eq.s32.totalorder %s18, 0
    %p116 = por %p114, %p115
    %p117 = scmp.ne.s32.totalorder %s105, %s106
    %p118 = scmp.eq.s32.totalorder %s19, 3
    %p119 = por %p117, %p118
    %p121 = scmp.ne.s32.totalorder %s106, %s120
    %p122 = scmp.eq.s32.totalorder %s19, 0
    %p123 = por %p121, %p122
    %s125 = sadd.s32 %s124, 1
    %p128 = scmp.eq.s32.totalorder %s13, 3
    %p129 = scmp.ne.s32.totalorder %s124, %s126
    %p130 = scmp.eq.s32.totalorder %s13, 0
    %p131 = por %p129, %p130
    %p132 = scmp.ne.s32.totalorder %s124, %s126
    %p133 = scmp.eq.s32.totalorder %s18, 3
    %p134 = por %p132, %p133
    %p135 = scmp.ne.s32.totalorder %s126, %s127
    %p136 = scmp.eq.s32.totalorder %s18, 0
    %p137 = por %p135, %p136
    %p138 = scmp.ne.s32.totalorder %s126, %s127
    %p139 = scmp.eq.s32.totalorder %s19, 3
    %p140 = por %p138, %p139
    %p142 = scmp.ne.s32.totalorder %s127, %s141
    %p143 = scmp.eq.s32.totalorder %s19, 0
    %p144 = por %p142, %p143
    %s146 = sadd.s32 %s145, 1
    %p149 = scmp.eq.s32.totalorder %s13, 3
    %p150 = scmp.ne.s32.totalorder %s145, %s147
    %p151 = scmp.eq.s32.totalorder %s13, 0
    %p152 = por %p150, %p151
    %p153 = scmp.ne.s32.totalorder %s145, %s147
    %p154 = scmp.eq.s32.totalorder %s18, 3
    %p155 = por %p153, %p154
    %p156 = scmp.ne.s32.totalorder %s147, %s148
    %p157 = scmp.eq.s32.totalorder %s18, 0
    %p158 = por %p156, %p157
    %p159 = scmp.ne.s32.totalorder %s147, %s148
    %p160 = scmp.eq.s32.totalorder %s19, 3
    %p161 = por %p159, %p160
    %p163 = scmp.ne.s32.totalorder %s148, %s162
    %p164 = scmp.eq.s32.totalorder %s19, 0
    %p165 = por %p163, %p164
    %s167 = sadd.s32 %s166, 1
    %p170 = scmp.eq.s32.totalorder %s13, 3
    %p171 = scmp.ne.s32.totalorder %s166, %s168
    %p172 = scmp.eq.s32.totalorder %s13, 0
    %p173 = por %p171, %p172
    %p174 = scmp.ne.s32.totalorder %s166, %s168
    %p175 = scmp.eq.s32.totalorder %s18, 3
    %p176 = por %p174, %p175
    %p177 = scmp.ne.s32.totalorder %s168, %s169
    %p178 = scmp.eq.s32.totalorder %s18, 0
    %p179 = por %p177, %p178
    %p180 = scmp.ne.s32.totalorder %s168, %s169
    %p181 = scmp.eq.s32.totalorder %s19, 3
    %p182 = por %p180, %p181
    %p184 = scmp.ne.s32.totalorder %s169, %s183
    %p185 = scmp.eq.s32.totalorder %s19, 0
    %p186 = por %p184, %p185
    %s187 = ssub.s32 %s20, %s32
    %s188 = ssub.s32 %s21, %s28
    %s189 = sor.u32 %s187, %s188
    %p190 = scmp.eq.s32.totalorder %s189, 0
    %s192 = sadd.s32 %s191, 1
    %s193 = scalar_select %p190, %s191, %s192
    %p196 = pneg %p190
    %p197 = scmp.eq.s32.totalorder %s13, 3
    %p198 = por %p196, %p197
    %p199 = scmp.ne.s32.totalorder %s191, %s194
    %p200 = scmp.eq.s32.totalorder %s13, 0
    %p201 = por %p199, %p200
    %p202 = scmp.ne.s32.totalorder %s191, %s194
    %p203 = scmp.eq.s32.totalorder %s18, 3
    %p204 = por %p202, %p203
    %p205 = scmp.ne.s32.totalorder %s194, %s195
    %p206 = scmp.eq.s32.totalorder %s18, 0
    %p207 = por %p205, %p206
    %p208 = scmp.ne.s32.totalorder %s194, %s195
    %p209 = scmp.eq.s32.totalorder %s19, 3
    %p210 = por %p208, %p209
    %p212 = scmp.ne.s32.totalorder %s195, %s211
    %p213 = scmp.eq.s32.totalorder %s19, 0
    %p214 = por %p212, %p213
    %p215 = scmp.le.s32.totalorder 1, %s13
    %p216 = scmp.lt.s32.totalorder %s13, 5
    %p217 = pnand %p215, %p216
    %p218 = pneg %p217
    // Predicated region
    $region9: #{tpu_custom_call.1} parent=5 // pred_check
      _
    $region10: #{tpu_custom_call.1} parent=5 // pred_check_branch
      %220 = sbr.rel (%p217) target = $region12
    $region11: #{tpu_custom_call.1} parent=5 // pred_region
      %s221 = ssub.s32 %s13, 1
      // Predicated region
      $region13: #{tpu_custom_call.1} parent=11 // pred_check
        %p222 = pneg %p74
      $region14: #{tpu_custom_call.1} parent=11 // pred_check_branch
        %224 = sbr.rel (%p222) target = $region16
      $region15: #{tpu_custom_call.1} parent=11 // pred_region
        _
      $region16: #{tpu_custom_call.1} parent=11 // pred_fallthru
        _
      // Predicated region
      $region17: #{tpu_custom_call.1} parent=11 // pred_check
        %p225 = pneg %p95
      $region18: #{tpu_custom_call.1} parent=11 // pred_check_branch
        %227 = sbr.rel (%p225) target = $region20
      $region19: #{tpu_custom_call.1} parent=11 // pred_region
        _
      $region20: #{tpu_custom_call.1} parent=11 // pred_fallthru
        _
      // Predicated region
      $region21: #{tpu_custom_call.1} parent=11 // pred_check
        %p228 = pneg %p116
      $region22: #{tpu_custom_call.1} parent=11 // pred_check_branch
        %230 = sbr.rel (%p228) target = $region24
      $region23: #{tpu_custom_call.1} parent=11 // pred_region
        _
      $region24: #{tpu_custom_call.1} parent=11 // pred_fallthru
        _
      // Predicated region
      $region25: #{tpu_custom_call.1} parent=11 // pred_check
        %p231 = pneg %p137
      $region26: #{tpu_custom_call.1} parent=11 // pred_check_branch
        %233 = sbr.rel (%p231) target = $region28
      $region27: #{tpu_custom_call.1} parent=11 // pred_region
        _
      $region28: #{tpu_custom_call.1} parent=11 // pred_fallthru
        _
      // Predicated region
      $region29: #{tpu_custom_call.1} parent=11 // pred_check
        %p234 = pneg %p158
      $region30: #{tpu_custom_call.1} parent=11 // pred_check_branch
        %236 = sbr.rel (%p234) target = $region32
      $region31: #{tpu_custom_call.1} parent=11 // pred_region
        _
      $region32: #{tpu_custom_call.1} parent=11 // pred_fallthru
        _
      // Predicated region
      $region33: #{tpu_custom_call.1} parent=11 // pred_check
        %p237 = pneg %p179
      $region34: #{tpu_custom_call.1} parent=11 // pred_check_branch
        %239 = sbr.rel (%p237) target = $region36
      $region35: #{tpu_custom_call.1} parent=11 // pred_region
        _
      $region36: #{tpu_custom_call.1} parent=11 // pred_fallthru
        _
    $region12: #{tpu_custom_call.1} parent=5 // pred_fallthru
      _
    %p240 = scmp.lt.s32.totalorder %s13, 4
    // Predicated region
    $region37: #{tpu_custom_call.1} parent=5 // pred_check
      %p241 = pneg %p240
    $region38: #{tpu_custom_call.1} parent=5 // pred_check_branch
      %243 = sbr.rel (%p241) target = $region40
    $region39: #{tpu_custom_call.1} parent=5 // pred_region
      // Predicated region
      $region41: #{tpu_custom_call.1} parent=39 // pred_check
        %p244 = pneg %p47
      $region42: #{tpu_custom_call.1} parent=39 // pred_check_branch
        %246 = sbr.rel (%p244) target = $region44
      $region43: #{tpu_custom_call.1} parent=39 // pred_region
        %s247 = smul.u32 4, %s21
        %p248 = scmp.lt.s32.totalorder %s20, 1
        %s249 = scalar_select %p248, %s20, 1
        %p250 = scmp.lt.s32.totalorder %s247, 7
        %s251 = scalar_select %p250, %s247, 7
        %s252 = smul.addr %s249, 8
        %s253 = sadd.s32 %s251, %s252
        %s254 = smul.addr %s253, 8
        %s255 = scalar_lea.vmem %s0, %s254
        %s256 = smul.u32 4, %s21
      $region44: #{tpu_custom_call.1} parent=39 // pred_fallthru
        _
    $region40: #{tpu_custom_call.1} parent=5 // pred_fallthru
      _
    %p257 = scmp.le.s32.totalorder 1, %s13
    %p258 = scmp.lt.s32.totalorder %s13, 5
    %p259 = pnand %p257, %p258
    %p260 = pneg %p259
    // Predicated region
    $region45: #{tpu_custom_call.1} parent=5 // pred_check
      _
    $region46: #{tpu_custom_call.1} parent=5 // pred_check_branch
      %262 = sbr.rel (%p259) target = $region48
    $region47: #{tpu_custom_call.1} parent=5 // pred_region
      %s263 = ssub.s32 %s13, 1
      %s264 = smul.u32 4, %s23
      %p265 = scmp.lt.s32.totalorder %s22, 1
      %s266 = scalar_select %p265, %s22, 1
      %p267 = scmp.lt.s32.totalorder %s264, 7
      %s268 = scalar_select %p267, %s264, 7
      %s269 = smul.addr %s266, 8
      %s270 = sadd.s32 %s268, %s269
      %s271 = smul.addr %s270, 8
      %s272 = scalar_lea.vmem %s0, %s271
      %p273 = pneg %p53
      %p274 = pneg %p50
      %p275 = pneg %p74
      %p276 = pneg %p71
      %p277 = pneg %p95
      %p278 = pneg %p92
      %p279 = pneg %p116
      %p280 = pneg %p113
      %p281 = pneg %p137
      %p282 = pneg %p134
      %p283 = pneg %p158
      %p284 = pneg %p155
      %p285 = pneg %p179
      %p286 = pneg %p176
      %p287 = pneg %p207
      %p288 = pneg %p204
      %s289 = smul.u32 4, %s23
      %p290 = scmp.lt.s32.totalorder %s22, 1
      %s291 = scalar_select %p290, %s22, 1
      %p292 = scmp.lt.s32.totalorder %s289, 7
      %s293 = scalar_select %p292, %s289, 7
      %s294 = smul.addr %s291, 8
      %s295 = sadd.s32 %s293, %s294
      %s296 = smul.addr %s295, 8
      %s297 = scalar_lea.vmem %s7, %s296
      %s298 = smul.u32 4, %s23
      %p299 = scmp.lt.s32.totalorder %s22, 1
      %s300 = scalar_select %p299, %s22, 1
      %p301 = scmp.lt.s32.totalorder %s298, 7
      %s302 = scalar_select %p301, %s298, 7
      %s303 = smul.addr %s300, 8
      %s304 = sadd.s32 %s302, %s303
      %s305 = smul.addr %s304, 8
      %s306 = scalar_lea.vmem %s0, %s305
      %s307 = smul.u32 4, %s23
      %s308 = smul.u32 4, %s23
      %p309 = scmp.lt.s32.totalorder %s22, 1
      %s310 = scalar_select %p309, %s22, 1
      %p311 = scmp.lt.s32.totalorder %s308, 7
      %s312 = scalar_select %p311, %s308, 7
      %s313 = smul.addr %s310, 8
      %s314 = sadd.s32 %s312, %s313
      %s315 = smul.addr %s314, 8
      %s316 = scalar_lea.vmem %s7, %s315
      %s317 = smul.u32 4, %s23
      %v319 = vld [vmem:[%s306] sm:$0xff]
      %v320 = vld [vmem:[%s306 + $0x8] sm:$0xff]
      %v321 = vld [vmem:[%s306 + $0x10] sm:$0xff]
      %v322 = vld [vmem:[%s306 + $0x18] sm:$0xff]
      %v323 = vld [vmem:[%s1] sm:$0x1]
      %v324 = vld [vmem:[%s1 + $0x1] sm:$0x1]
      %vm325 = vcmask 130048
      %v326 = vsel %vm325, %v319, 0.0
      %327 = vadd.xlane.f32.xlu0 %v326
      %v328 = vpop.xlane.xlu0 %327
      %v329 = vsel %vm325, %v320, 0.0
      %330 = vadd.xlane.f32.xlu0 %v329
      %v331 = vpop.xlane.xlu0 %330
      %v332 = vsel %vm325, %v321, 0.0
      %333 = vadd.xlane.f32.xlu0 %v332
      %v334 = vpop.xlane.xlu0 %333
      %v335 = vsel %vm325, %v322, 0.0
      %336 = vadd.xlane.f32.xlu0 %v335
      %v337 = vpop.xlane.xlu0 %336
      %v338 = vrcp.pop 16.0
      %v339 = vmul.f32 %v328, %v338
      %v340 = vmul.f32 %v331, %v338
      %v341 = vmul.f32 %v334, %v338
      %v342 = vmul.f32 %v337, %v338
      %v343 = vsub.f32 %v319, %v339
      %v344 = vsub.f32 %v320, %v340
      %v345 = vsub.f32 %v321, %v341
      %v346 = vsub.f32 %v322, %v342
      %v347 = vmul.f32 %v343, %v343
      %v348 = vmul.f32 %v344, %v344
      %v349 = vmul.f32 %v345, %v345
      %v350 = vmul.f32 %v346, %v346
      %v351 = vsel %vm325, %v347, 0.0
      %352 = vadd.xlane.f32.xlu0 %v351
      %v353 = vpop.xlane.xlu0 %352
      %v354 = vsel %vm325, %v348, 0.0
      %355 = vadd.xlane.f32.xlu0 %v354
      %v356 = vpop.xlane.xlu0 %355
      %v357 = vsel %vm325, %v349, 0.0
      %358 = vadd.xlane.f32.xlu0 %v357
      %v359 = vpop.xlane.xlu0 %358
      %v360 = vsel %vm325, %v350, 0.0
      %361 = vadd.xlane.f32.xlu0 %v360
      %v362 = vpop.xlane.xlu0 %361
      %v363 = vmul.f32 %v353, %v338
      %v364 = vmul.f32 %v356, %v338
      %v365 = vmul.f32 %v359, %v338
      %v366 = vmul.f32 %v362, %v338
      %v367 = vadd.f32 %v363, 1e-05
      %v368 = vadd.f32 %v364, 1e-05
      %v369 = vadd.f32 %v365, 1e-05
      %v370 = vadd.f32 %v366, 1e-05
      %v371 = vrsqrt.pop %v367
      %v372 = vrsqrt.pop %v368
      %v373 = vrsqrt.pop %v369
      %v374 = vrsqrt.pop %v370
      %v375 = vmul.f32 %v343, %v371
      %v376 = vmul.f32 %v344, %v372
      %v377 = vmul.f32 %v345, %v373
      %v378 = vmul.f32 %v346, %v374
      %v379 = vlaneseq
      %v380 = vshrl.u32 %v379, 7
      %v381 = vsub.s32 0, %v380
      %v382 = vrot.slane %v323, %v381
      %v383 = vmul.f32 %v375, %v382
      %v384 = vmul.f32 %v376, %v382
      %v385 = vmul.f32 %v377, %v382
      %v386 = vmul.f32 %v378, %v382
      %v387 = vlaneseq
      %v388 = vshrl.u32 %v387, 7
      %v389 = vsub.s32 0, %v388
      %v390 = vrot.slane %v324, %v389
      %v391 = vadd.f32 %v383, %v390
      %v392 = vadd.f32 %v384, %v390
      %v393 = vadd.f32 %v385, %v390
      %v394 = vadd.f32 %v386, %v390
      %v395 = vpack.c.bf16 %v392, %v391
      %v396 = vpack.c.bf16 %v394, %v393
      %v397 = vld [vmem:[%s2] sm:$0xf]
      %v398 = vld [vmem:[%s2 + $0x4] sm:$0xf]
      %v401 = vunpack.c.l.b16 %v397
      %v402 = vunpack.c.l.b16 %v398
      %v403 = vpack.c.b16 %v402, %v401
      %v406 = vsel %vm325, %v395, 0
      %v409 = vsel %vm325, %v396, 0
      %411 = vmatprep.subr.bf16.mxu0 0
      %412 = vmatpush1.bf16.msra.mxu0 %v403
      %413 = vmatprep.subr.bf16.mxu0 0
      %414 = vmatpush1.bf16.msra.mxu0 0
      %415 = vmatprep.subr.bf16.mxu0 0
      %416 = vmatpush1.bf16.msra.mxu0 0
      %417 = vmatprep.subr.bf16.mxu0 0
      %418 = vmatpush1.bf16.msra.mxu0 0
      %419 = vmatprep.subr.bf16.mxu0 0
      %420 = vmatpush1.bf16.msra.mxu0 0
      %421 = vmatprep.subr.bf16.mxu0 0
      %422 = vmatpush1.bf16.msra.mxu0 0
      %423 = vmatprep.subr.bf16.mxu0 0
      %424 = vmatpush1.bf16.msra.mxu0 0
      %425 = vmatprep.subr.bf16.mxu0 0
      %426 = vmatpush1.bf16.msra.mxu0 0
      %427 = vmatprep.subr.bf16.mxu0 0
      %428 = vmatpush1.bf16.msra.mxu0 0
      %429 = vmatprep.subr.bf16.mxu0 0
      %430 = vmatpush1.bf16.msra.mxu0 0
      %431 = vmatprep.subr.bf16.mxu0 0
      %432 = vmatpush1.bf16.msra.mxu0 0
      %433 = vmatprep.subr.bf16.mxu0 0
      %434 = vmatpush1.bf16.msra.mxu0 0
      %435 = vmatprep.subr.bf16.mxu0 0
      %436 = vmatpush1.bf16.msra.mxu0 0
      %437 = vmatprep.subr.bf16.mxu0 0
      %438 = vmatpush1.bf16.msra.mxu0 0
      %439 = vmatprep.subr.bf16.mxu0 0
      %440 = vmatpush1.bf16.msra.mxu0 0
      %441 = vmatprep.subr.bf16.mxu0 0
      %442 = vmatpush1.bf16.msra.mxu0 0
      %443 = vmatprep.mubr.bf16.mxu0 0
      %444 = vmatmul.mubr.bf16.gmra.mrb[0].mxu0 %v406
      %v445 = vpop.f32.mrb[0].mxu0
      %v446 = vadd.f32 0.0, %v445
      %v447 = vpop.f32.mrb[0].mxu0
      %v448 = vpop.f32.mrb[0].mxu0
      %v449 = vadd.f32 0.0, %v448
      %v450 = vpop.f32.mrb[0].mxu0
      %451 = vmatprep.mubr.bf16.mxu0 0
      %452 = vmatmul.mubr.bf16.gmra.mrb[0].mxu0 %v409
      %v453 = vpop.f32.mrb[0].mxu0
      %v454 = vadd.f32 0.0, %v453
      %v455 = vpop.f32.mrb[0].mxu0
      %v456 = vpop.f32.mrb[0].mxu0
      %v457 = vadd.f32 0.0, %v456
      %v458 = vpop.f32.mrb[0].mxu0
      %459 = vdwg.mxu0
      %464 = vrot.lane.b32.xlu0 %v446, 96
      %v465 = vpop.permute.xlu0 %464
      %466 = vrot.lane.b32.xlu0 %v449, 96
      %v467 = vpop.permute.xlu0 %466
      %468 = vrot.lane.b32.xlu0 %v454, 96
      %v469 = vpop.permute.xlu0 %468
      %470 = vrot.lane.b32.xlu0 %v457, 96
      %v471 = vpop.permute.xlu0 %470
      %vm476 = vcmask 261120
      %477 = vst.msk [vmem:[#allocation5] sm:$0xff] %vm476, %v465
      %478 = vst.msk [vmem:[#allocation5 + $0x8] sm:$0xff] %vm476, %v467
      %479 = vst.msk [vmem:[#allocation5 + $0x10] sm:$0xff] %vm476, %v469
      %480 = vst.msk [vmem:[#allocation5 + $0x18] sm:$0xff] %vm476, %v471
      %p481 = scmp.eq.s32.totalorder %s23, 0
      // Predicated region
      $region49: #{tpu_custom_call.1} parent=47 // pred_check
        %p482 = pneg %p481
      $region50: #{tpu_custom_call.1} parent=47 // pred_check_branch
        %484 = sbr.rel (%p482) target = $region52
      $region51: #{tpu_custom_call.1} parent=47 // pred_region
        %vm485 = vcmask 256000
        %486 = vst.msk [vmem:[#allocation2 + $0x5] sm:$0x7] %vm485, 0.0
      $region52: #{tpu_custom_call.1} parent=47 // pred_fallthru
        _
      %p487 = scmp.gt.s32.totalorder %s23, 0
      // Predicated region
      $region53: #{tpu_custom_call.1} parent=47 // pred_check
        %p488 = pneg %p487
      $region54: #{tpu_custom_call.1} parent=47 // pred_check_branch
        %490 = sbr.rel (%p488) target = $region56
      $region55: #{tpu_custom_call.1} parent=47 // pred_region
        %v491 = vld [vmem:[#allocation2 + $0x25] sm:$0x7]
        %vm492 = vcmask 256000
        %493 = vst.msk [vmem:[#allocation2 + $0x5] sm:$0x7] %vm492, %v491
      $region56: #{tpu_custom_call.1} parent=47 // pred_fallthru
        _
      %494 = vst.msk [vmem:[#allocation2 + $0x8] sm:$0xff] %vm476, %v446
      %495 = vst.msk [vmem:[#allocation2 + $0x10] sm:$0xff] %vm476, %v449
      %496 = vst.msk [vmem:[#allocation2 + $0x18] sm:$0xff] %vm476, %v454
      %497 = vst.msk [vmem:[#allocation2 + $0x20] sm:$0xff] %vm476, %v457
      %v498 = vld [vmem:[%s3 + $0x10] sm:$0xf]
      %v499 = vld [vmem:[#allocation2 + $0x5] sm:$0xff]
      %v500 = vld [vmem:[#allocation2 + $0xd] sm:$0xff]
      %v501 = vld [vmem:[#allocation2 + $0x15] sm:$0xff]
      %v502 = vld [vmem:[#allocation2 + $0x1d] sm:$0xff]
      %v503 = vlaneseq
      %v504 = vshrl.u32 %v503, 7
      %v505 = vsub.s32 0, %v504
      %v506 = vrot.slane %v498, %v505
      %v507 = vmul.f32 %v499, %v506
      %v508 = vmul.f32 %v500, %v506
      %v509 = vmul.f32 %v501, %v506
      %v510 = vmul.f32 %v502, %v506
      %v511 = vadd.f32 %v507, 0.0
      %v512 = vadd.f32 %v508, 0.0
      %v513 = vadd.f32 %v509, 0.0
      %v514 = vadd.f32 %v510, 0.0
      %v515 = vld [vmem:[#allocation2 + $0x6] sm:$0xff]
      %v516 = vld [vmem:[#allocation2 + $0xe] sm:$0xff]
      %v517 = vld [vmem:[#allocation2 + $0x16] sm:$0xff]
      %v518 = vld [vmem:[#allocation2 + $0x1e] sm:$0xff]
      %v519 = vlaneseq
      %v520 = vshrl.u32 %v519, 7
      %v521 = vsub.s32 1, %v520
      %v522 = vrot.slane %v498, %v521
      %v523 = vmul.f32 %v515, %v522
      %v524 = vmul.f32 %v516, %v522
      %v525 = vmul.f32 %v517, %v522
      %v526 = vmul.f32 %v518, %v522
      %v527 = vadd.f32 %v511, %v523
      %v528 = vadd.f32 %v512, %v524
      %v529 = vadd.f32 %v513, %v525
      %v530 = vadd.f32 %v514, %v526
      %v531 = vld [vmem:[#allocation2 + $0x7] sm:$0xff]
      %v532 = vld [vmem:[#allocation2 + $0xf] sm:$0xff]
      %v533 = vld [vmem:[#allocation2 + $0x17] sm:$0xff]
      %v534 = vld [vmem:[#allocation2 + $0x1f] sm:$0xff]
      %v535 = vlaneseq
      %v536 = vshrl.u32 %v535, 7
      %v537 = vsub.s32 2, %v536
      %v538 = vrot.slane %v498, %v537
      %v539 = vmul.f32 %v531, %v538
      %v540 = vmul.f32 %v532, %v538
      %v541 = vmul.f32 %v533, %v538
      %v542 = vmul.f32 %v534, %v538
      %v543 = vadd.f32 %v527, %v539
      %v544 = vadd.f32 %v528, %v540
      %v545 = vadd.f32 %v529, %v541
      %v546 = vadd.f32 %v530, %v542
      %v547 = vld [vmem:[#allocation2 + $0x8] sm:$0xff]
      %v548 = vld [vmem:[#allocation2 + $0x10] sm:$0xff]
      %v549 = vld [vmem:[#allocation2 + $0x18] sm:$0xff]
      %v550 = vld [vmem:[#allocation2 + $0x20] sm:$0xff]
      %v551 = vlaneseq
      %v552 = vshrl.u32 %v551, 7
      %v553 = vsub.s32 3, %v552
      %v554 = vrot.slane %v498, %v553
      %v555 = vmul.f32 %v547, %v554
      %v556 = vmul.f32 %v548, %v554
      %v557 = vmul.f32 %v549, %v554
      %v558 = vmul.f32 %v550, %v554
      %v559 = vadd.f32 %v543, %v555
      %v560 = vadd.f32 %v544, %v556
      %v561 = vadd.f32 %v545, %v557
      %v562 = vadd.f32 %v546, %v558
      %v563 = vld [vmem:[%s3 + $0x14] sm:$0x1]
      %v564 = vlaneseq
      %v565 = vshrl.u32 %v564, 7
      %v566 = vsub.s32 0, %v565
      %v567 = vrot.slane %v563, %v566
      %v568 = vadd.f32 %v559, %v567
      %v569 = vadd.f32 %v560, %v567
      %v570 = vadd.f32 %v561, %v567
      %v571 = vadd.f32 %v562, %v567
      %v572 = vsub.f32 0.0, %v568
      %v573 = vsub.f32 0.0, %v569
      %v574 = vsub.f32 0.0, %v570
      %v575 = vsub.f32 0.0, %v571
      %v576 = vmul.f32 %v572, 1.442695
      %v577 = vpow.pop %v576
      %v578 = vmul.f32 %v573, 1.442695
      %v579 = vpow.pop %v578
      %v580 = vmul.f32 %v574, 1.442695
      %v581 = vpow.pop %v580
      %v582 = vmul.f32 %v575, 1.442695
      %v583 = vpow.pop %v582
      %v584 = vadd.f32 %v577, 1.0
      %v585 = vadd.f32 %v579, 1.0
      %v586 = vadd.f32 %v581, 1.0
      %v587 = vadd.f32 %v583, 1.0
      %v588 = vrcp.pop %v584
      %v589 = vmul.f32 1.0, %v588
      %v590 = vrcp.pop %v585
      %v591 = vmul.f32 1.0, %v590
      %v592 = vrcp.pop %v586
      %v593 = vmul.f32 1.0, %v592
      %v594 = vrcp.pop %v587
      %v595 = vmul.f32 1.0, %v594
      %v596 = vmul.f32 %v568, %v589
      %v597 = vmul.f32 %v569, %v591
      %v598 = vmul.f32 %v570, %v593
      %v599 = vmul.f32 %v571, %v595
      %600 = vst.msk [vmem:[#allocation4] sm:$0xff] %vm476, %v596
      %601 = vst.msk [vmem:[#allocation4 + $0x8] sm:$0xff] %vm476, %v597
      %602 = vst.msk [vmem:[#allocation4 + $0x10] sm:$0xff] %vm476, %v598
      %603 = vst.msk [vmem:[#allocation4 + $0x18] sm:$0xff] %vm476, %v599
      %v604 = vpack.c.bf16 %v597, %v596
      %v605 = vpack.c.bf16 %v599, %v598
      %v606 = vld [vmem:[%s4] sm:$0xf]
      %v607 = vld [vmem:[%s4 + $0x4] sm:$0xf]
      %v608 = vld [vmem:[%s4 + $0x8] sm:$0xf]
      %v609 = vld [vmem:[%s4 + $0xc] sm:$0xf]
      %v614 = vunpack.c.l.b16 %v606
      %v615 = vunpack.c.l.b16 %v607
      %v616 = vunpack.c.l.b16 %v608
      %v617 = vunpack.c.l.b16 %v609
      %v618 = vpack.c.b16 %v615, %v614
      %v619 = vpack.c.b16 %v617, %v616
      %v623 = vsel %vm476, %v604, 0
      %v626 = vsel %vm476, %v605, 0
      %628 = vmatprep.subr.bf16.mxu0 0
      %629 = vmatpush1.bf16.msra.mxu0 %v618
      %630 = vmatprep.subr.bf16.mxu0 0
      %631 = vmatpush1.bf16.msra.mxu0 %v619
      %632 = vmatprep.subr.bf16.mxu0 0
      %633 = vmatpush1.bf16.msra.mxu0 0
      %634 = vmatprep.subr.bf16.mxu0 0
      %635 = vmatpush1.bf16.msra.mxu0 0
      %636 = vmatprep.subr.bf16.mxu0 0
      %637 = vmatpush1.bf16.msra.mxu0 0
      %638 = vmatprep.subr.bf16.mxu0 0
      %639 = vmatpush1.bf16.msra.mxu0 0
      %640 = vmatprep.subr.bf16.mxu0 0
      %641 = vmatpush1.bf16.msra.mxu0 0
      %642 = vmatprep.subr.bf16.mxu0 0
      %643 = vmatpush1.bf16.msra.mxu0 0
      %644 = vmatprep.subr.bf16.mxu0 0
      %645 = vmatpush1.bf16.msra.mxu0 0
      %646 = vmatprep.subr.bf16.mxu0 0
      %647 = vmatpush1.bf16.msra.mxu0 0
      %648 = vmatprep.subr.bf16.mxu0 0
      %649 = vmatpush1.bf16.msra.mxu0 0
      %650 = vmatprep.subr.bf16.mxu0 0
      %651 = vmatpush1.bf16.msra.mxu0 0
      %652 = vmatprep.subr.bf16.mxu0 0
      %653 = vmatpush1.bf16.msra.mxu0 0
      %654 = vmatprep.subr.bf16.mxu0 0
      %655 = vmatpush1.bf16.msra.mxu0 0
      %656 = vmatprep.subr.bf16.mxu0 0
      %657 = vmatpush1.bf16.msra.mxu0 0
      %658 = vmatprep.subr.bf16.mxu0 0
      %659 = vmatpush1.bf16.msra.mxu0 0
      %660 = vmatprep.mubr.bf16.mxu0 0
      %661 = vmatmul.mubr.bf16.gmra.mrb[0].mxu0 %v623
      %v662 = vpop.f32.mrb[0].mxu0
      %v663 = vadd.f32 0.0, %v662
      %v664 = vpop.f32.mrb[0].mxu0
      %v665 = vpop.f32.mrb[0].mxu0
      %v666 = vadd.f32 0.0, %v665
      %v667 = vpop.f32.mrb[0].mxu0
      %668 = vmatprep.mubr.bf16.mxu0 0
      %669 = vmatmul.mubr.bf16.gmra.mrb[0].mxu0 %v626
      %v670 = vpop.f32.mrb[0].mxu0
      %v671 = vadd.f32 0.0, %v670
      %v672 = vpop.f32.mrb[0].mxu0
      %v673 = vpop.f32.mrb[0].mxu0
      %v674 = vadd.f32 0.0, %v673
      %v675 = vpop.f32.mrb[0].mxu0
      %676 = vdwg.mxu0
      %v677 = vpack.c.bf16 %v666, %v663
      %v678 = vpack.c.bf16 %v674, %v671
      %v679 = vld [vmem:[%s5] sm:$0xf]
      %v680 = vld [vmem:[%s3 + $0x15] sm:$0x1]
      %v681 = vlaneseq
      %v682 = vshrl.u32 %v681, 7
      %v683 = vsub.s32 0, %v682
      %v684 = vrot.slane %v680, %v683
      %vm685 = vcmask 64512
      %v687 = vsel %vm685, %v677, 0
      %v690 = vsel %vm685, %v678, 0
      %vm692 = vcmask 1043456
      %v694 = vsel %vm692, %v679, 0
      %696 = vmatprep.subr.bf16.mxu0 0
      %697 = vmatpush1.bf16.msra.mxu0 %v694
      %698 = vmatprep.subr.bf16.mxu0 0
      %699 = vmatpush1.bf16.msra.mxu0 0
      %700 = vmatprep.subr.bf16.mxu0 0
      %701 = vmatpush1.bf16.msra.mxu0 0
      %702 = vmatprep.subr.bf16.mxu0 0
      %703 = vmatpush1.bf16.msra.mxu0 0
      %704 = vmatprep.subr.bf16.mxu0 0
      %705 = vmatpush1.bf16.msra.mxu0 0
      %706 = vmatprep.subr.bf16.mxu0 0
      %707 = vmatpush1.bf16.msra.mxu0 0
      %708 = vmatprep.subr.bf16.mxu0 0
      %709 = vmatpush1.bf16.msra.mxu0 0
      %710 = vmatprep.subr.bf16.mxu0 0
      %711 = vmatpush1.bf16.msra.mxu0 0
      %712 = vmatprep.subr.bf16.mxu0 0
      %713 = vmatpush1.bf16.msra.mxu0 0
      %714 = vmatprep.subr.bf16.mxu0 0
      %715 = vmatpush1.bf16.msra.mxu0 0
      %716 = vmatprep.subr.bf16.mxu0 0
      %717 = vmatpush1.bf16.msra.mxu0 0
      %718 = vmatprep.subr.bf16.mxu0 0
      %719 = vmatpush1.bf16.msra.mxu0 0
      %720 = vmatprep.subr.bf16.mxu0 0
      %721 = vmatpush1.bf16.msra.mxu0 0
      %722 = vmatprep.subr.bf16.mxu0 0
      %723 = vmatpush1.bf16.msra.mxu0 0
      %724 = vmatprep.subr.bf16.mxu0 0
      %725 = vmatpush1.bf16.msra.mxu0 0
      %726 = vmatprep.subr.bf16.mxu0 0
      %727 = vmatpush1.bf16.msra.mxu0 0
      %728 = vmatprep.mubr.bf16.mxu0 0
      %729 = vmatmul.mubr.bf16.gmra.mrb[0].mxu0 %v687
      %v730 = vpop.f32.mrb[0].mxu0
      %v731 = vadd.f32 %v684, %v730
      %v732 = vpop.f32.mrb[0].mxu0
      %v733 = vpop.f32.mrb[0].mxu0
      %v734 = vadd.f32 %v684, %v733
      %v735 = vpop.f32.mrb[0].mxu0
      %736 = vmatprep.mubr.bf16.mxu0 0
      %737 = vmatmul.mubr.bf16.gmra.mrb[0].mxu0 %v690
      %v738 = vpop.f32.mrb[0].mxu0
      %v739 = vadd.f32 %v684, %v738
      %v740 = vpop.f32.mrb[0].mxu0
      %v741 = vpop.f32.mrb[0].mxu0
      %v742 = vadd.f32 %v684, %v741
      %v743 = vpop.f32.mrb[0].mxu0
      %744 = vdwg.mxu0
      %v745 = vmax.f32 %v731, 0.0
      %v746 = vmax.f32 %v734, 0.0
      %v747 = vmax.f32 %v739, 0.0
      %v748 = vmax.f32 %v742, 0.0
      %v749 = vand.u32 2147483647, %v731
      %v750 = vand.u32 2147483647, %v734
      %v751 = vand.u32 2147483647, %v739
      %v752 = vand.u32 2147483647, %v742
      %v753 = vsub.f32 0.0, %v749
      %v754 = vsub.f32 0.0, %v750
      %v755 = vsub.f32 0.0, %v751
      %v756 = vsub.f32 0.0, %v752
      %v757 = vmul.f32 %v753, 1.442695
      %v758 = vpow.pop %v757
      %v759 = vmul.f32 %v754, 1.442695
      %v760 = vpow.pop %v759
      %v761 = vmul.f32 %v755, 1.442695
      %v762 = vpow.pop %v761
      %v763 = vmul.f32 %v756, 1.442695
      %v764 = vpow.pop %v763
      %v765 = vadd.f32 %v758, 1.0
      %v766 = vadd.f32 %v760, 1.0
      %v767 = vadd.f32 %v762, 1.0
      %v768 = vadd.f32 %v764, 1.0
      %v769 = vlog2.pop %v765
      %v770 = vmul.f32 %v769, 0.6931472
      %v771 = vlog2.pop %v766
      %v772 = vmul.f32 %v771, 0.6931472
      %v773 = vlog2.pop %v767
      %v774 = vmul.f32 %v773, 0.6931472
      %v775 = vlog2.pop %v768
      %v776 = vmul.f32 %v775, 0.6931472
      %v777 = vadd.f32 %v745, %v770
      %v778 = vadd.f32 %v746, %v772
      %v779 = vadd.f32 %v747, %v774
      %v780 = vadd.f32 %v748, %v776
      %781 = vst.msk [vmem:[#allocation3] sm:$0xff] %vm476, %v777
      %782 = vst.msk [vmem:[#allocation3 + $0x8] sm:$0xff] %vm476, %v778
      %783 = vst.msk [vmem:[#allocation3 + $0x10] sm:$0xff] %vm476, %v779
      %784 = vst.msk [vmem:[#allocation3 + $0x18] sm:$0xff] %vm476, %v780
      %789 = vrot.lane.b32.xlu0 %v663, 120
      %v790 = vpop.permute.xlu0 %789
      %791 = vrot.lane.b32.xlu0 %v666, 120
      %v792 = vpop.permute.xlu0 %791
      %793 = vrot.lane.b32.xlu0 %v671, 120
      %v794 = vpop.permute.xlu0 %793
      %795 = vrot.lane.b32.xlu0 %v674, 120
      %v796 = vpop.permute.xlu0 %795
      %801 = vst.msk [vmem:[#allocation6] sm:$0xff] %vm476, %v790
      %802 = vst.msk [vmem:[#allocation6 + $0x8] sm:$0xff] %vm476, %v792
      %803 = vst.msk [vmem:[#allocation6 + $0x10] sm:$0xff] %vm476, %v794
      %804 = vst.msk [vmem:[#allocation6 + $0x18] sm:$0xff] %vm476, %v796
      // Predicated region
      $region57: #{tpu_custom_call.1} parent=47 // pred_check
        %p805 = pneg %p481
      $region58: #{tpu_custom_call.1} parent=47 // pred_check_branch
        %807 = sbr.rel (%p805) target = $region60
      $region59: #{tpu_custom_call.1} parent=47 // pred_region
        %808 = vst.msk [vmem:[#allocation8] sm:$0xff] %vm476, 0.0
        %809 = vst.msk [vmem:[#allocation8 + $0x8] sm:$0xff] %vm476, 0.0
      $region60: #{tpu_custom_call.1} parent=47 // pred_fallthru
        _
      %v810 = vld [vmem:[#allocation8] sm:$0xff]
      %v811 = vld [vmem:[#allocation8 + $0x8] sm:$0xff]
      loop: start=0, step=1, limit=2
      $region61: #{tpu_custom_call.1} parent=47 // loop_pre_header
        _
      $region62: #{tpu_custom_call.1} parent=47 // loop_header
        %s813 = sphi 0, %s817
        %p814 = scmp.ge.s32.totalorder %s813, 2
        %v818 = vphi %v810, %v1719
        %v819 = vphi %v811, %v1720
      $region63: #{tpu_custom_call.1} parent=47 // loop_header_branch
        %816 = sbr.rel (%p814) target = $region67
      $region64: #{tpu_custom_call.1} parent=47 // loop_body
        %s820 = smul.u32 %s813, 16
        %v821 = vld [vmem:[%s3] sm:$0xff]
        %v822 = vld [vmem:[%s3 + $0x8] sm:$0xff]
        %s823 = scalar_lea.vmem [#allocation6], %s820
        %v824 = vld [vmem:[%s823] sm:$0xff]
        %v825 = vld [vmem:[%s823 + $0x8] sm:$0xff]
        %826 = vxpose.xlu0.b32.start [1/16] %v824, 128
        %827 = vxpose.xlu0.b32.cont [2/16] %v825, 128
        %828 = vxpose.xlu0.b32.cont [3/16] 0.0, 128
        %829 = vxpose.xlu0.b32.cont [4/16] 0.0, 128
        %830 = vxpose.xlu0.b32.cont [5/16] 0.0, 128
        %831 = vxpose.xlu0.b32.cont [6/16] 0.0, 128
        %832 = vxpose.xlu0.b32.cont [7/16] 0.0, 128
        %833 = vxpose.xlu0.b32.cont [8/16] 0.0, 128
        %834 = vxpose.xlu0.b32.cont [9/16] 0.0, 128
        %835 = vxpose.xlu0.b32.cont [10/16] 0.0, 128
        %836 = vxpose.xlu0.b32.cont [11/16] 0.0, 128
        %837 = vxpose.xlu0.b32.cont [12/16] 0.0, 128
        %838 = vxpose.xlu0.b32.cont [13/16] 0.0, 128
        %839 = vxpose.xlu0.b32.cont [14/16] 0.0, 128
        %840 = vxpose.xlu0.b32.cont [15/16] 0.0, 128
        %841 = vxpose.xlu0.b32.end [16/16] 0.0, 128
        %v842 = vpop.trf.xlu0
        %v843 = vpop.trf.xlu0
        %v844 = vpop.trf.xlu0
        %v845 = vpop.trf.xlu0
        %v846 = vpop.trf.xlu0
        %v847 = vpop.trf.xlu0
        %v848 = vpop.trf.xlu0
        %v849 = vpop.trf.xlu0
        %v850 = vpop.trf.xlu0
        %v851 = vpop.trf.xlu0
        %v852 = vpop.trf.xlu0
        %v853 = vpop.trf.xlu0
        %v854 = vpop.trf.xlu0
        %v855 = vpop.trf.xlu0
        %v856 = vpop.trf.xlu0
        %v857 = vpop.trf.xlu0
        %s858 = scalar_lea.vmem [#allocation3], %s820
        %v859 = vld [vmem:[%s858] sm:$0x1]
        %s860 = scalar_lea.vmem [#allocation4], %s820
        %v861 = vld [vmem:[%s860] sm:$0x1]
        %v862 = vmul.f32 %v859, %v861
        %v863 = vlaneseq
        %v864 = vshrl.u32 %v863, 7
        %v865 = vsub.s32 0, %v864
        %v866 = vrot.slane %v859, %v865
        %v867 = vmul.f32 %v866, %v821
        %v868 = vmul.f32 %v866, %v822
        %v869 = vmul.f32 %v867, 1.442695
        %v870 = vpow.pop %v869
        %v871 = vmul.f32 %v868, 1.442695
        %v872 = vpow.pop %v871
        %v873 = vmul.f32 %v870, %v818
        %v874 = vmul.f32 %v872, %v819
        %876 = vset.pattern.permute.xlu0 0
        %877 = vperm.xlu0 %876, %v842
        %v878 = vpop.permute.xlu0 %877
        %881 = vset.pattern.permute.xlu0 0
        %882 = vperm.xlu0 %881, %v843
        %v883 = vpop.permute.xlu0 %882
        %v885 = vlaneseq
        %v886 = vshrl.u32 %v885, 7
        %v887 = vsub.s32 0, %v886
        %v888 = vrot.slane %v862, %v887
        %v889 = vmul.f32 %v878, %v888
        %v890 = vmul.f32 %v883, %v888
        %v891 = vadd.f32 %v873, %v889
        %v892 = vadd.f32 %v874, %v890
        %894 = vset.pattern.permute.xlu0 0
        %895 = vperm.xlu0 %894, %v844
        %v896 = vpop.permute.xlu0 %895
        %899 = vset.pattern.permute.xlu0 0
        %900 = vperm.xlu0 %899, %v845
        %v901 = vpop.permute.xlu0 %900
        %v903 = vmul.f32 %v896, %v891
        %v904 = vmul.f32 %v901, %v892
        %v905 = vsel %vm476, %v903, 0.0
        %v906 = vsel %vm476, %v904, 0.0
        %v907 = vadd.f32 %v905, %v906
        %v908 = vrot.slane %v907, 4
        %v909 = vadd.f32 %v907, %v908
        %v910 = vrot.slane %v909, 2
        %v911 = vadd.f32 %v909, %v910
        %v912 = vrot.slane %v911, 1
        %v913 = vadd.f32 %v911, %v912
        %s914 = scalar_lea.vmem [#allocation7], %s820
        %vm915 = vcmask 253952
        %916 = vst.msk [vmem:[%s914] sm:$0x1] %vm915, %v913
        %s917 = sadd.s32 %s820, 1
        %s918 = scalar_lea.vmem [#allocation3], %s917
        %v919 = vld [vmem:[%s918] sm:$0x1]
        %s920 = scalar_lea.vmem [#allocation4], %s917
        %v921 = vld [vmem:[%s920] sm:$0x1]
        %v922 = vmul.f32 %v919, %v921
        %v923 = vlaneseq
        %v924 = vshrl.u32 %v923, 7
        %v925 = vsub.s32 0, %v924
        %v926 = vrot.slane %v919, %v925
        %v927 = vmul.f32 %v926, %v821
        %v928 = vmul.f32 %v926, %v822
        %v929 = vmul.f32 %v927, 1.442695
        %v930 = vpow.pop %v929
        %v931 = vmul.f32 %v928, 1.442695
        %v932 = vpow.pop %v931
        %v933 = vmul.f32 %v930, %v891
        %v934 = vmul.f32 %v932, %v892
        %935 = vset.pattern.permute.xlu0 1
        %936 = vperm.xlu0 %935, %v842
        %v937 = vpop.permute.xlu0 %936
        %939 = vset.pattern.permute.xlu0 1
        %940 = vperm.xlu0 %939, %v843
        %v941 = vpop.permute.xlu0 %940
        %v943 = vlaneseq
        %v944 = vshrl.u32 %v943, 7
        %v945 = vsub.s32 0, %v944
        %v946 = vrot.slane %v922, %v945
        %v947 = vmul.f32 %v937, %v946
        %v948 = vmul.f32 %v941, %v946
        %v949 = vadd.f32 %v933, %v947
        %v950 = vadd.f32 %v934, %v948
        %951 = vset.pattern.permute.xlu0 1
        %952 = vperm.xlu0 %951, %v844
        %v953 = vpop.permute.xlu0 %952
        %955 = vset.pattern.permute.xlu0 1
        %956 = vperm.xlu0 %955, %v845
        %v957 = vpop.permute.xlu0 %956
        %v959 = vmul.f32 %v953, %v949
        %v960 = vmul.f32 %v957, %v950
        %v961 = vsel %vm476, %v959, 0.0
        %v962 = vsel %vm476, %v960, 0.0
        %v963 = vadd.f32 %v961, %v962
        %v964 = vrot.slane %v963, 4
        %v965 = vadd.f32 %v963, %v964
        %v966 = vrot.slane %v965, 2
        %v967 = vadd.f32 %v965, %v966
        %v968 = vrot.slane %v967, 1
        %v969 = vadd.f32 %v967, %v968
        %s970 = scalar_lea.vmem [#allocation7], %s917
        %971 = vst.msk [vmem:[%s970] sm:$0x1] %vm915, %v969
        %s972 = sadd.s32 %s820, 2
        %s973 = scalar_lea.vmem [#allocation3], %s972
        %v974 = vld [vmem:[%s973] sm:$0x1]
        %s975 = scalar_lea.vmem [#allocation4], %s972
        %v976 = vld [vmem:[%s975] sm:$0x1]
        %v977 = vmul.f32 %v974, %v976
        %v978 = vlaneseq
        %v979 = vshrl.u32 %v978, 7
        %v980 = vsub.s32 0, %v979
        %v981 = vrot.slane %v974, %v980
        %v982 = vmul.f32 %v981, %v821
        %v983 = vmul.f32 %v981, %v822
        %v984 = vmul.f32 %v982, 1.442695
        %v985 = vpow.pop %v984
        %v986 = vmul.f32 %v983, 1.442695
        %v987 = vpow.pop %v986
        %v988 = vmul.f32 %v985, %v949
        %v989 = vmul.f32 %v987, %v950
        %990 = vset.pattern.permute.xlu0 2
        %991 = vperm.xlu0 %990, %v842
        %v992 = vpop.permute.xlu0 %991
        %994 = vset.pattern.permute.xlu0 2
        %995 = vperm.xlu0 %994, %v843
        %v996 = vpop.permute.xlu0 %995
        %v998 = vlaneseq
        %v999 = vshrl.u32 %v998, 7
        %v1000 = vsub.s32 0, %v999
        %v1001 = vrot.slane %v977, %v1000
        %v1002 = vmul.f32 %v992, %v1001
        %v1003 = vmul.f32 %v996, %v1001
        %v1004 = vadd.f32 %v988, %v1002
        %v1005 = vadd.f32 %v989, %v1003
        %1006 = vset.pattern.permute.xlu0 2
        %1007 = vperm.xlu0 %1006, %v844
        %v1008 = vpop.permute.xlu0 %1007
        %1010 = vset.pattern.permute.xlu0 2
        %1011 = vperm.xlu0 %1010, %v845
        %v1012 = vpop.permute.xlu0 %1011
        %v1014 = vmul.f32 %v1008, %v1004
        %v1015 = vmul.f32 %v1012, %v1005
        %v1016 = vsel %vm476, %v1014, 0.0
        %v1017 = vsel %vm476, %v1015, 0.0
        %v1018 = vadd.f32 %v1016, %v1017
        %v1019 = vrot.slane %v1018, 4
        %v1020 = vadd.f32 %v1018, %v1019
        %v1021 = vrot.slane %v1020, 2
        %v1022 = vadd.f32 %v1020, %v1021
        %v1023 = vrot.slane %v1022, 1
        %v1024 = vadd.f32 %v1022, %v1023
        %s1025 = scalar_lea.vmem [#allocation7], %s972
        %1026 = vst.msk [vmem:[%s1025] sm:$0x1] %vm915, %v1024
        %s1027 = sadd.s32 %s820, 3
        %s1028 = scalar_lea.vmem [#allocation3], %s1027
        %v1029 = vld [vmem:[%s1028] sm:$0x1]
        %s1030 = scalar_lea.vmem [#allocation4], %s1027
        %v1031 = vld [vmem:[%s1030] sm:$0x1]
        %v1032 = vmul.f32 %v1029, %v1031
        %v1033 = vlaneseq
        %v1034 = vshrl.u32 %v1033, 7
        %v1035 = vsub.s32 0, %v1034
        %v1036 = vrot.slane %v1029, %v1035
        %v1037 = vmul.f32 %v1036, %v821
        %v1038 = vmul.f32 %v1036, %v822
        %v1039 = vmul.f32 %v1037, 1.442695
        %v1040 = vpow.pop %v1039
        %v1041 = vmul.f32 %v1038, 1.442695
        %v1042 = vpow.pop %v1041
        %v1043 = vmul.f32 %v1040, %v1004
        %v1044 = vmul.f32 %v1042, %v1005
        %1045 = vset.pattern.permute.xlu0 3
        %1046 = vperm.xlu0 %1045, %v842
        %v1047 = vpop.permute.xlu0 %1046
        %1049 = vset.pattern.permute.xlu0 3
        %1050 = vperm.xlu0 %1049, %v843
        %v1051 = vpop.permute.xlu0 %1050
        %v1053 = vlaneseq
        %v1054 = vshrl.u32 %v1053, 7
        %v1055 = vsub.s32 0, %v1054
        %v1056 = vrot.slane %v1032, %v1055
        %v1057 = vmul.f32 %v1047, %v1056
        %v1058 = vmul.f32 %v1051, %v1056
        %v1059 = vadd.f32 %v1043, %v1057
        %v1060 = vadd.f32 %v1044, %v1058
        %1061 = vset.pattern.permute.xlu0 3
        %1062 = vperm.xlu0 %1061, %v844
        %v1063 = vpop.permute.xlu0 %1062
        %1065 = vset.pattern.permute.xlu0 3
        %1066 = vperm.xlu0 %1065, %v845
        %v1067 = vpop.permute.xlu0 %1066
        %v1069 = vmul.f32 %v1063, %v1059
        %v1070 = vmul.f32 %v1067, %v1060
        %v1071 = vsel %vm476, %v1069, 0.0
        %v1072 = vsel %vm476, %v1070, 0.0
        %v1073 = vadd.f32 %v1071, %v1072
        %v1074 = vrot.slane %v1073, 4
        %v1075 = vadd.f32 %v1073, %v1074
        %v1076 = vrot.slane %v1075, 2
        %v1077 = vadd.f32 %v1075, %v1076
        %v1078 = vrot.slane %v1077, 1
        %v1079 = vadd.f32 %v1077, %v1078
        %s1080 = scalar_lea.vmem [#allocation7], %s1027
        %1081 = vst.msk [vmem:[%s1080] sm:$0x1] %vm915, %v1079
        %s1082 = sadd.s32 %s820, 4
        %s1083 = scalar_lea.vmem [#allocation3], %s1082
        %v1084 = vld [vmem:[%s1083] sm:$0x1]
        %s1085 = scalar_lea.vmem [#allocation4], %s1082
        %v1086 = vld [vmem:[%s1085] sm:$0x1]
        %v1087 = vmul.f32 %v1084, %v1086
        %v1088 = vlaneseq
        %v1089 = vshrl.u32 %v1088, 7
        %v1090 = vsub.s32 0, %v1089
        %v1091 = vrot.slane %v1084, %v1090
        %v1092 = vmul.f32 %v1091, %v821
        %v1093 = vmul.f32 %v1091, %v822
        %v1094 = vmul.f32 %v1092, 1.442695
        %v1095 = vpow.pop %v1094
        %v1096 = vmul.f32 %v1093, 1.442695
        %v1097 = vpow.pop %v1096
        %v1098 = vmul.f32 %v1095, %v1059
        %v1099 = vmul.f32 %v1097, %v1060
        %1100 = vset.pattern.permute.xlu0 4
        %1101 = vperm.xlu0 %1100, %v842
        %v1102 = vpop.permute.xlu0 %1101
        %1104 = vset.pattern.permute.xlu0 4
        %1105 = vperm.xlu0 %1104, %v843
        %v1106 = vpop.permute.xlu0 %1105
        %v1108 = vlaneseq
        %v1109 = vshrl.u32 %v1108, 7
        %v1110 = vsub.s32 0, %v1109
        %v1111 = vrot.slane %v1087, %v1110
        %v1112 = vmul.f32 %v1102, %v1111
        %v1113 = vmul.f32 %v1106, %v1111
        %v1114 = vadd.f32 %v1098, %v1112
        %v1115 = vadd.f32 %v1099, %v1113
        %1116 = vset.pattern.permute.xlu0 4
        %1117 = vperm.xlu0 %1116, %v844
        %v1118 = vpop.permute.xlu0 %1117
        %1120 = vset.pattern.permute.xlu0 4
        %1121 = vperm.xlu0 %1120, %v845
        %v1122 = vpop.permute.xlu0 %1121
        %v1124 = vmul.f32 %v1118, %v1114
        %v1125 = vmul.f32 %v1122, %v1115
        %v1126 = vsel %vm476, %v1124, 0.0
        %v1127 = vsel %vm476, %v1125, 0.0
        %v1128 = vadd.f32 %v1126, %v1127
        %v1129 = vrot.slane %v1128, 4
        %v1130 = vadd.f32 %v1128, %v1129
        %v1131 = vrot.slane %v1130, 2
        %v1132 = vadd.f32 %v1130, %v1131
        %v1133 = vrot.slane %v1132, 1
        %v1134 = vadd.f32 %v1132, %v1133
        %s1135 = scalar_lea.vmem [#allocation7], %s1082
        %1136 = vst.msk [vmem:[%s1135] sm:$0x1] %vm915, %v1134
        %s1137 = sadd.s32 %s820, 5
        %s1138 = scalar_lea.vmem [#allocation3], %s1137
        %v1139 = vld [vmem:[%s1138] sm:$0x1]
        %s1140 = scalar_lea.vmem [#allocation4], %s1137
        %v1141 = vld [vmem:[%s1140] sm:$0x1]
        %v1142 = vmul.f32 %v1139, %v1141
        %v1143 = vlaneseq
        %v1144 = vshrl.u32 %v1143, 7
        %v1145 = vsub.s32 0, %v1144
        %v1146 = vrot.slane %v1139, %v1145
        %v1147 = vmul.f32 %v1146, %v821
        %v1148 = vmul.f32 %v1146, %v822
        %v1149 = vmul.f32 %v1147, 1.442695
        %v1150 = vpow.pop %v1149
        %v1151 = vmul.f32 %v1148, 1.442695
        %v1152 = vpow.pop %v1151
        %v1153 = vmul.f32 %v1150, %v1114
        %v1154 = vmul.f32 %v1152, %v1115
        %1155 = vset.pattern.permute.xlu0 5
        %1156 = vperm.xlu0 %1155, %v842
        %v1157 = vpop.permute.xlu0 %1156
        %1159 = vset.pattern.permute.xlu0 5
        %1160 = vperm.xlu0 %1159, %v843
        %v1161 = vpop.permute.xlu0 %1160
        %v1163 = vlaneseq
        %v1164 = vshrl.u32 %v1163, 7
        %v1165 = vsub.s32 0, %v1164
        %v1166 = vrot.slane %v1142, %v1165
        %v1167 = vmul.f32 %v1157, %v1166
        %v1168 = vmul.f32 %v1161, %v1166
        %v1169 = vadd.f32 %v1153, %v1167
        %v1170 = vadd.f32 %v1154, %v1168
        %1171 = vset.pattern.permute.xlu0 5
        %1172 = vperm.xlu0 %1171, %v844
        %v1173 = vpop.permute.xlu0 %1172
        %1175 = vset.pattern.permute.xlu0 5
        %1176 = vperm.xlu0 %1175, %v845
        %v1177 = vpop.permute.xlu0 %1176
        %v1179 = vmul.f32 %v1173, %v1169
        %v1180 = vmul.f32 %v1177, %v1170
        %v1181 = vsel %vm476, %v1179, 0.0
        %v1182 = vsel %vm476, %v1180, 0.0
        %v1183 = vadd.f32 %v1181, %v1182
        %v1184 = vrot.slane %v1183, 4
        %v1185 = vadd.f32 %v1183, %v1184
        %v1186 = vrot.slane %v1185, 2
        %v1187 = vadd.f32 %v1185, %v1186
        %v1188 = vrot.slane %v1187, 1
        %v1189 = vadd.f32 %v1187, %v1188
        %s1190 = scalar_lea.vmem [#allocation7], %s1137
        %1191 = vst.msk [vmem:[%s1190] sm:$0x1] %vm915, %v1189
        %s1192 = sadd.s32 %s820, 6
        %s1193 = scalar_lea.vmem [#allocation3], %s1192
        %v1194 = vld [vmem:[%s1193] sm:$0x1]
        %s1195 = scalar_lea.vmem [#allocation4], %s1192
        %v1196 = vld [vmem:[%s1195] sm:$0x1]
        %v1197 = vmul.f32 %v1194, %v1196
        %v1198 = vlaneseq
        %v1199 = vshrl.u32 %v1198, 7
        %v1200 = vsub.s32 0, %v1199
        %v1201 = vrot.slane %v1194, %v1200
        %v1202 = vmul.f32 %v1201, %v821
        %v1203 = vmul.f32 %v1201, %v822
        %v1204 = vmul.f32 %v1202, 1.442695
        %v1205 = vpow.pop %v1204
        %v1206 = vmul.f32 %v1203, 1.442695
        %v1207 = vpow.pop %v1206
        %v1208 = vmul.f32 %v1205, %v1169
        %v1209 = vmul.f32 %v1207, %v1170
        %1210 = vset.pattern.permute.xlu0 6
        %1211 = vperm.xlu0 %1210, %v842
        %v1212 = vpop.permute.xlu0 %1211
        %1214 = vset.pattern.permute.xlu0 6
        %1215 = vperm.xlu0 %1214, %v843
        %v1216 = vpop.permute.xlu0 %1215
        %v1218 = vlaneseq
        %v1219 = vshrl.u32 %v1218, 7
        %v1220 = vsub.s32 0, %v1219
        %v1221 = vrot.slane %v1197, %v1220
        %v1222 = vmul.f32 %v1212, %v1221
        %v1223 = vmul.f32 %v1216, %v1221
        %v1224 = vadd.f32 %v1208, %v1222
        %v1225 = vadd.f32 %v1209, %v1223
        %1226 = vset.pattern.permute.xlu0 6
        %1227 = vperm.xlu0 %1226, %v844
        %v1228 = vpop.permute.xlu0 %1227
        %1230 = vset.pattern.permute.xlu0 6
        %1231 = vperm.xlu0 %1230, %v845
        %v1232 = vpop.permute.xlu0 %1231
        %v1234 = vmul.f32 %v1228, %v1224
        %v1235 = vmul.f32 %v1232, %v1225
        %v1236 = vsel %vm476, %v1234, 0.0
        %v1237 = vsel %vm476, %v1235, 0.0
        %v1238 = vadd.f32 %v1236, %v1237
        %v1239 = vrot.slane %v1238, 4
        %v1240 = vadd.f32 %v1238, %v1239
        %v1241 = vrot.slane %v1240, 2
        %v1242 = vadd.f32 %v1240, %v1241
        %v1243 = vrot.slane %v1242, 1
        %v1244 = vadd.f32 %v1242, %v1243
        %s1245 = scalar_lea.vmem [#allocation7], %s1192
        %1246 = vst.msk [vmem:[%s1245] sm:$0x1] %vm915, %v1244
        %s1247 = sadd.s32 %s820, 7
        %s1248 = scalar_lea.vmem [#allocation3], %s1247
        %v1249 = vld [vmem:[%s1248] sm:$0x1]
        %s1250 = scalar_lea.vmem [#allocation4], %s1247
        %v1251 = vld [vmem:[%s1250] sm:$0x1]
        %v1252 = vmul.f32 %v1249, %v1251
        %v1253 = vlaneseq
        %v1254 = vshrl.u32 %v1253, 7
        %v1255 = vsub.s32 0, %v1254
        %v1256 = vrot.slane %v1249, %v1255
        %v1257 = vmul.f32 %v1256, %v821
        %v1258 = vmul.f32 %v1256, %v822
        %v1259 = vmul.f32 %v1257, 1.442695
        %v1260 = vpow.pop %v1259
        %v1261 = vmul.f32 %v1258, 1.442695
        %v1262 = vpow.pop %v1261
        %v1263 = vmul.f32 %v1260, %v1224
        %v1264 = vmul.f32 %v1262, %v1225
        %1265 = vset.pattern.permute.xlu0 7
        %1266 = vperm.xlu0 %1265, %v842
        %v1267 = vpop.permute.xlu0 %1266
        %1269 = vset.pattern.permute.xlu0 7
        %1270 = vperm.xlu0 %1269, %v843
        %v1271 = vpop.permute.xlu0 %1270
        %v1273 = vlaneseq
        %v1274 = vshrl.u32 %v1273, 7
        %v1275 = vsub.s32 0, %v1274
        %v1276 = vrot.slane %v1252, %v1275
        %v1277 = vmul.f32 %v1267, %v1276
        %v1278 = vmul.f32 %v1271, %v1276
        %v1279 = vadd.f32 %v1263, %v1277
        %v1280 = vadd.f32 %v1264, %v1278
        %1281 = vset.pattern.permute.xlu0 7
        %1282 = vperm.xlu0 %1281, %v844
        %v1283 = vpop.permute.xlu0 %1282
        %1285 = vset.pattern.permute.xlu0 7
        %1286 = vperm.xlu0 %1285, %v845
        %v1287 = vpop.permute.xlu0 %1286
        %v1289 = vmul.f32 %v1283, %v1279
        %v1290 = vmul.f32 %v1287, %v1280
        %v1291 = vsel %vm476, %v1289, 0.0
        %v1292 = vsel %vm476, %v1290, 0.0
        %v1293 = vadd.f32 %v1291, %v1292
        %v1294 = vrot.slane %v1293, 4
        %v1295 = vadd.f32 %v1293, %v1294
        %v1296 = vrot.slane %v1295, 2
        %v1297 = vadd.f32 %v1295, %v1296
        %v1298 = vrot.slane %v1297, 1
        %v1299 = vadd.f32 %v1297, %v1298
        %s1300 = scalar_lea.vmem [#allocation7], %s1247
        %1301 = vst.msk [vmem:[%s1300] sm:$0x1] %vm915, %v1299
        %s1302 = sadd.s32 %s820, 8
        %s1303 = scalar_lea.vmem [#allocation3], %s1302
        %v1304 = vld [vmem:[%s1303] sm:$0x1]
        %s1305 = scalar_lea.vmem [#allocation4], %s1302
        %v1306 = vld [vmem:[%s1305] sm:$0x1]
        %v1307 = vmul.f32 %v1304, %v1306
        %v1308 = vlaneseq
        %v1309 = vshrl.u32 %v1308, 7
        %v1310 = vsub.s32 0, %v1309
        %v1311 = vrot.slane %v1304, %v1310
        %v1312 = vmul.f32 %v1311, %v821
        %v1313 = vmul.f32 %v1311, %v822
        %v1314 = vmul.f32 %v1312, 1.442695
        %v1315 = vpow.pop %v1314
        %v1316 = vmul.f32 %v1313, 1.442695
        %v1317 = vpow.pop %v1316
        %v1318 = vmul.f32 %v1315, %v1279
        %v1319 = vmul.f32 %v1317, %v1280
        %1320 = vset.pattern.permute.xlu0 8
        %1321 = vperm.xlu0 %1320, %v842
        %v1322 = vpop.permute.xlu0 %1321
        %1324 = vset.pattern.permute.xlu0 8
        %1325 = vperm.xlu0 %1324, %v843
        %v1326 = vpop.permute.xlu0 %1325
        %v1328 = vlaneseq
        %v1329 = vshrl.u32 %v1328, 7
        %v1330 = vsub.s32 0, %v1329
        %v1331 = vrot.slane %v1307, %v1330
        %v1332 = vmul.f32 %v1322, %v1331
        %v1333 = vmul.f32 %v1326, %v1331
        %v1334 = vadd.f32 %v1318, %v1332
        %v1335 = vadd.f32 %v1319, %v1333
        %1336 = vset.pattern.permute.xlu0 8
        %1337 = vperm.xlu0 %1336, %v844
        %v1338 = vpop.permute.xlu0 %1337
        %1340 = vset.pattern.permute.xlu0 8
        %1341 = vperm.xlu0 %1340, %v845
        %v1342 = vpop.permute.xlu0 %1341
        %v1344 = vmul.f32 %v1338, %v1334
        %v1345 = vmul.f32 %v1342, %v1335
        %v1346 = vsel %vm476, %v1344, 0.0
        %v1347 = vsel %vm476, %v1345, 0.0
        %v1348 = vadd.f32 %v1346, %v1347
        %v1349 = vrot.slane %v1348, 4
        %v1350 = vadd.f32 %v1348, %v1349
        %v1351 = vrot.slane %v1350, 2
        %v1352 = vadd.f32 %v1350, %v1351
        %v1353 = vrot.slane %v1352, 1
        %v1354 = vadd.f32 %v1352, %v1353
        %s1355 = scalar_lea.vmem [#allocation7], %s1302
        %1356 = vst.msk [vmem:[%s1355] sm:$0x1] %vm915, %v1354
        %s1357 = sadd.s32 %s820, 9
        %s1358 = scalar_lea.vmem [#allocation3], %s1357
        %v1359 = vld [vmem:[%s1358] sm:$0x1]
        %s1360 = scalar_lea.vmem [#allocation4], %s1357
        %v1361 = vld [vmem:[%s1360] sm:$0x1]
        %v1362 = vmul.f32 %v1359, %v1361
        %v1363 = vlaneseq
        %v1364 = vshrl.u32 %v1363, 7
        %v1365 = vsub.s32 0, %v1364
        %v1366 = vrot.slane %v1359, %v1365
        %v1367 = vmul.f32 %v1366, %v821
        %v1368 = vmul.f32 %v1366, %v822
        %v1369 = vmul.f32 %v1367, 1.442695
        %v1370 = vpow.pop %v1369
        %v1371 = vmul.f32 %v1368, 1.442695
        %v1372 = vpow.pop %v1371
        %v1373 = vmul.f32 %v1370, %v1334
        %v1374 = vmul.f32 %v1372, %v1335
        %1375 = vset.pattern.permute.xlu0 9
        %1376 = vperm.xlu0 %1375, %v842
        %v1377 = vpop.permute.xlu0 %1376
        %1379 = vset.pattern.permute.xlu0 9
        %1380 = vperm.xlu0 %1379, %v843
        %v1381 = vpop.permute.xlu0 %1380
        %v1383 = vlaneseq
        %v1384 = vshrl.u32 %v1383, 7
        %v1385 = vsub.s32 0, %v1384
        %v1386 = vrot.slane %v1362, %v1385
        %v1387 = vmul.f32 %v1377, %v1386
        %v1388 = vmul.f32 %v1381, %v1386
        %v1389 = vadd.f32 %v1373, %v1387
        %v1390 = vadd.f32 %v1374, %v1388
        %1391 = vset.pattern.permute.xlu0 9
        %1392 = vperm.xlu0 %1391, %v844
        %v1393 = vpop.permute.xlu0 %1392
        %1395 = vset.pattern.permute.xlu0 9
        %1396 = vperm.xlu0 %1395, %v845
        %v1397 = vpop.permute.xlu0 %1396
        %v1399 = vmul.f32 %v1393, %v1389
        %v1400 = vmul.f32 %v1397, %v1390
        %v1401 = vsel %vm476, %v1399, 0.0
        %v1402 = vsel %vm476, %v1400, 0.0
        %v1403 = vadd.f32 %v1401, %v1402
        %v1404 = vrot.slane %v1403, 4
        %v1405 = vadd.f32 %v1403, %v1404
        %v1406 = vrot.slane %v1405, 2
        %v1407 = vadd.f32 %v1405, %v1406
        %v1408 = vrot.slane %v1407, 1
        %v1409 = vadd.f32 %v1407, %v1408
        %s1410 = scalar_lea.vmem [#allocation7], %s1357
        %1411 = vst.msk [vmem:[%s1410] sm:$0x1] %vm915, %v1409
        %s1412 = sadd.s32 %s820, 10
        %s1413 = scalar_lea.vmem [#allocation3], %s1412
        %v1414 = vld [vmem:[%s1413] sm:$0x1]
        %s1415 = scalar_lea.vmem [#allocation4], %s1412
        %v1416 = vld [vmem:[%s1415] sm:$0x1]
        %v1417 = vmul.f32 %v1414, %v1416
        %v1418 = vlaneseq
        %v1419 = vshrl.u32 %v1418, 7
        %v1420 = vsub.s32 0, %v1419
        %v1421 = vrot.slane %v1414, %v1420
        %v1422 = vmul.f32 %v1421, %v821
        %v1423 = vmul.f32 %v1421, %v822
        %v1424 = vmul.f32 %v1422, 1.442695
        %v1425 = vpow.pop %v1424
        %v1426 = vmul.f32 %v1423, 1.442695
        %v1427 = vpow.pop %v1426
        %v1428 = vmul.f32 %v1425, %v1389
        %v1429 = vmul.f32 %v1427, %v1390
        %1430 = vset.pattern.permute.xlu0 10
        %1431 = vperm.xlu0 %1430, %v842
        %v1432 = vpop.permute.xlu0 %1431
        %1434 = vset.pattern.permute.xlu0 10
        %1435 = vperm.xlu0 %1434, %v843
        %v1436 = vpop.permute.xlu0 %1435
        %v1438 = vlaneseq
        %v1439 = vshrl.u32 %v1438, 7
        %v1440 = vsub.s32 0, %v1439
        %v1441 = vrot.slane %v1417, %v1440
        %v1442 = vmul.f32 %v1432, %v1441
        %v1443 = vmul.f32 %v1436, %v1441
        %v1444 = vadd.f32 %v1428, %v1442
        %v1445 = vadd.f32 %v1429, %v1443
        %1446 = vset.pattern.permute.xlu0 10
        %1447 = vperm.xlu0 %1446, %v844
        %v1448 = vpop.permute.xlu0 %1447
        %1450 = vset.pattern.permute.xlu0 10
        %1451 = vperm.xlu0 %1450, %v845
        %v1452 = vpop.permute.xlu0 %1451
        %v1454 = vmul.f32 %v1448, %v1444
        %v1455 = vmul.f32 %v1452, %v1445
        %v1456 = vsel %vm476, %v1454, 0.0
        %v1457 = vsel %vm476, %v1455, 0.0
        %v1458 = vadd.f32 %v1456, %v1457
        %v1459 = vrot.slane %v1458, 4
        %v1460 = vadd.f32 %v1458, %v1459
        %v1461 = vrot.slane %v1460, 2
        %v1462 = vadd.f32 %v1460, %v1461
        %v1463 = vrot.slane %v1462, 1
        %v1464 = vadd.f32 %v1462, %v1463
        %s1465 = scalar_lea.vmem [#allocation7], %s1412
        %1466 = vst.msk [vmem:[%s1465] sm:$0x1] %vm915, %v1464
        %s1467 = sadd.s32 %s820, 11
        %s1468 = scalar_lea.vmem [#allocation3], %s1467
        %v1469 = vld [vmem:[%s1468] sm:$0x1]
        %s1470 = scalar_lea.vmem [#allocation4], %s1467
        %v1471 = vld [vmem:[%s1470] sm:$0x1]
        %v1472 = vmul.f32 %v1469, %v1471
        %v1473 = vlaneseq
        %v1474 = vshrl.u32 %v1473, 7
        %v1475 = vsub.s32 0, %v1474
        %v1476 = vrot.slane %v1469, %v1475
        %v1477 = vmul.f32 %v1476, %v821
        %v1478 = vmul.f32 %v1476, %v822
        %v1479 = vmul.f32 %v1477, 1.442695
        %v1480 = vpow.pop %v1479
        %v1481 = vmul.f32 %v1478, 1.442695
        %v1482 = vpow.pop %v1481
        %v1483 = vmul.f32 %v1480, %v1444
        %v1484 = vmul.f32 %v1482, %v1445
        %1485 = vset.pattern.permute.xlu0 11
        %1486 = vperm.xlu0 %1485, %v842
        %v1487 = vpop.permute.xlu0 %1486
        %1489 = vset.pattern.permute.xlu0 11
        %1490 = vperm.xlu0 %1489, %v843
        %v1491 = vpop.permute.xlu0 %1490
        %v1493 = vlaneseq
        %v1494 = vshrl.u32 %v1493, 7
        %v1495 = vsub.s32 0, %v1494
        %v1496 = vrot.slane %v1472, %v1495
        %v1497 = vmul.f32 %v1487, %v1496
        %v1498 = vmul.f32 %v1491, %v1496
        %v1499 = vadd.f32 %v1483, %v1497
        %v1500 = vadd.f32 %v1484, %v1498
        %1501 = vset.pattern.permute.xlu0 11
        %1502 = vperm.xlu0 %1501, %v844
        %v1503 = vpop.permute.xlu0 %1502
        %1505 = vset.pattern.permute.xlu0 11
        %1506 = vperm.xlu0 %1505, %v845
        %v1507 = vpop.permute.xlu0 %1506
        %v1509 = vmul.f32 %v1503, %v1499
        %v1510 = vmul.f32 %v1507, %v1500
        %v1511 = vsel %vm476, %v1509, 0.0
        %v1512 = vsel %vm476, %v1510, 0.0
        %v1513 = vadd.f32 %v1511, %v1512
        %v1514 = vrot.slane %v1513, 4
        %v1515 = vadd.f32 %v1513, %v1514
        %v1516 = vrot.slane %v1515, 2
        %v1517 = vadd.f32 %v1515, %v1516
        %v1518 = vrot.slane %v1517, 1
        %v1519 = vadd.f32 %v1517, %v1518
        %s1520 = scalar_lea.vmem [#allocation7], %s1467
        %1521 = vst.msk [vmem:[%s1520] sm:$0x1] %vm915, %v1519
        %s1522 = sadd.s32 %s820, 12
        %s1523 = scalar_lea.vmem [#allocation3], %s1522
        %v1524 = vld [vmem:[%s1523] sm:$0x1]
        %s1525 = scalar_lea.vmem [#allocation4], %s1522
        %v1526 = vld [vmem:[%s1525] sm:$0x1]
        %v1527 = vmul.f32 %v1524, %v1526
        %v1528 = vlaneseq
        %v1529 = vshrl.u32 %v1528, 7
        %v1530 = vsub.s32 0, %v1529
        %v1531 = vrot.slane %v1524, %v1530
        %v1532 = vmul.f32 %v1531, %v821
        %v1533 = vmul.f32 %v1531, %v822
        %v1534 = vmul.f32 %v1532, 1.442695
        %v1535 = vpow.pop %v1534
        %v1536 = vmul.f32 %v1533, 1.442695
        %v1537 = vpow.pop %v1536
        %v1538 = vmul.f32 %v1535, %v1499
        %v1539 = vmul.f32 %v1537, %v1500
        %1540 = vset.pattern.permute.xlu0 12
        %1541 = vperm.xlu0 %1540, %v842
        %v1542 = vpop.permute.xlu0 %1541
        %1544 = vset.pattern.permute.xlu0 12
        %1545 = vperm.xlu0 %1544, %v843
        %v1546 = vpop.permute.xlu0 %1545
        %v1548 = vlaneseq
        %v1549 = vshrl.u32 %v1548, 7
        %v1550 = vsub.s32 0, %v1549
        %v1551 = vrot.slane %v1527, %v1550
        %v1552 = vmul.f32 %v1542, %v1551
        %v1553 = vmul.f32 %v1546, %v1551
        %v1554 = vadd.f32 %v1538, %v1552
        %v1555 = vadd.f32 %v1539, %v1553
        %1556 = vset.pattern.permute.xlu0 12
        %1557 = vperm.xlu0 %1556, %v844
        %v1558 = vpop.permute.xlu0 %1557
        %1560 = vset.pattern.permute.xlu0 12
        %1561 = vperm.xlu0 %1560, %v845
        %v1562 = vpop.permute.xlu0 %1561
        %v1564 = vmul.f32 %v1558, %v1554
        %v1565 = vmul.f32 %v1562, %v1555
        %v1566 = vsel %vm476, %v1564, 0.0
        %v1567 = vsel %vm476, %v1565, 0.0
        %v1568 = vadd.f32 %v1566, %v1567
        %v1569 = vrot.slane %v1568, 4
        %v1570 = vadd.f32 %v1568, %v1569
        %v1571 = vrot.slane %v1570, 2
        %v1572 = vadd.f32 %v1570, %v1571
        %v1573 = vrot.slane %v1572, 1
        %v1574 = vadd.f32 %v1572, %v1573
        %s1575 = scalar_lea.vmem [#allocation7], %s1522
        %1576 = vst.msk [vmem:[%s1575] sm:$0x1] %vm915, %v1574
        %s1577 = sadd.s32 %s820, 13
        %s1578 = scalar_lea.vmem [#allocation3], %s1577
        %v1579 = vld [vmem:[%s1578] sm:$0x1]
        %s1580 = scalar_lea.vmem [#allocation4], %s1577
        %v1581 = vld [vmem:[%s1580] sm:$0x1]
        %v1582 = vmul.f32 %v1579, %v1581
        %v1583 = vlaneseq
        %v1584 = vshrl.u32 %v1583, 7
        %v1585 = vsub.s32 0, %v1584
        %v1586 = vrot.slane %v1579, %v1585
        %v1587 = vmul.f32 %v1586, %v821
        %v1588 = vmul.f32 %v1586, %v822
        %v1589 = vmul.f32 %v1587, 1.442695
        %v1590 = vpow.pop %v1589
        %v1591 = vmul.f32 %v1588, 1.442695
        %v1592 = vpow.pop %v1591
        %v1593 = vmul.f32 %v1590, %v1554
        %v1594 = vmul.f32 %v1592, %v1555
        %1595 = vset.pattern.permute.xlu0 13
        %1596 = vperm.xlu0 %1595, %v842
        %v1597 = vpop.permute.xlu0 %1596
        %1599 = vset.pattern.permute.xlu0 13
        %1600 = vperm.xlu0 %1599, %v843
        %v1601 = vpop.permute.xlu0 %1600
        %v1603 = vlaneseq
        %v1604 = vshrl.u32 %v1603, 7
        %v1605 = vsub.s32 0, %v1604
        %v1606 = vrot.slane %v1582, %v1605
        %v1607 = vmul.f32 %v1597, %v1606
        %v1608 = vmul.f32 %v1601, %v1606
        %v1609 = vadd.f32 %v1593, %v1607
        %v1610 = vadd.f32 %v1594, %v1608
        %1611 = vset.pattern.permute.xlu0 13
        %1612 = vperm.xlu0 %1611, %v844
        %v1613 = vpop.permute.xlu0 %1612
        %1615 = vset.pattern.permute.xlu0 13
        %1616 = vperm.xlu0 %1615, %v845
        %v1617 = vpop.permute.xlu0 %1616
        %v1619 = vmul.f32 %v1613, %v1609
        %v1620 = vmul.f32 %v1617, %v1610
        %v1621 = vsel %vm476, %v1619, 0.0
        %v1622 = vsel %vm476, %v1620, 0.0
        %v1623 = vadd.f32 %v1621, %v1622
        %v1624 = vrot.slane %v1623, 4
        %v1625 = vadd.f32 %v1623, %v1624
        %v1626 = vrot.slane %v1625, 2
        %v1627 = vadd.f32 %v1625, %v1626
        %v1628 = vrot.slane %v1627, 1
        %v1629 = vadd.f32 %v1627, %v1628
        %s1630 = scalar_lea.vmem [#allocation7], %s1577
        %1631 = vst.msk [vmem:[%s1630] sm:$0x1] %vm915, %v1629
        %s1632 = sadd.s32 %s820, 14
        %s1633 = scalar_lea.vmem [#allocation3], %s1632
        %v1634 = vld [vmem:[%s1633] sm:$0x1]
        %s1635 = scalar_lea.vmem [#allocation4], %s1632
        %v1636 = vld [vmem:[%s1635] sm:$0x1]
        %v1637 = vmul.f32 %v1634, %v1636
        %v1638 = vlaneseq
        %v1639 = vshrl.u32 %v1638, 7
        %v1640 = vsub.s32 0, %v1639
        %v1641 = vrot.slane %v1634, %v1640
        %v1642 = vmul.f32 %v1641, %v821
        %v1643 = vmul.f32 %v1641, %v822
        %v1644 = vmul.f32 %v1642, 1.442695
        %v1645 = vpow.pop %v1644
        %v1646 = vmul.f32 %v1643, 1.442695
        %v1647 = vpow.pop %v1646
        %v1648 = vmul.f32 %v1645, %v1609
        %v1649 = vmul.f32 %v1647, %v1610
        %1650 = vset.pattern.permute.xlu0 14
        %1651 = vperm.xlu0 %1650, %v842
        %v1652 = vpop.permute.xlu0 %1651
        %1654 = vset.pattern.permute.xlu0 14
        %1655 = vperm.xlu0 %1654, %v843
        %v1656 = vpop.permute.xlu0 %1655
        %v1658 = vlaneseq
        %v1659 = vshrl.u32 %v1658, 7
        %v1660 = vsub.s32 0, %v1659
        %v1661 = vrot.slane %v1637, %v1660
        %v1662 = vmul.f32 %v1652, %v1661
        %v1663 = vmul.f32 %v1656, %v1661
        %v1664 = vadd.f32 %v1648, %v1662
        %v1665 = vadd.f32 %v1649, %v1663
        %1666 = vset.pattern.permute.xlu0 14
        %1667 = vperm.xlu0 %1666, %v844
        %v1668 = vpop.permute.xlu0 %1667
        %1670 = vset.pattern.permute.xlu0 14
        %1671 = vperm.xlu0 %1670, %v845
        %v1672 = vpop.permute.xlu0 %1671
        %v1674 = vmul.f32 %v1668, %v1664
        %v1675 = vmul.f32 %v1672, %v1665
        %v1676 = vsel %vm476, %v1674, 0.0
        %v1677 = vsel %vm476, %v1675, 0.0
        %v1678 = vadd.f32 %v1676, %v1677
        %v1679 = vrot.slane %v1678, 4
        %v1680 = vadd.f32 %v1678, %v1679
        %v1681 = vrot.slane %v1680, 2
        %v1682 = vadd.f32 %v1680, %v1681
        %v1683 = vrot.slane %v1682, 1
        %v1684 = vadd.f32 %v1682, %v1683
        %s1685 = scalar_lea.vmem [#allocation7], %s1632
        %1686 = vst.msk [vmem:[%s1685] sm:$0x1] %vm915, %v1684
        %s1687 = sadd.s32 %s820, 15
        %s1688 = scalar_lea.vmem [#allocation3], %s1687
        %v1689 = vld [vmem:[%s1688] sm:$0x1]
        %s1690 = scalar_lea.vmem [#allocation4], %s1687
        %v1691 = vld [vmem:[%s1690] sm:$0x1]
        %v1692 = vmul.f32 %v1689, %v1691
        %v1693 = vlaneseq
        %v1694 = vshrl.u32 %v1693, 7
        %v1695 = vsub.s32 0, %v1694
        %v1696 = vrot.slane %v1689, %v1695
        %v1697 = vmul.f32 %v1696, %v821
        %v1698 = vmul.f32 %v1696, %v822
        %v1699 = vmul.f32 %v1697, 1.442695
        %v1700 = vpow.pop %v1699
        %v1701 = vmul.f32 %v1698, 1.442695
        %v1702 = vpow.pop %v1701
        %v1703 = vmul.f32 %v1700, %v1664
        %v1704 = vmul.f32 %v1702, %v1665
        %1705 = vset.pattern.permute.xlu0 15
        %1706 = vperm.xlu0 %1705, %v842
        %v1707 = vpop.permute.xlu0 %1706
        %1709 = vset.pattern.permute.xlu0 15
        %1710 = vperm.xlu0 %1709, %v843
        %v1711 = vpop.permute.xlu0 %1710
        %v1713 = vlaneseq
        %v1714 = vshrl.u32 %v1713, 7
        %v1715 = vsub.s32 0, %v1714
        %v1716 = vrot.slane %v1692, %v1715
        %v1717 = vmul.f32 %v1707, %v1716
        %v1718 = vmul.f32 %v1711, %v1716
        %v1719 = vadd.f32 %v1703, %v1717
        %v1720 = vadd.f32 %v1704, %v1718
        %1721 = vset.pattern.permute.xlu0 15
        %1722 = vperm.xlu0 %1721, %v844
        %v1723 = vpop.permute.xlu0 %1722
        %1725 = vset.pattern.permute.xlu0 15
        %1726 = vperm.xlu0 %1725, %v845
        %v1727 = vpop.permute.xlu0 %1726
        %v1729 = vmul.f32 %v1723, %v1719
        %v1730 = vmul.f32 %v1727, %v1720
        %v1731 = vsel %vm476, %v1729, 0.0
        %v1732 = vsel %vm476, %v1730, 0.0
        %v1733 = vadd.f32 %v1731, %v1732
        %v1734 = vrot.slane %v1733, 4
        %v1735 = vadd.f32 %v1733, %v1734
        %v1736 = vrot.slane %v1735, 2
        %v1737 = vadd.f32 %v1735, %v1736
        %v1738 = vrot.slane %v1737, 1
        %v1739 = vadd.f32 %v1737, %v1738
        %s1740 = scalar_lea.vmem [#allocation7], %s1687
        %1741 = vst.msk [vmem:[%s1740] sm:$0x1] %vm915, %v1739
      $region65: #{tpu_custom_call.1} parent=47 // loop_footer
        %s817 = sadd.s32 1, %s813
      $region66: #{tpu_custom_call.1} parent=47 // loop_footer_branch
        %812 = sbr.rel target = $region62
      $region67: #{tpu_custom_call.1} parent=47 // loop_exit
        _
      %1742 = vst.msk [vmem:[#allocation8] sm:$0xff] %vm476, %v818
      %1743 = vst.msk [vmem:[#allocation8 + $0x8] sm:$0xff] %vm476, %v819
      %v1744 = vld [vmem:[#allocation7] sm:$0xff]
      %v1745 = vld [vmem:[#allocation7 + $0x8] sm:$0xff]
      %v1746 = vld [vmem:[#allocation7 + $0x10] sm:$0xff]
      %v1747 = vld [vmem:[#allocation7 + $0x18] sm:$0xff]
      %v1748 = vld [vmem:[%s3 + $0x16] sm:$0x1]
      %v1749 = vld [vmem:[#allocation4] sm:$0xff]
      %v1750 = vld [vmem:[#allocation4 + $0x8] sm:$0xff]
      %v1751 = vld [vmem:[#allocation4 + $0x10] sm:$0xff]
      %v1752 = vld [vmem:[#allocation4 + $0x18] sm:$0xff]
      %v1753 = vlaneseq
      %v1754 = vshrl.u32 %v1753, 7
      %v1755 = vsub.s32 0, %v1754
      %v1756 = vrot.slane %v1748, %v1755
      %v1757 = vmul.f32 %v1756, %v1749
      %v1758 = vmul.f32 %v1756, %v1750
      %v1759 = vmul.f32 %v1756, %v1751
      %v1760 = vmul.f32 %v1756, %v1752
      %v1761 = vadd.f32 %v1744, %v1757
      %v1762 = vadd.f32 %v1745, %v1758
      %v1763 = vadd.f32 %v1746, %v1759
      %v1764 = vadd.f32 %v1747, %v1760
      %v1765 = vld [vmem:[#allocation5] sm:$0xff]
      %v1766 = vld [vmem:[#allocation5 + $0x8] sm:$0xff]
      %v1767 = vld [vmem:[#allocation5 + $0x10] sm:$0xff]
      %v1768 = vld [vmem:[#allocation5 + $0x18] sm:$0xff]
      %v1769 = vsub.f32 0.0, %v1765
      %v1770 = vsub.f32 0.0, %v1766
      %v1771 = vsub.f32 0.0, %v1767
      %v1772 = vsub.f32 0.0, %v1768
      %v1773 = vmul.f32 %v1769, 1.442695
      %v1774 = vpow.pop %v1773
      %v1775 = vmul.f32 %v1770, 1.442695
      %v1776 = vpow.pop %v1775
      %v1777 = vmul.f32 %v1771, 1.442695
      %v1778 = vpow.pop %v1777
      %v1779 = vmul.f32 %v1772, 1.442695
      %v1780 = vpow.pop %v1779
      %v1781 = vadd.f32 %v1774, 1.0
      %v1782 = vadd.f32 %v1776, 1.0
      %v1783 = vadd.f32 %v1778, 1.0
      %v1784 = vadd.f32 %v1780, 1.0
      %v1785 = vrcp.pop %v1781
      %v1786 = vmul.f32 1.0, %v1785
      %v1787 = vrcp.pop %v1782
      %v1788 = vmul.f32 1.0, %v1787
      %v1789 = vrcp.pop %v1783
      %v1790 = vmul.f32 1.0, %v1789
      %v1791 = vrcp.pop %v1784
      %v1792 = vmul.f32 1.0, %v1791
      %v1793 = vmul.f32 %v1765, %v1786
      %v1794 = vmul.f32 %v1766, %v1788
      %v1795 = vmul.f32 %v1767, %v1790
      %v1796 = vmul.f32 %v1768, %v1792
      %v1797 = vmul.f32 %v1761, %v1793
      %v1798 = vmul.f32 %v1762, %v1794
      %v1799 = vmul.f32 %v1763, %v1795
      %v1800 = vmul.f32 %v1764, %v1796
      %v1801 = vpack.c.bf16 %v1798, %v1797
      %v1802 = vpack.c.bf16 %v1800, %v1799
      %v1803 = vld [vmem:[%s6] sm:$0xf]
      %v1804 = vld [vmem:[%s6 + $0x4] sm:$0xf]
      %v1805 = vld [vmem:[%s6 + $0x8] sm:$0xf]
      %v1806 = vld [vmem:[%s6 + $0xc] sm:$0xf]
      %v1807 = vld [vmem:[%s306] sm:$0xff]
      %v1808 = vld [vmem:[%s306 + $0x8] sm:$0xff]
      %v1809 = vld [vmem:[%s306 + $0x10] sm:$0xff]
      %v1810 = vld [vmem:[%s306 + $0x18] sm:$0xff]
      %v1815 = vunpack.c.l.b16 %v1803
      %v1816 = vunpack.c.l.b16 %v1804
      %v1817 = vunpack.c.l.b16 %v1805
      %v1818 = vunpack.c.l.b16 %v1806
      %v1819 = vpack.c.b16 %v1816, %v1815
      %v1820 = vpack.c.b16 %v1818, %v1817
      %v1824 = vsel %vm476, %v1801, 0
      %v1827 = vsel %vm476, %v1802, 0
      %1829 = vmatprep.subr.bf16.mxu0 0
      %1830 = vmatpush1.bf16.msra.mxu0 %v1819
      %1831 = vmatprep.subr.bf16.mxu0 0
      %1832 = vmatpush1.bf16.msra.mxu0 %v1820
      %1833 = vmatprep.subr.bf16.mxu0 0
      %1834 = vmatpush1.bf16.msra.mxu0 0
      %1835 = vmatprep.subr.bf16.mxu0 0
      %1836 = vmatpush1.bf16.msra.mxu0 0
      %1837 = vmatprep.subr.bf16.mxu0 0
      %1838 = vmatpush1.bf16.msra.mxu0 0
      %1839 = vmatprep.subr.bf16.mxu0 0
      %1840 = vmatpush1.bf16.msra.mxu0 0
      %1841 = vmatprep.subr.bf16.mxu0 0
      %1842 = vmatpush1.bf16.msra.mxu0 0
      %1843 = vmatprep.subr.bf16.mxu0 0
      %1844 = vmatpush1.bf16.msra.mxu0 0
      %1845 = vmatprep.subr.bf16.mxu0 0
      %1846 = vmatpush1.bf16.msra.mxu0 0
      %1847 = vmatprep.subr.bf16.mxu0 0
      %1848 = vmatpush1.bf16.msra.mxu0 0
      %1849 = vmatprep.subr.bf16.mxu0 0
      %1850 = vmatpush1.bf16.msra.mxu0 0
      %1851 = vmatprep.subr.bf16.mxu0 0
      %1852 = vmatpush1.bf16.msra.mxu0 0
      %1853 = vmatprep.subr.bf16.mxu0 0
      %1854 = vmatpush1.bf16.msra.mxu0 0
      %1855 = vmatprep.subr.bf16.mxu0 0
      %1856 = vmatpush1.bf16.msra.mxu0 0
      %1857 = vmatprep.subr.bf16.mxu0 0
      %1858 = vmatpush1.bf16.msra.mxu0 0
      %1859 = vmatprep.subr.bf16.mxu0 0
      %1860 = vmatpush1.bf16.msra.mxu0 0
      %1861 = vmatprep.mubr.bf16.mxu0 0
      %1862 = vmatmul.mubr.bf16.gmra.mrb[0].mxu0 %v1824
      %v1863 = vpop.f32.mrb[0].mxu0
      %v1864 = vadd.f32 %v1807, %v1863
      %v1865 = vpop.f32.mrb[0].mxu0
      %v1866 = vpop.f32.mrb[0].mxu0
      %v1867 = vadd.f32 %v1808, %v1866
      %v1868 = vpop.f32.mrb[0].mxu0
      %1869 = vmatprep.mubr.bf16.mxu0 0
      %1870 = vmatmul.mubr.bf16.gmra.mrb[0].mxu0 %v1827
      %v1871 = vpop.f32.mrb[0].mxu0
      %v1872 = vadd.f32 %v1809, %v1871
      %v1873 = vpop.f32.mrb[0].mxu0
      %v1874 = vpop.f32.mrb[0].mxu0
      %v1875 = vadd.f32 %v1810, %v1874
      %v1876 = vpop.f32.mrb[0].mxu0
      %1877 = vdwg.mxu0
      %1878 = vst.msk [vmem:[%s316] sm:$0xff] %vm325, %v1864
      %1879 = vst.msk [vmem:[%s316 + $0x8] sm:$0xff] %vm325, %v1867
      %1880 = vst.msk [vmem:[%s316 + $0x10] sm:$0xff] %vm325, %v1872
      %1881 = vst.msk [vmem:[%s316 + $0x18] sm:$0xff] %vm325, %v1875
      %s1882 = smul.u32 4, %s23
      %p1883 = scmp.lt.s32.totalorder %s22, 1
      %s1884 = scalar_select %p1883, %s22, 1
      %p1885 = scmp.lt.s32.totalorder %s1882, 7
      %s1886 = scalar_select %p1885, %s1882, 7
      %s1887 = smul.addr %s1884, 8
      %s1888 = sadd.s32 %s1886, %s1887
      %s1889 = smul.addr %s1888, 8
      %s1890 = scalar_lea.vmem %s7, %s1889
      // Predicated region
      $region68: #{tpu_custom_call.1} parent=47 // pred_check
        %p1891 = pneg %p204
      $region69: #{tpu_custom_call.1} parent=47 // pred_check_branch
        %1893 = sbr.rel (%p1891) target = $region71
      $region70: #{tpu_custom_call.1} parent=47 // pred_region
        %s1894 = smul.u32 4, %s23
      $region71: #{tpu_custom_call.1} parent=47 // pred_fallthru
        _
    $region48: #{tpu_custom_call.1} parent=5 // pred_fallthru
      _
    %p1895 = scmp.le.s32.totalorder 2, %s13
    // Predicated region
    $region72: #{tpu_custom_call.1} parent=5 // pred_check
      %p1896 = pneg %p1895
    $region73: #{tpu_custom_call.1} parent=5 // pred_check_branch
      %1898 = sbr.rel (%p1896) target = $region75
    $region74: #{tpu_custom_call.1} parent=5 // pred_region
      %s1899 = ssub.s32 %s13, 2
      // Predicated region
      $region76: #{tpu_custom_call.1} parent=74 // pred_check
        %p1900 = pneg %p210
      $region77: #{tpu_custom_call.1} parent=74 // pred_check_branch
        %1902 = sbr.rel (%p1900) target = $region79
      $region78: #{tpu_custom_call.1} parent=74 // pred_region
        %s1903 = smul.u32 4, %s25
        %p1904 = scmp.lt.s32.totalorder %s24, 1
        %s1905 = scalar_select %p1904, %s24, 1
        %p1906 = scmp.lt.s32.totalorder %s1903, 7
        %s1907 = scalar_select %p1906, %s1903, 7
        %s1908 = smul.addr %s1905, 8
        %s1909 = sadd.s32 %s1907, %s1908
        %s1910 = smul.addr %s1909, 8
        %s1911 = scalar_lea.vmem %s7, %s1910
      $region79: #{tpu_custom_call.1} parent=74 // pred_fallthru
        _
    $region75: #{tpu_custom_call.1} parent=5 // pred_fallthru
      _
  $region6: #{tpu_custom_call.1} parent=0 // loop_footer
    %s17 = sadd.s32 1, %s13
  $region7: #{tpu_custom_call.1} parent=0 // loop_footer_branch
    %12 = sbr.rel target = $region3
  $region8: #{tpu_custom_call.1} parent=0 // loop_exit
    _

// kernel: tpu_custom_call.1
$region0: #{tpu_custom_call.1}
  #allocation0 [shape = 'u32[]', space=smem, size = 0x4, offset = 0x4, fixed_abs, tag = 'smem constant byte address 0x4 - core index']
  #allocation1 [shape = 'u32[144,128]{1,0:T(1,128)}', space=vmem, size = 0x12000, scoped, tag = 'internal scratch']
  #allocation2 [shape = 'f32[40,32]{1,0:T(8,128)}', space=vmem, size = 0x5000, scoped, tag = 'scratch operand']
  #allocation3 [shape = 'f32[32,32]{1,0:T(8,128)}', space=vmem, size = 0x4000, scoped, tag = 'scratch operand']
  #allocation4 [shape = 'f32[32,32]{1,0:T(8,128)}', space=vmem, size = 0x4000, scoped, tag = 'scratch operand']
  #allocation5 [shape = 'f32[32,32]{1,0:T(8,128)}', space=vmem, size = 0x4000, scoped, tag = 'scratch operand']
  #allocation6 [shape = 'f32[32,32]{1,0:T(8,128)}', space=vmem, size = 0x4000, scoped, tag = 'scratch operand']
  #allocation7 [shape = 'f32[32,32]{1,0:T(8,128)}', space=vmem, size = 0x4000, scoped, tag = 'scratch operand']
  #allocation8 [shape = 'f32[16,32]{1,0:T(8,128)}', space=vmem, size = 0x2000, scoped, tag = 'scratch operand']
  %s0 = inlined_call_operand.vmem [shape: f32[2,64,16], index: 0, kind: input, shape index: {}]
  %s1 = inlined_call_operand.vmem [shape: f32[2,16], index: 1, kind: input, shape index: {}]
  %s2 = inlined_call_operand.vmem [shape: bf16[16,64], index: 2, kind: input, shape index: {}]
  %s3 = inlined_call_operand.vmem [shape: f32[23,32], index: 3, kind: input, shape index: {}]
  %s4 = inlined_call_operand.vmem [shape: bf16[32,40], index: 4, kind: input, shape index: {}]
  %s5 = inlined_call_operand.vmem [shape: bf16[8,32], index: 5, kind: input, shape index: {}]
  %s6 = inlined_call_operand.vmem [shape: bf16[32,16], index: 6, kind: input, shape index: {}]
  %s7 = inlined_call_operand.vmem [shape: f32[2,64,16], index: 7, kind: output, shape index: {}]
  %s8 = sld [smem:[#allocation0]]
  $region80: #{tpu_custom_call.1} parent=0
    _
  %s10 = ssub.s32 1, %s8
  %s11 = scalar_select 0, %s10, %s8
  loop: start=0, step=1, limit=6
  $region2: #{tpu_custom_call.1} parent=0 // loop_pre_header
    _
  $region3: #{tpu_custom_call.1} parent=0 // loop_header
    %s13 = sphi 0, %s17
    %p14 = scmp.ge.s32.totalorder %s13, 6
    %s20 = sphi 0, %s32
    %s21 = sphi 0, %s28
    %s22 = sphi 0, %s20
    %s23 = sphi 0, %s21
    %s24 = sphi 0, %s22
    %s25 = sphi 0, %s23
    %s37 = sphi 0, %s39
    %s40 = sphi 0, %s37
    %s41 = sphi 0, %s40
    %s57 = sphi 0, %s41
    %s61 = sphi 0, %s61
    %s63 = sphi 0, %s61
    %s64 = sphi 0, %s63
    %s78 = sphi 0, %s64
    %s82 = sphi 0, %s82
    %s84 = sphi 0, %s82
    %s85 = sphi 0, %s84
    %s99 = sphi 0, %s85
    %s103 = sphi 0, %s103
    %s105 = sphi 0, %s103
    %s106 = sphi 0, %s105
    %s120 = sphi 0, %s106
    %s124 = sphi 0, %s124
    %s126 = sphi 0, %s124
    %s127 = sphi 0, %s126
    %s141 = sphi 0, %s127
    %s145 = sphi 0, %s145
    %s147 = sphi 0, %s145
    %s148 = sphi 0, %s147
    %s162 = sphi 0, %s148
    %s166 = sphi 0, %s166
    %s168 = sphi 0, %s166
    %s169 = sphi 0, %s168
    %s183 = sphi 0, %s169
    %s191 = sphi 0, %s193
    %s194 = sphi 0, %s191
    %s195 = sphi 0, %s194
    %s211 = sphi 0, %s195
  $region4: #{tpu_custom_call.1} parent=0 // loop_header_branch
    %16 = sbr.rel (%p14) target = $region8
  $region5: #{tpu_custom_call.1} parent=0 // loop_body
    %s18 = ssub.s32 %s13, 1
    %s19 = ssub.s32 %s13, 2
    %s26 = sadd.s32 1, %s21
    %p27 = scmp.ge.s32.totalorder %s26, 2
    %s28 = scalar_select %p27, 0, %s26
    %s29 = sadd.s32 1, %s20
    %s30 = scalar_select %p27, %s29, %s20
    %p31 = scmp.ge.s32.totalorder %s30, 2
    %s32 = scalar_select %p31, 0, %s30
    %s33 = ssub.s32 %s20, %s32
    %s34 = ssub.s32 %s21, %s28
    %s35 = sor.u32 %s33, %s34
    %p36 = scmp.eq.s32.totalorder %s35, 0
    %s38 = sadd.s32 %s37, 1
    %s39 = scalar_select %p36, %s37, %s38
    %p42 = pneg %p36
    %p43 = scmp.eq.s32.totalorder %s13, 3
    %p44 = por %p42, %p43
    %p45 = scmp.ne.s32.totalorder %s37, %s40
    %p46 = scmp.eq.s32.totalorder %s13, 0
    %p47 = por %p45, %p46
    %p48 = scmp.ne.s32.totalorder %s37, %s40
    %p49 = scmp.eq.s32.totalorder %s18, 3
    %p50 = por %p48, %p49
    %p51 = scmp.ne.s32.totalorder %s40, %s41
    %p52 = scmp.eq.s32.totalorder %s18, 0
    %p53 = por %p51, %p52
    %p54 = scmp.ne.s32.totalorder %s40, %s41
    %p55 = scmp.eq.s32.totalorder %s19, 3
    %p56 = por %p54, %p55
    %p58 = scmp.ne.s32.totalorder %s41, %s57
    %p59 = scmp.eq.s32.totalorder %s19, 0
    %p60 = por %p58, %p59
    %s62 = sadd.s32 %s61, 1
    %p65 = scmp.eq.s32.totalorder %s13, 3
    %p66 = scmp.ne.s32.totalorder %s61, %s63
    %p67 = scmp.eq.s32.totalorder %s13, 0
    %p68 = por %p66, %p67
    %p69 = scmp.ne.s32.totalorder %s61, %s63
    %p70 = scmp.eq.s32.totalorder %s18, 3
    %p71 = por %p69, %p70
    %p72 = scmp.ne.s32.totalorder %s63, %s64
    %p73 = scmp.eq.s32.totalorder %s18, 0
    %p74 = por %p72, %p73
    %p75 = scmp.ne.s32.totalorder %s63, %s64
    %p76 = scmp.eq.s32.totalorder %s19, 3
    %p77 = por %p75, %p76
    %p79 = scmp.ne.s32.totalorder %s64, %s78
    %p80 = scmp.eq.s32.totalorder %s19, 0
    %p81 = por %p79, %p80
    %s83 = sadd.s32 %s82, 1
    %p86 = scmp.eq.s32.totalorder %s13, 3
    %p87 = scmp.ne.s32.totalorder %s82, %s84
    %p88 = scmp.eq.s32.totalorder %s13, 0
    %p89 = por %p87, %p88
    %p90 = scmp.ne.s32.totalorder %s82, %s84
    %p91 = scmp.eq.s32.totalorder %s18, 3
    %p92 = por %p90, %p91
    %p93 = scmp.ne.s32.totalorder %s84, %s85
    %p94 = scmp.eq.s32.totalorder %s18, 0
    %p95 = por %p93, %p94
    %p96 = scmp.ne.s32.totalorder %s84, %s85
    %p97 = scmp.eq.s32.totalorder %s19, 3
    %p98 = por %p96, %p97
    %p100 = scmp.ne.s32.totalorder %s85, %s99
    %p101 = scmp.eq.s32.totalorder %s19, 0
    %p102 = por %p100, %p101
    %s104 = sadd.s32 %s103, 1
    %p107 = scmp.eq.s32.totalorder %s13, 3
    %p108 = scmp.ne.s32.totalorder %s103, %s105
    %p109 = scmp.eq.s32.totalorder %s13, 0
    %p110 = por %p108, %p109
    %p111 = scmp.ne.s32.totalorder %s103, %s105
    %p112 = scmp.eq.s32.totalorder %s18, 3
    %p113 = por %p111, %p112
    %p114 = scmp.ne.s32.totalorder %s105, %s106
    %p115 = scmp.eq.s32.totalorder %s18, 0
    %p116 = por %p114, %p115
    %p117 = scmp.ne.s32.totalorder %s105, %s106
    %p118 = scmp.eq.s32.totalorder %s19, 3
    %p119 = por %p117, %p118
    %p121 = scmp.ne.s32.totalorder %s106, %s120
    %p122 = scmp.eq.s32.totalorder %s19, 0
    %p123 = por %p121, %p122
    %s125 = sadd.s32 %s124, 1
    %p128 = scmp.eq.s32.totalorder %s13, 3
    %p129 = scmp.ne.s32.totalorder %s124, %s126
    %p130 = scmp.eq.s32.totalorder %s13, 0
    %p131 = por %p129, %p130
    %p132 = scmp.ne.s32.totalorder %s124, %s126
    %p133 = scmp.eq.s32.totalorder %s18, 3
    %p134 = por %p132, %p133
    %p135 = scmp.ne.s32.totalorder %s126, %s127
    %p136 = scmp.eq.s32.totalorder %s18, 0
    %p137 = por %p135, %p136
    %p138 = scmp.ne.s32.totalorder %s126, %s127
    %p139 = scmp.eq.s32.totalorder %s19, 3
    %p140 = por %p138, %p139
    %p142 = scmp.ne.s32.totalorder %s127, %s141
    %p143 = scmp.eq.s32.totalorder %s19, 0
    %p144 = por %p142, %p143
    %s146 = sadd.s32 %s145, 1
    %p149 = scmp.eq.s32.totalorder %s13, 3
    %p150 = scmp.ne.s32.totalorder %s145, %s147
    %p151 = scmp.eq.s32.totalorder %s13, 0
    %p152 = por %p150, %p151
    %p153 = scmp.ne.s32.totalorder %s145, %s147
    %p154 = scmp.eq.s32.totalorder %s18, 3
    %p155 = por %p153, %p154
    %p156 = scmp.ne.s32.totalorder %s147, %s148
    %p157 = scmp.eq.s32.totalorder %s18, 0
    %p158 = por %p156, %p157
    %p159 = scmp.ne.s32.totalorder %s147, %s148
    %p160 = scmp.eq.s32.totalorder %s19, 3
    %p161 = por %p159, %p160
    %p163 = scmp.ne.s32.totalorder %s148, %s162
    %p164 = scmp.eq.s32.totalorder %s19, 0
    %p165 = por %p163, %p164
    %s167 = sadd.s32 %s166, 1
    %p170 = scmp.eq.s32.totalorder %s13, 3
    %p171 = scmp.ne.s32.totalorder %s166, %s168
    %p172 = scmp.eq.s32.totalorder %s13, 0
    %p173 = por %p171, %p172
    %p174 = scmp.ne.s32.totalorder %s166, %s168
    %p175 = scmp.eq.s32.totalorder %s18, 3
    %p176 = por %p174, %p175
    %p177 = scmp.ne.s32.totalorder %s168, %s169
    %p178 = scmp.eq.s32.totalorder %s18, 0
    %p179 = por %p177, %p178
    %p180 = scmp.ne.s32.totalorder %s168, %s169
    %p181 = scmp.eq.s32.totalorder %s19, 3
    %p182 = por %p180, %p181
    %p184 = scmp.ne.s32.totalorder %s169, %s183
    %p185 = scmp.eq.s32.totalorder %s19, 0
    %p186 = por %p184, %p185
    %s187 = ssub.s32 %s20, %s32
    %s188 = ssub.s32 %s21, %s28
    %s189 = sor.u32 %s187, %s188
    %p190 = scmp.eq.s32.totalorder %s189, 0
    %s192 = sadd.s32 %s191, 1
    %s193 = scalar_select %p190, %s191, %s192
    %p196 = pneg %p190
    %p197 = scmp.eq.s32.totalorder %s13, 3
    %p198 = por %p196, %p197
    %p199 = scmp.ne.s32.totalorder %s191, %s194
    %p200 = scmp.eq.s32.totalorder %s13, 0
    %p201 = por %p199, %p200
    %p202 = scmp.ne.s32.totalorder %s191, %s194
    %p203 = scmp.eq.s32.totalorder %s18, 3
    %p204 = por %p202, %p203
    %p205 = scmp.ne.s32.totalorder %s194, %s195
    %p206 = scmp.eq.s32.totalorder %s18, 0
    %p207 = por %p205, %p206
    %p208 = scmp.ne.s32.totalorder %s194, %s195
    %p209 = scmp.eq.s32.totalorder %s19, 3
    %p210 = por %p208, %p209
    %p212 = scmp.ne.s32.totalorder %s195, %s211
    %p213 = scmp.eq.s32.totalorder %s19, 0
    %p214 = por %p212, %p213
    %p215 = scmp.le.s32.totalorder 1, %s13
    %p216 = scmp.lt.s32.totalorder %s13, 5
    %p217 = pnand %p215, %p216
    %p218 = pneg %p217
    // Predicated region
    $region9: #{tpu_custom_call.1} parent=5 // pred_check
      _
    $region10: #{tpu_custom_call.1} parent=5 // pred_check_branch
      %220 = sbr.rel (%p217) target = $region12
    $region11: #{tpu_custom_call.1} parent=5 // pred_region
      %s221 = ssub.s32 %s13, 1
      // Predicated region
      $region13: #{tpu_custom_call.1} parent=11 // pred_check
        %p222 = pneg %p74
      $region14: #{tpu_custom_call.1} parent=11 // pred_check_branch
        %224 = sbr.rel (%p222) target = $region16
      $region15: #{tpu_custom_call.1} parent=11 // pred_region
        _
      $region16: #{tpu_custom_call.1} parent=11 // pred_fallthru
        _
      // Predicated region
      $region17: #{tpu_custom_call.1} parent=11 // pred_check
        %p225 = pneg %p95
      $region18: #{tpu_custom_call.1} parent=11 // pred_check_branch
        %227 = sbr.rel (%p225) target = $region20
      $region19: #{tpu_custom_call.1} parent=11 // pred_region
        _
      $region20: #{tpu_custom_call.1} parent=11 // pred_fallthru
        _
      // Predicated region
      $region21: #{tpu_custom_call.1} parent=11 // pred_check
        %p228 = pneg %p116
      $region22: #{tpu_custom_call.1} parent=11 // pred_check_branch
        %230 = sbr.rel (%p228) target = $region24
      $region23: #{tpu_custom_call.1} parent=11 // pred_region
        _
      $region24: #{tpu_custom_call.1} parent=11 // pred_fallthru
        _
      // Predicated region
      $region25: #{tpu_custom_call.1} parent=11 // pred_check
        %p231 = pneg %p137
      $region26: #{tpu_custom_call.1} parent=11 // pred_check_branch
        %233 = sbr.rel (%p231) target = $region28
      $region27: #{tpu_custom_call.1} parent=11 // pred_region
        _
      $region28: #{tpu_custom_call.1} parent=11 // pred_fallthru
        _
      // Predicated region
      $region29: #{tpu_custom_call.1} parent=11 // pred_check
        %p234 = pneg %p158
      $region30: #{tpu_custom_call.1} parent=11 // pred_check_branch
        %236 = sbr.rel (%p234) target = $region32
      $region31: #{tpu_custom_call.1} parent=11 // pred_region
        _
      $region32: #{tpu_custom_call.1} parent=11 // pred_fallthru
        _
      // Predicated region
      $region33: #{tpu_custom_call.1} parent=11 // pred_check
        %p237 = pneg %p179
      $region34: #{tpu_custom_call.1} parent=11 // pred_check_branch
        %239 = sbr.rel (%p237) target = $region36
      $region35: #{tpu_custom_call.1} parent=11 // pred_region
        _
      $region36: #{tpu_custom_call.1} parent=11 // pred_fallthru
        _
    $region12: #{tpu_custom_call.1} parent=5 // pred_fallthru
      _
    %p240 = scmp.lt.s32.totalorder %s13, 4
    // Predicated region
    $region37: #{tpu_custom_call.1} parent=5 // pred_check
      %p241 = pneg %p240
    $region38: #{tpu_custom_call.1} parent=5 // pred_check_branch
      %243 = sbr.rel (%p241) target = $region40
    $region39: #{tpu_custom_call.1} parent=5 // pred_region
      // Predicated region
      $region41: #{tpu_custom_call.1} parent=39 // pred_check
        %p244 = pneg %p47
      $region42: #{tpu_custom_call.1} parent=39 // pred_check_branch
        %246 = sbr.rel (%p244) target = $region44
      $region43: #{tpu_custom_call.1} parent=39 // pred_region
        %s247 = smul.u32 4, %s21
        %p248 = scmp.lt.s32.totalorder %s20, 1
        %s249 = scalar_select %p248, %s20, 1
        %p250 = scmp.lt.s32.totalorder %s247, 7
        %s251 = scalar_select %p250, %s247, 7
        %s252 = smul.addr %s249, 8
        %s253 = sadd.s32 %s251, %s252
        %s254 = smul.addr %s253, 8
        %s255 = scalar_lea.vmem %s0, %s254
        %s256 = smul.u32 4, %s21
      $region44: #{tpu_custom_call.1} parent=39 // pred_fallthru
        _
    $region40: #{tpu_custom_call.1} parent=5 // pred_fallthru
      _
    %p257 = scmp.le.s32.totalorder 1, %s13
    %p258 = scmp.lt.s32.totalorder %s13, 5
    %p259 = pnand %p257, %p258
    %p260 = pneg %p259
    // Predicated region
    $region45: #{tpu_custom_call.1} parent=5 // pred_check
      _
    $region46: #{tpu_custom_call.1} parent=5 // pred_check_branch
      %262 = sbr.rel (%p259) target = $region48
    $region47: #{tpu_custom_call.1} parent=5 // pred_region
      %s263 = ssub.s32 %s13, 1
      %s264 = smul.u32 4, %s23
      %p265 = scmp.lt.s32.totalorder %s22, 1
      %s266 = scalar_select %p265, %s22, 1
      %p267 = scmp.lt.s32.totalorder %s264, 7
      %s268 = scalar_select %p267, %s264, 7
      %s269 = smul.addr %s266, 8
      %s270 = sadd.s32 %s268, %s269
      %s271 = smul.addr %s270, 8
      %s272 = scalar_lea.vmem %s0, %s271
      %p273 = pneg %p53
      %p274 = pneg %p50
      %p275 = pneg %p74
      %p276 = pneg %p71
      %p277 = pneg %p95
      %p278 = pneg %p92
      %p279 = pneg %p116
      %p280 = pneg %p113
      %p281 = pneg %p137
      %p282 = pneg %p134
      %p283 = pneg %p158
      %p284 = pneg %p155
      %p285 = pneg %p179
      %p286 = pneg %p176
      %p287 = pneg %p207
      %p288 = pneg %p204
      %s289 = smul.u32 4, %s23
      %p290 = scmp.lt.s32.totalorder %s22, 1
      %s291 = scalar_select %p290, %s22, 1
      %p292 = scmp.lt.s32.totalorder %s289, 7
      %s293 = scalar_select %p292, %s289, 7
      %s294 = smul.addr %s291, 8
      %s295 = sadd.s32 %s293, %s294
      %s296 = smul.addr %s295, 8
      %s297 = scalar_lea.vmem %s7, %s296
      %s298 = smul.u32 4, %s23
      %p299 = scmp.lt.s32.totalorder %s22, 1
      %s300 = scalar_select %p299, %s22, 1
      %p301 = scmp.lt.s32.totalorder %s298, 7
      %s302 = scalar_select %p301, %s298, 7
      %s303 = smul.addr %s300, 8
      %s304 = sadd.s32 %s302, %s303
      %s305 = smul.addr %s304, 8
      %s306 = scalar_lea.vmem %s0, %s305
      %s307 = smul.u32 4, %s23
      %s308 = smul.u32 4, %s23
      %p309 = scmp.lt.s32.totalorder %s22, 1
      %s310 = scalar_select %p309, %s22, 1
      %p311 = scmp.lt.s32.totalorder %s308, 7
      %s312 = scalar_select %p311, %s308, 7
      %s313 = smul.addr %s310, 8
      %s314 = sadd.s32 %s312, %s313
      %s315 = smul.addr %s314, 8
      %s316 = scalar_lea.vmem %s7, %s315
      %s317 = smul.u32 4, %s23
      %v319 = vld [vmem:[%s306] sm:$0xff]
      %v320 = vld [vmem:[%s306 + $0x8] sm:$0xff]
      %v321 = vld [vmem:[%s306 + $0x10] sm:$0xff]
      %v322 = vld [vmem:[%s306 + $0x18] sm:$0xff]
      %v323 = vld [vmem:[%s1] sm:$0x1]
      %v324 = vld [vmem:[%s1 + $0x1] sm:$0x1]
      %vm325 = vcmask 130048
      %v326 = vsel %vm325, %v319, 0.0
      %327 = vadd.xlane.f32.xlu0 %v326
      %v328 = vpop.xlane.xlu0 %327
      %v329 = vsel %vm325, %v320, 0.0
      %330 = vadd.xlane.f32.xlu0 %v329
      %v331 = vpop.xlane.xlu0 %330
      %v332 = vsel %vm325, %v321, 0.0
      %333 = vadd.xlane.f32.xlu0 %v332
      %v334 = vpop.xlane.xlu0 %333
      %v335 = vsel %vm325, %v322, 0.0
      %336 = vadd.xlane.f32.xlu0 %v335
      %v337 = vpop.xlane.xlu0 %336
      %v338 = vrcp.pop 16.0
      %v339 = vmul.f32 %v328, %v338
      %v340 = vmul.f32 %v331, %v338
      %v341 = vmul.f32 %v334, %v338
      %v342 = vmul.f32 %v337, %v338
      %v343 = vsub.f32 %v319, %v339
      %v344 = vsub.f32 %v320, %v340
      %v345 = vsub.f32 %v321, %v341
      %v346 = vsub.f32 %v322, %v342
      %v347 = vmul.f32 %v343, %v343
      %v348 = vmul.f32 %v344, %v344
      %v349 = vmul.f32 %v345, %v345
      %v350 = vmul.f32 %v346, %v346
      %v351 = vsel %vm325, %v347, 0.0
      %352 = vadd.xlane.f32.xlu0 %v351
      %v353 = vpop.xlane.xlu0 %352
      %v354 = vsel %vm325, %v348, 0.0
      %355 = vadd.xlane.f32.xlu0 %v354
      %v356 = vpop.xlane.xlu0 %355
      %v357 = vsel %vm325, %v349, 0.0
      %358 = vadd.xlane.f32.xlu0 %v357
      %v359 = vpop.xlane.xlu0 %358
      %v360 = vsel %vm325, %v350, 0.0
      %361 = vadd.xlane.f32.xlu0 %v360
      %v362 = vpop.xlane.xlu0 %361
      %v363 = vmul.f32 %v353, %v338
      %v364 = vmul.f32 %v356, %v338
      %v365 = vmul.f32 %v359, %v338
      %v366 = vmul.f32 %v362, %v338
      %v367 = vadd.f32 %v363, 1e-05
      %v368 = vadd.f32 %v364, 1e-05
      %v369 = vadd.f32 %v365, 1e-05
      %v370 = vadd.f32 %v366, 1e-05
      %v371 = vrsqrt.pop %v367
      %v372 = vrsqrt.pop %v368
      %v373 = vrsqrt.pop %v369
      %v374 = vrsqrt.pop %v370
      %v375 = vmul.f32 %v343, %v371
      %v376 = vmul.f32 %v344, %v372
      %v377 = vmul.f32 %v345, %v373
      %v378 = vmul.f32 %v346, %v374
      %v379 = vlaneseq
      %v380 = vshrl.u32 %v379, 7
      %v381 = vsub.s32 0, %v380
      %v382 = vrot.slane %v323, %v381
      %v383 = vmul.f32 %v375, %v382
      %v384 = vmul.f32 %v376, %v382
      %v385 = vmul.f32 %v377, %v382
      %v386 = vmul.f32 %v378, %v382
      %v387 = vlaneseq
      %v388 = vshrl.u32 %v387, 7
      %v389 = vsub.s32 0, %v388
      %v390 = vrot.slane %v324, %v389
      %v391 = vadd.f32 %v383, %v390
      %v392 = vadd.f32 %v384, %v390
      %v393 = vadd.f32 %v385, %v390
      %v394 = vadd.f32 %v386, %v390
      %v395 = vpack.c.bf16 %v392, %v391
      %v396 = vpack.c.bf16 %v394, %v393
      %v397 = vld [vmem:[%s2] sm:$0xf]
      %v398 = vld [vmem:[%s2 + $0x4] sm:$0xf]
      %v401 = vunpack.c.l.b16 %v397
      %v402 = vunpack.c.l.b16 %v398
      %v403 = vpack.c.b16 %v402, %v401
      %v406 = vsel %vm325, %v395, 0
      %v409 = vsel %vm325, %v396, 0
      %411 = vmatprep.subr.bf16.mxu0 0
      %412 = vmatpush1.bf16.msra.mxu0 %v403
      %413 = vmatprep.subr.bf16.mxu0 0
      %414 = vmatpush1.bf16.msra.mxu0 0
      %415 = vmatprep.subr.bf16.mxu0 0
      %416 = vmatpush1.bf16.msra.mxu0 0
      %417 = vmatprep.subr.bf16.mxu0 0
      %418 = vmatpush1.bf16.msra.mxu0 0
      %419 = vmatprep.subr.bf16.mxu0 0
      %420 = vmatpush1.bf16.msra.mxu0 0
      %421 = vmatprep.subr.bf16.mxu0 0
      %422 = vmatpush1.bf16.msra.mxu0 0
      %423 = vmatprep.subr.bf16.mxu0 0
      %424 = vmatpush1.bf16.msra.mxu0 0
      %425 = vmatprep.subr.bf16.mxu0 0
      %426 = vmatpush1.bf16.msra.mxu0 0
      %427 = vmatprep.subr.bf16.mxu0 0
      %428 = vmatpush1.bf16.msra.mxu0 0
      %429 = vmatprep.subr.bf16.mxu0 0
      %430 = vmatpush1.bf16.msra.mxu0 0
      %431 = vmatprep.subr.bf16.mxu0 0
      %432 = vmatpush1.bf16.msra.mxu0 0
      %433 = vmatprep.subr.bf16.mxu0 0
      %434 = vmatpush1.bf16.msra.mxu0 0
      %435 = vmatprep.subr.bf16.mxu0 0
      %436 = vmatpush1.bf16.msra.mxu0 0
      %437 = vmatprep.subr.bf16.mxu0 0
      %438 = vmatpush1.bf16.msra.mxu0 0
      %439 = vmatprep.subr.bf16.mxu0 0
      %440 = vmatpush1.bf16.msra.mxu0 0
      %441 = vmatprep.subr.bf16.mxu0 0
      %442 = vmatpush1.bf16.msra.mxu0 0
      %443 = vmatprep.mubr.bf16.mxu0 0
      %444 = vmatmul.mubr.bf16.gmra.mrb[0].mxu0 %v406
      %v445 = vpop.f32.mrb[0].mxu0
      %v446 = vadd.f32 0.0, %v445
      %v447 = vpop.f32.mrb[0].mxu0
      %v448 = vpop.f32.mrb[0].mxu0
      %v449 = vadd.f32 0.0, %v448
      %v450 = vpop.f32.mrb[0].mxu0
      %451 = vmatprep.mubr.bf16.mxu0 0
      %452 = vmatmul.mubr.bf16.gmra.mrb[0].mxu0 %v409
      %v453 = vpop.f32.mrb[0].mxu0
      %v454 = vadd.f32 0.0, %v453
      %v455 = vpop.f32.mrb[0].mxu0
      %v456 = vpop.f32.mrb[0].mxu0
      %v457 = vadd.f32 0.0, %v456
      %v458 = vpop.f32.mrb[0].mxu0
      %459 = vdwg.mxu0
      %464 = vrot.lane.b32.xlu0 %v446, 96
      %v465 = vpop.permute.xlu0 %464
      %466 = vrot.lane.b32.xlu0 %v449, 96
      %v467 = vpop.permute.xlu0 %466
      %468 = vrot.lane.b32.xlu0 %v454, 96
      %v469 = vpop.permute.xlu0 %468
      %470 = vrot.lane.b32.xlu0 %v457, 96
      %v471 = vpop.permute.xlu0 %470
      %vm476 = vcmask 261120
      %477 = vst.msk [vmem:[#allocation5] sm:$0xff] %vm476, %v465
      %478 = vst.msk [vmem:[#allocation5 + $0x8] sm:$0xff] %vm476, %v467
      %479 = vst.msk [vmem:[#allocation5 + $0x10] sm:$0xff] %vm476, %v469
      %480 = vst.msk [vmem:[#allocation5 + $0x18] sm:$0xff] %vm476, %v471
      %p481 = scmp.eq.s32.totalorder %s23, 0
      // Predicated region
      $region49: #{tpu_custom_call.1} parent=47 // pred_check
        %p482 = pneg %p481
      $region50: #{tpu_custom_call.1} parent=47 // pred_check_branch
        %484 = sbr.rel (%p482) target = $region52
      $region51: #{tpu_custom_call.1} parent=47 // pred_region
        %vm485 = vcmask 256000
        %486 = vst.msk [vmem:[#allocation2 + $0x5] sm:$0x7] %vm485, 0.0
      $region52: #{tpu_custom_call.1} parent=47 // pred_fallthru
        _
      %p487 = scmp.gt.s32.totalorder %s23, 0
      // Predicated region
      $region53: #{tpu_custom_call.1} parent=47 // pred_check
        %p488 = pneg %p487
      $region54: #{tpu_custom_call.1} parent=47 // pred_check_branch
        %490 = sbr.rel (%p488) target = $region56
      $region55: #{tpu_custom_call.1} parent=47 // pred_region
        %v491 = vld [vmem:[#allocation2 + $0x25] sm:$0x7]
        %vm492 = vcmask 256000
        %493 = vst.msk [vmem:[#allocation2 + $0x5] sm:$0x7] %vm492, %v491
      $region56: #{tpu_custom_call.1} parent=47 // pred_fallthru
        _
      %494 = vst.msk [vmem:[#allocation2 + $0x8] sm:$0xff] %vm476, %v446
      %495 = vst.msk [vmem:[#allocation2 + $0x10] sm:$0xff] %vm476, %v449
      %496 = vst.msk [vmem:[#allocation2 + $0x18] sm:$0xff] %vm476, %v454
      %497 = vst.msk [vmem:[#allocation2 + $0x20] sm:$0xff] %vm476, %v457
      %v498 = vld [vmem:[%s3 + $0x10] sm:$0xf]
      %v499 = vld [vmem:[#allocation2 + $0x5] sm:$0xff]
      %v500 = vld [vmem:[#allocation2 + $0xd] sm:$0xff]
      %v501 = vld [vmem:[#allocation2 + $0x15] sm:$0xff]
      %v502 = vld [vmem:[#allocation2 + $0x1d] sm:$0xff]
      %v503 = vlaneseq
      %v504 = vshrl.u32 %v503, 7
      %v505 = vsub.s32 0, %v504
      %v506 = vrot.slane %v498, %v505
      %v507 = vmul.f32 %v499, %v506
      %v508 = vmul.f32 %v500, %v506
      %v509 = vmul.f32 %v501, %v506
      %v510 = vmul.f32 %v502, %v506
      %v511 = vadd.f32 %v507, 0.0
      %v512 = vadd.f32 %v508, 0.0
      %v513 = vadd.f32 %v509, 0.0
      %v514 = vadd.f32 %v510, 0.0
      %v515 = vld [vmem:[#allocation2 + $0x6] sm:$0xff]
      %v516 = vld [vmem:[#allocation2 + $0xe] sm:$0xff]
      %v517 = vld [vmem:[#allocation2 + $0x16] sm:$0xff]
      %v518 = vld [vmem:[#allocation2 + $0x1e] sm:$0xff]
      %v519 = vlaneseq
      %v520 = vshrl.u32 %v519, 7
      %v521 = vsub.s32 1, %v520
      %v522 = vrot.slane %v498, %v521
      %v523 = vmul.f32 %v515, %v522
      %v524 = vmul.f32 %v516, %v522
      %v525 = vmul.f32 %v517, %v522
      %v526 = vmul.f32 %v518, %v522
      %v527 = vadd.f32 %v511, %v523
      %v528 = vadd.f32 %v512, %v524
      %v529 = vadd.f32 %v513, %v525
      %v530 = vadd.f32 %v514, %v526
      %v531 = vld [vmem:[#allocation2 + $0x7] sm:$0xff]
      %v532 = vld [vmem:[#allocation2 + $0xf] sm:$0xff]
      %v533 = vld [vmem:[#allocation2 + $0x17] sm:$0xff]
      %v534 = vld [vmem:[#allocation2 + $0x1f] sm:$0xff]
      %v535 = vlaneseq
      %v536 = vshrl.u32 %v535, 7
      %v537 = vsub.s32 2, %v536
      %v538 = vrot.slane %v498, %v537
      %v539 = vmul.f32 %v531, %v538
      %v540 = vmul.f32 %v532, %v538
      %v541 = vmul.f32 %v533, %v538
      %v542 = vmul.f32 %v534, %v538
      %v543 = vadd.f32 %v527, %v539
      %v544 = vadd.f32 %v528, %v540
      %v545 = vadd.f32 %v529, %v541
      %v546 = vadd.f32 %v530, %v542
      %v547 = vld [vmem:[#allocation2 + $0x8] sm:$0xff]
      %v548 = vld [vmem:[#allocation2 + $0x10] sm:$0xff]
      %v549 = vld [vmem:[#allocation2 + $0x18] sm:$0xff]
      %v550 = vld [vmem:[#allocation2 + $0x20] sm:$0xff]
      %v551 = vlaneseq
      %v552 = vshrl.u32 %v551, 7
      %v553 = vsub.s32 3, %v552
      %v554 = vrot.slane %v498, %v553
      %v555 = vmul.f32 %v547, %v554
      %v556 = vmul.f32 %v548, %v554
      %v557 = vmul.f32 %v549, %v554
      %v558 = vmul.f32 %v550, %v554
      %v559 = vadd.f32 %v543, %v555
      %v560 = vadd.f32 %v544, %v556
      %v561 = vadd.f32 %v545, %v557
      %v562 = vadd.f32 %v546, %v558
      %v563 = vld [vmem:[%s3 + $0x14] sm:$0x1]
      %v564 = vlaneseq
      %v565 = vshrl.u32 %v564, 7
      %v566 = vsub.s32 0, %v565
      %v567 = vrot.slane %v563, %v566
      %v568 = vadd.f32 %v559, %v567
      %v569 = vadd.f32 %v560, %v567
      %v570 = vadd.f32 %v561, %v567
      %v571 = vadd.f32 %v562, %v567
      %v572 = vsub.f32 0.0, %v568
      %v573 = vsub.f32 0.0, %v569
      %v574 = vsub.f32 0.0, %v570
      %v575 = vsub.f32 0.0, %v571
      %v576 = vmul.f32 %v572, 1.442695
      %v577 = vpow.pop %v576
      %v578 = vmul.f32 %v573, 1.442695
      %v579 = vpow.pop %v578
      %v580 = vmul.f32 %v574, 1.442695
      %v581 = vpow.pop %v580
      %v582 = vmul.f32 %v575, 1.442695
      %v583 = vpow.pop %v582
      %v584 = vadd.f32 %v577, 1.0
      %v585 = vadd.f32 %v579, 1.0
      %v586 = vadd.f32 %v581, 1.0
      %v587 = vadd.f32 %v583, 1.0
      %v588 = vrcp.pop %v584
      %v589 = vmul.f32 1.0, %v588
      %v590 = vrcp.pop %v585
      %v591 = vmul.f32 1.0, %v590
      %v592 = vrcp.pop %v586
      %v593 = vmul.f32 1.0, %v592
      %v594 = vrcp.pop %v587
      %v595 = vmul.f32 1.0, %v594
      %v596 = vmul.f32 %v568, %v589
      %v597 = vmul.f32 %v569, %v591
      %v598 = vmul.f32 %v570, %v593
      %v599 = vmul.f32 %v571, %v595
      %600 = vst.msk [vmem:[#allocation4] sm:$0xff] %vm476, %v596
      %601 = vst.msk [vmem:[#allocation4 + $0x8] sm:$0xff] %vm476, %v597
      %602 = vst.msk [vmem:[#allocation4 + $0x10] sm:$0xff] %vm476, %v598
      %603 = vst.msk [vmem:[#allocation4 + $0x18] sm:$0xff] %vm476, %v599
      %v604 = vpack.c.bf16 %v597, %v596
      %v605 = vpack.c.bf16 %v599, %v598
      %v606 = vld [vmem:[%s4] sm:$0xf]
      %v607 = vld [vmem:[%s4 + $0x4] sm:$0xf]
      %v608 = vld [vmem:[%s4 + $0x8] sm:$0xf]
      %v609 = vld [vmem:[%s4 + $0xc] sm:$0xf]
      %v614 = vunpack.c.l.b16 %v606
      %v615 = vunpack.c.l.b16 %v607
      %v616 = vunpack.c.l.b16 %v608
      %v617 = vunpack.c.l.b16 %v609
      %v618 = vpack.c.b16 %v615, %v614
      %v619 = vpack.c.b16 %v617, %v616
      %v623 = vsel %vm476, %v604, 0
      %v626 = vsel %vm476, %v605, 0
      %628 = vmatprep.subr.bf16.mxu0 0
      %629 = vmatpush1.bf16.msra.mxu0 %v618
      %630 = vmatprep.subr.bf16.mxu0 0
      %631 = vmatpush1.bf16.msra.mxu0 %v619
      %632 = vmatprep.subr.bf16.mxu0 0
      %633 = vmatpush1.bf16.msra.mxu0 0
      %634 = vmatprep.subr.bf16.mxu0 0
      %635 = vmatpush1.bf16.msra.mxu0 0
      %636 = vmatprep.subr.bf16.mxu0 0
      %637 = vmatpush1.bf16.msra.mxu0 0
      %638 = vmatprep.subr.bf16.mxu0 0
      %639 = vmatpush1.bf16.msra.mxu0 0
      %640 = vmatprep.subr.bf16.mxu0 0
      %641 = vmatpush1.bf16.msra.mxu0 0
      %642 = vmatprep.subr.bf16.mxu0 0
      %643 = vmatpush1.bf16.msra.mxu0 0
      %644 = vmatprep.subr.bf16.mxu0 0
      %645 = vmatpush1.bf16.msra.mxu0 0
      %646 = vmatprep.subr.bf16.mxu0 0
      %647 = vmatpush1.bf16.msra.mxu0 0
      %648 = vmatprep.subr.bf16.mxu0 0
      %649 = vmatpush1.bf16.msra.mxu0 0
      %650 = vmatprep.subr.bf16.mxu0 0
      %651 = vmatpush1.bf16.msra.mxu0 0
      %652 = vmatprep.subr.bf16.mxu0 0
      %653 = vmatpush1.bf16.msra.mxu0 0
      %654 = vmatprep.subr.bf16.mxu0 0
      %655 = vmatpush1.bf16.msra.mxu0 0
      %656 = vmatprep.subr.bf16.mxu0 0
      %657 = vmatpush1.bf16.msra.mxu0 0
      %658 = vmatprep.subr.bf16.mxu0 0
      %659 = vmatpush1.bf16.msra.mxu0 0
      %660 = vmatprep.mubr.bf16.mxu0 0
      %661 = vmatmul.mubr.bf16.gmra.mrb[0].mxu0 %v623
      %v662 = vpop.f32.mrb[0].mxu0
      %v663 = vadd.f32 0.0, %v662
      %v664 = vpop.f32.mrb[0].mxu0
      %v665 = vpop.f32.mrb[0].mxu0
      %v666 = vadd.f32 0.0, %v665
      %v667 = vpop.f32.mrb[0].mxu0
      %668 = vmatprep.mubr.bf16.mxu0 0
      %669 = vmatmul.mubr.bf16.gmra.mrb[0].mxu0 %v626
      %v670 = vpop.f32.mrb[0].mxu0
      %v671 = vadd.f32 0.0, %v670
      %v672 = vpop.f32.mrb[0].mxu0
      %v673 = vpop.f32.mrb[0].mxu0
      %v674 = vadd.f32 0.0, %v673
      %v675 = vpop.f32.mrb[0].mxu0
      %676 = vdwg.mxu0
      %v677 = vpack.c.bf16 %v666, %v663
      %v678 = vpack.c.bf16 %v674, %v671
      %v679 = vld [vmem:[%s5] sm:$0xf]
      %v680 = vld [vmem:[%s3 + $0x15] sm:$0x1]
      %v681 = vlaneseq
      %v682 = vshrl.u32 %v681, 7
      %v683 = vsub.s32 0, %v682
      %v684 = vrot.slane %v680, %v683
      %vm685 = vcmask 64512
      %v687 = vsel %vm685, %v677, 0
      %v690 = vsel %vm685, %v678, 0
      %vm692 = vcmask 1043456
      %v694 = vsel %vm692, %v679, 0
      %696 = vmatprep.subr.bf16.mxu0 0
      %697 = vmatpush1.bf16.msra.mxu0 %v694
      %698 = vmatprep.subr.bf16.mxu0 0
      %699 = vmatpush1.bf16.msra.mxu0 0
      %700 = vmatprep.subr.bf16.mxu0 0
      %701 = vmatpush1.bf16.msra.mxu0 0
      %702 = vmatprep.subr.bf16.mxu0 0
      %703 = vmatpush1.bf16.msra.mxu0 0
      %704 = vmatprep.subr.bf16.mxu0 0
      %705 = vmatpush1.bf16.msra.mxu0 0
      %706 = vmatprep.subr.bf16.mxu0 0
      %707 = vmatpush1.bf16.msra.mxu0 0
      %708 = vmatprep.subr.bf16.mxu0 0
      %709 = vmatpush1.bf16.msra.mxu0 0
      %710 = vmatprep.subr.bf16.mxu0 0
      %711 = vmatpush1.bf16.msra.mxu0 0
      %712 = vmatprep.subr.bf16.mxu0 0
      %713 = vmatpush1.bf16.msra.mxu0 0
      %714 = vmatprep.subr.bf16.mxu0 0
      %715 = vmatpush1.bf16.msra.mxu0 0
      %716 = vmatprep.subr.bf16.mxu0 0
      %717 = vmatpush1.bf16.msra.mxu0 0
      %718 = vmatprep.subr.bf16.mxu0 0
      %719 = vmatpush1.bf16.msra.mxu0 0
      %720 = vmatprep.subr.bf16.mxu0 0
      %721 = vmatpush1.bf16.msra.mxu0 0
      %722 = vmatprep.subr.bf16.mxu0 0
      %723 = vmatpush1.bf16.msra.mxu0 0
      %724 = vmatprep.subr.bf16.mxu0 0
      %725 = vmatpush1.bf16.msra.mxu0 0
      %726 = vmatprep.subr.bf16.mxu0 0
      %727 = vmatpush1.bf16.msra.mxu0 0
      %728 = vmatprep.mubr.bf16.mxu0 0
      %729 = vmatmul.mubr.bf16.gmra.mrb[0].mxu0 %v687
      %v730 = vpop.f32.mrb[0].mxu0
      %v731 = vadd.f32 %v684, %v730
      %v732 = vpop.f32.mrb[0].mxu0
      %v733 = vpop.f32.mrb[0].mxu0
      %v734 = vadd.f32 %v684, %v733
      %v735 = vpop.f32.mrb[0].mxu0
      %736 = vmatprep.mubr.bf16.mxu0 0
      %737 = vmatmul.mubr.bf16.gmra.mrb[0].mxu0 %v690
      %v738 = vpop.f32.mrb[0].mxu0
      %v739 = vadd.f32 %v684, %v738
      %v740 = vpop.f32.mrb[0].mxu0
      %v741 = vpop.f32.mrb[0].mxu0
      %v742 = vadd.f32 %v684, %v741
      %v743 = vpop.f32.mrb[0].mxu0
      %744 = vdwg.mxu0
      %v745 = vmax.f32 %v731, 0.0
      %v746 = vmax.f32 %v734, 0.0
      %v747 = vmax.f32 %v739, 0.0
      %v748 = vmax.f32 %v742, 0.0
      %v749 = vand.u32 2147483647, %v731
      %v750 = vand.u32 2147483647, %v734
      %v751 = vand.u32 2147483647, %v739
      %v752 = vand.u32 2147483647, %v742
      %v753 = vsub.f32 0.0, %v749
      %v754 = vsub.f32 0.0, %v750
      %v755 = vsub.f32 0.0, %v751
      %v756 = vsub.f32 0.0, %v752
      %v757 = vmul.f32 %v753, 1.442695
      %v758 = vpow.pop %v757
      %v759 = vmul.f32 %v754, 1.442695
      %v760 = vpow.pop %v759
      %v761 = vmul.f32 %v755, 1.442695
      %v762 = vpow.pop %v761
      %v763 = vmul.f32 %v756, 1.442695
      %v764 = vpow.pop %v763
      %v765 = vadd.f32 %v758, 1.0
      %v766 = vadd.f32 %v760, 1.0
      %v767 = vadd.f32 %v762, 1.0
      %v768 = vadd.f32 %v764, 1.0
      %v769 = vlog2.pop %v765
      %v770 = vmul.f32 %v769, 0.6931472
      %v771 = vlog2.pop %v766
      %v772 = vmul.f32 %v771, 0.6931472
      %v773 = vlog2.pop %v767
      %v774 = vmul.f32 %v773, 0.6931472
      %v775 = vlog2.pop %v768
      %v776 = vmul.f32 %v775, 0.6931472
      %v777 = vadd.f32 %v745, %v770
      %v778 = vadd.f32 %v746, %v772
      %v779 = vadd.f32 %v747, %v774
      %v780 = vadd.f32 %v748, %v776
      %781 = vst.msk [vmem:[#allocation3] sm:$0xff] %vm476, %v777
      %782 = vst.msk [vmem:[#allocation3 + $0x8] sm:$0xff] %vm476, %v778
      %783 = vst.msk [vmem:[#allocation3 + $0x10] sm:$0xff] %vm476, %v779
      %784 = vst.msk [vmem:[#allocation3 + $0x18] sm:$0xff] %vm476, %v780
      %789 = vrot.lane.b32.xlu0 %v663, 120
      %v790 = vpop.permute.xlu0 %789
      %791 = vrot.lane.b32.xlu0 %v666, 120
      %v792 = vpop.permute.xlu0 %791
      %793 = vrot.lane.b32.xlu0 %v671, 120
      %v794 = vpop.permute.xlu0 %793
      %795 = vrot.lane.b32.xlu0 %v674, 120
      %v796 = vpop.permute.xlu0 %795
      %801 = vst.msk [vmem:[#allocation6] sm:$0xff] %vm476, %v790
      %802 = vst.msk [vmem:[#allocation6 + $0x8] sm:$0xff] %vm476, %v792
      %803 = vst.msk [vmem:[#allocation6 + $0x10] sm:$0xff] %vm476, %v794
      %804 = vst.msk [vmem:[#allocation6 + $0x18] sm:$0xff] %vm476, %v796
      // Predicated region
      $region57: #{tpu_custom_call.1} parent=47 // pred_check
        %p805 = pneg %p481
      $region58: #{tpu_custom_call.1} parent=47 // pred_check_branch
        %807 = sbr.rel (%p805) target = $region60
      $region59: #{tpu_custom_call.1} parent=47 // pred_region
        %808 = vst.msk [vmem:[#allocation8] sm:$0xff] %vm476, 0.0
        %809 = vst.msk [vmem:[#allocation8 + $0x8] sm:$0xff] %vm476, 0.0
      $region60: #{tpu_custom_call.1} parent=47 // pred_fallthru
        _
      %v810 = vld [vmem:[#allocation8] sm:$0xff]
      %v811 = vld [vmem:[#allocation8 + $0x8] sm:$0xff]
      loop: start=0, step=1, limit=2
      $region61: #{tpu_custom_call.1} parent=47 // loop_pre_header
        _
      $region62: #{tpu_custom_call.1} parent=47 // loop_header
        %s813 = sphi 0, %s817
        %p814 = scmp.ge.s32.totalorder %s813, 2
        %v818 = vphi %v810, %v1719
        %v819 = vphi %v811, %v1720
      $region63: #{tpu_custom_call.1} parent=47 // loop_header_branch
        %816 = sbr.rel (%p814) target = $region67
      $region64: #{tpu_custom_call.1} parent=47 // loop_body
        %s820 = smul.u32 %s813, 16
        %v821 = vld [vmem:[%s3] sm:$0xff]
        %v822 = vld [vmem:[%s3 + $0x8] sm:$0xff]
        %s823 = scalar_lea.vmem [#allocation6], %s820
        %v824 = vld [vmem:[%s823] sm:$0xff]
        %v825 = vld [vmem:[%s823 + $0x8] sm:$0xff]
        %826 = vxpose.xlu0.b32.start [1/16] %v824, 128
        %827 = vxpose.xlu0.b32.cont [2/16] %v825, 128
        %828 = vxpose.xlu0.b32.cont [3/16] 0.0, 128
        %829 = vxpose.xlu0.b32.cont [4/16] 0.0, 128
        %830 = vxpose.xlu0.b32.cont [5/16] 0.0, 128
        %831 = vxpose.xlu0.b32.cont [6/16] 0.0, 128
        %832 = vxpose.xlu0.b32.cont [7/16] 0.0, 128
        %833 = vxpose.xlu0.b32.cont [8/16] 0.0, 128
        %834 = vxpose.xlu0.b32.cont [9/16] 0.0, 128
        %835 = vxpose.xlu0.b32.cont [10/16] 0.0, 128
        %836 = vxpose.xlu0.b32.cont [11/16] 0.0, 128
        %837 = vxpose.xlu0.b32.cont [12/16] 0.0, 128
        %838 = vxpose.xlu0.b32.cont [13/16] 0.0, 128
        %839 = vxpose.xlu0.b32.cont [14/16] 0.0, 128
        %840 = vxpose.xlu0.b32.cont [15/16] 0.0, 128
        %841 = vxpose.xlu0.b32.end [16/16] 0.0, 128
        %v842 = vpop.trf.xlu0
        %v843 = vpop.trf.xlu0
        %v844 = vpop.trf.xlu0
        %v845 = vpop.trf.xlu0
        %v846 = vpop.trf.xlu0
        %v847 = vpop.trf.xlu0
        %v848 = vpop.trf.xlu0
        %v849 = vpop.trf.xlu0
        %v850 = vpop.trf.xlu0
        %v851 = vpop.trf.xlu0
        %v852 = vpop.trf.xlu0
        %v853 = vpop.trf.xlu0
        %v854 = vpop.trf.xlu0
        %v855 = vpop.trf.xlu0
        %v856 = vpop.trf.xlu0
        %v857 = vpop.trf.xlu0
        %s858 = scalar_lea.vmem [#allocation3], %s820
        %v859 = vld [vmem:[%s858] sm:$0x1]
        %s860 = scalar_lea.vmem [#allocation4], %s820
        %v861 = vld [vmem:[%s860] sm:$0x1]
        %v862 = vmul.f32 %v859, %v861
        %v863 = vlaneseq
        %v864 = vshrl.u32 %v863, 7
        %v865 = vsub.s32 0, %v864
        %v866 = vrot.slane %v859, %v865
        %v867 = vmul.f32 %v866, %v821
        %v868 = vmul.f32 %v866, %v822
        %v869 = vmul.f32 %v867, 1.442695
        %v870 = vpow.pop %v869
        %v871 = vmul.f32 %v868, 1.442695
        %v872 = vpow.pop %v871
        %v873 = vmul.f32 %v870, %v818
        %v874 = vmul.f32 %v872, %v819
        %876 = vset.pattern.permute.xlu0 0
        %877 = vperm.xlu0 %876, %v842
        %v878 = vpop.permute.xlu0 %877
        %881 = vset.pattern.permute.xlu0 0
        %882 = vperm.xlu0 %881, %v843
        %v883 = vpop.permute.xlu0 %882
        %v885 = vlaneseq
        %v886 = vshrl.u32 %v885, 7
        %v887 = vsub.s32 0, %v886
        %v888 = vrot.slane %v862, %v887
        %v889 = vmul.f32 %v878, %v888
        %v890 = vmul.f32 %v883, %v888
        %v891 = vadd.f32 %v873, %v889
        %v892 = vadd.f32 %v874, %v890
        %894 = vset.pattern.permute.xlu0 0
        %895 = vperm.xlu0 %894, %v844
        %v896 = vpop.permute.xlu0 %895
        %899 = vset.pattern.permute.xlu0 0
        %900 = vperm.xlu0 %899, %v845
        %v901 = vpop.permute.xlu0 %900
        %v903 = vmul.f32 %v896, %v891
        %v904 = vmul.f32 %v901, %v892
        %v905 = vsel %vm476, %v903, 0.0
        %v906 = vsel %vm476, %v904, 0.0
        %v907 = vadd.f32 %v905, %v906
        %v908 = vrot.slane %v907, 4
        %v909 = vadd.f32 %v907, %v908
        %v910 = vrot.slane %v909, 2
        %v911 = vadd.f32 %v909, %v910
        %v912 = vrot.slane %v911, 1
        %v913 = vadd.f32 %v911, %v912
        %s914 = scalar_lea.vmem [#allocation7], %s820
        %vm915 = vcmask 253952
        %916 = vst.msk [vmem:[%s914] sm:$0x1] %vm915, %v913
        %s917 = sadd.s32 %s820, 1
        %s918 = scalar_lea.vmem [#allocation3], %s917
        %v919 = vld [vmem:[%s918] sm:$0x1]
        %s920 = scalar_lea.vmem [#allocation4], %s917
        %v921 = vld [vmem:[%s920] sm:$0x1]
        %v922 = vmul.f32 %v919, %v921
        %v923 = vlaneseq
        %v924 = vshrl.u32 %v923, 7
        %v925 = vsub.s32 0, %v924
        %v926 = vrot.slane %v919, %v925
        %v927 = vmul.f32 %v926, %v821
        %v928 = vmul.f32 %v926, %v822
        %v929 = vmul.f32 %v927, 1.442695
        %v930 = vpow.pop %v929
        %v931 = vmul.f32 %v928, 1.442695
        %v932 = vpow.pop %v931
        %v933 = vmul.f32 %v930, %v891
        %v934 = vmul.f32 %v932, %v892
        %935 = vset.pattern.permute.xlu0 1
        %936 = vperm.xlu0 %935, %v842
        %v937 = vpop.permute.xlu0 %936
        %939 = vset.pattern.permute.xlu0 1
        %940 = vperm.xlu0 %939, %v843
        %v941 = vpop.permute.xlu0 %940
        %v943 = vlaneseq
        %v944 = vshrl.u32 %v943, 7
        %v945 = vsub.s32 0, %v944
        %v946 = vrot.slane %v922, %v945
        %v947 = vmul.f32 %v937, %v946
        %v948 = vmul.f32 %v941, %v946
        %v949 = vadd.f32 %v933, %v947
        %v950 = vadd.f32 %v934, %v948
        %951 = vset.pattern.permute.xlu0 1
        %952 = vperm.xlu0 %951, %v844
        %v953 = vpop.permute.xlu0 %952
        %955 = vset.pattern.permute.xlu0 1
        %956 = vperm.xlu0 %955, %v845
        %v957 = vpop.permute.xlu0 %956
        %v959 = vmul.f32 %v953, %v949
        %v960 = vmul.f32 %v957, %v950
        %v961 = vsel %vm476, %v959, 0.0
        %v962 = vsel %vm476, %v960, 0.0
        %v963 = vadd.f32 %v961, %v962
        %v964 = vrot.slane %v963, 4
        %v965 = vadd.f32 %v963, %v964
        %v966 = vrot.slane %v965, 2
        %v967 = vadd.f32 %v965, %v966
        %v968 = vrot.slane %v967, 1
        %v969 = vadd.f32 %v967, %v968
        %s970 = scalar_lea.vmem [#allocation7], %s917
        %971 = vst.msk [vmem:[%s970] sm:$0x1] %vm915, %v969
        %s972 = sadd.s32 %s820, 2
        %s973 = scalar_lea.vmem [#allocation3], %s972
        %v974 = vld [vmem:[%s973] sm:$0x1]
        %s975 = scalar_lea.vmem [#allocation4], %s972
        %v976 = vld [vmem:[%s975] sm:$0x1]
        %v977 = vmul.f32 %v974, %v976
        %v978 = vlaneseq
        %v979 = vshrl.u32 %v978, 7
        %v980 = vsub.s32 0, %v979
        %v981 = vrot.slane %v974, %v980
        %v982 = vmul.f32 %v981, %v821
        %v983 = vmul.f32 %v981, %v822
        %v984 = vmul.f32 %v982, 1.442695
        %v985 = vpow.pop %v984
        %v986 = vmul.f32 %v983, 1.442695
        %v987 = vpow.pop %v986
        %v988 = vmul.f32 %v985, %v949
        %v989 = vmul.f32 %v987, %v950
        %990 = vset.pattern.permute.xlu0 2
        %991 = vperm.xlu0 %990, %v842
        %v992 = vpop.permute.xlu0 %991
        %994 = vset.pattern.permute.xlu0 2
        %995 = vperm.xlu0 %994, %v843
        %v996 = vpop.permute.xlu0 %995
        %v998 = vlaneseq
        %v999 = vshrl.u32 %v998, 7
        %v1000 = vsub.s32 0, %v999
        %v1001 = vrot.slane %v977, %v1000
        %v1002 = vmul.f32 %v992, %v1001
        %v1003 = vmul.f32 %v996, %v1001
        %v1004 = vadd.f32 %v988, %v1002
        %v1005 = vadd.f32 %v989, %v1003
        %1006 = vset.pattern.permute.xlu0 2
        %1007 = vperm.xlu0 %1006, %v844
        %v1008 = vpop.permute.xlu0 %1007
        %1010 = vset.pattern.permute.xlu0 2
        %1011 = vperm.xlu0 %1010, %v845
        %v1012 = vpop.permute.xlu0 %1011
        %v1014 = vmul.f32 %v1008, %v1004
        %v1015 = vmul.f32 %v1012, %v1005
        %v1016 = vsel %vm476, %v1014, 0.0
        %v1017 = vsel %vm476, %v1015, 0.0
        %v1018 = vadd.f32 %v1016, %v1017
        %v1019 = vrot.slane %v1018, 4
        %v1020 = vadd.f32 %v1018, %v1019
        %v1021 = vrot.slane %v1020, 2
        %v1022 = vadd.f32 %v1020, %v1021
        %v1023 = vrot.slane %v1022, 1
        %v1024 = vadd.f32 %v1022, %v1023
        %s1025 = scalar_lea.vmem [#allocation7], %s972
        %1026 = vst.msk [vmem:[%s1025] sm:$0x1] %vm915, %v1024
        %s1027 = sadd.s32 %s820, 3
        %s1028 = scalar_lea.vmem [#allocation3], %s1027
        %v1029 = vld [vmem:[%s1028] sm:$0x1]
        %s1030 = scalar_lea.vmem [#allocation4], %s1027
        %v1031 = vld [vmem:[%s1030] sm:$0x1]
        %v1032 = vmul.f32 %v1029, %v1031
        %v1033 = vlaneseq
        %v1034 = vshrl.u32 %v1033, 7
        %v1035 = vsub.s32 0, %v1034
        %v1036 = vrot.slane %v1029, %v1035
        %v1037 = vmul.f32 %v1036, %v821
        %v1038 = vmul.f32 %v1036, %v822
        %v1039 = vmul.f32 %v1037, 1.442695
        %v1040 = vpow.pop %v1039
        %v1041 = vmul.f32 %v1038, 1.442695
        %v1042 = vpow.pop %v1041
        %v1043 = vmul.f32 %v1040, %v1004
        %v1044 = vmul.f32 %v1042, %v1005
        %1045 = vset.pattern.permute.xlu0 3
        %1046 = vperm.xlu0 %1045, %v842
        %v1047 = vpop.permute.xlu0 %1046
        %1049 = vset.pattern.permute.xlu0 3
        %1050 = vperm.xlu0 %1049, %v843
        %v1051 = vpop.permute.xlu0 %1050
        %v1053 = vlaneseq
        %v1054 = vshrl.u32 %v1053, 7
        %v1055 = vsub.s32 0, %v1054
        %v1056 = vrot.slane %v1032, %v1055
        %v1057 = vmul.f32 %v1047, %v1056
        %v1058 = vmul.f32 %v1051, %v1056
        %v1059 = vadd.f32 %v1043, %v1057
        %v1060 = vadd.f32 %v1044, %v1058
        %1061 = vset.pattern.permute.xlu0 3
        %1062 = vperm.xlu0 %1061, %v844
        %v1063 = vpop.permute.xlu0 %1062
        %1065 = vset.pattern.permute.xlu0 3
        %1066 = vperm.xlu0 %1065, %v845
        %v1067 = vpop.permute.xlu0 %1066
        %v1069 = vmul.f32 %v1063, %v1059
        %v1070 = vmul.f32 %v1067, %v1060
        %v1071 = vsel %vm476, %v1069, 0.0
        %v1072 = vsel %vm476, %v1070, 0.0
        %v1073 = vadd.f32 %v1071, %v1072
        %v1074 = vrot.slane %v1073, 4
        %v1075 = vadd.f32 %v1073, %v1074
        %v1076 = vrot.slane %v1075, 2
        %v1077 = vadd.f32 %v1075, %v1076
        %v1078 = vrot.slane %v1077, 1
        %v1079 = vadd.f32 %v1077, %v1078
        %s1080 = scalar_lea.vmem [#allocation7], %s1027
        %1081 = vst.msk [vmem:[%s1080] sm:$0x1] %vm915, %v1079
        %s1082 = sadd.s32 %s820, 4
        %s1083 = scalar_lea.vmem [#allocation3], %s1082
        %v1084 = vld [vmem:[%s1083] sm:$0x1]
        %s1085 = scalar_lea.vmem [#allocation4], %s1082
        %v1086 = vld [vmem:[%s1085] sm:$0x1]
        %v1087 = vmul.f32 %v1084, %v1086
        %v1088 = vlaneseq
        %v1089 = vshrl.u32 %v1088, 7
        %v1090 = vsub.s32 0, %v1089
        %v1091 = vrot.slane %v1084, %v1090
        %v1092 = vmul.f32 %v1091, %v821
        %v1093 = vmul.f32 %v1091, %v822
        %v1094 = vmul.f32 %v1092, 1.442695
        %v1095 = vpow.pop %v1094
        %v1096 = vmul.f32 %v1093, 1.442695
        %v1097 = vpow.pop %v1096
        %v1098 = vmul.f32 %v1095, %v1059
        %v1099 = vmul.f32 %v1097, %v1060
        %1100 = vset.pattern.permute.xlu0 4
        %1101 = vperm.xlu0 %1100, %v842
        %v1102 = vpop.permute.xlu0 %1101
        %1104 = vset.pattern.permute.xlu0 4
        %1105 = vperm.xlu0 %1104, %v843
        %v1106 = vpop.permute.xlu0 %1105
        %v1108 = vlaneseq
        %v1109 = vshrl.u32 %v1108, 7
        %v1110 = vsub.s32 0, %v1109
        %v1111 = vrot.slane %v1087, %v1110
        %v1112 = vmul.f32 %v1102, %v1111
        %v1113 = vmul.f32 %v1106, %v1111
        %v1114 = vadd.f32 %v1098, %v1112
        %v1115 = vadd.f32 %v1099, %v1113
        %1116 = vset.pattern.permute.xlu0 4
        %1117 = vperm.xlu0 %1116, %v844
        %v1118 = vpop.permute.xlu0 %1117
        %1120 = vset.pattern.permute.xlu0 4
        %1121 = vperm.xlu0 %1120, %v845
        %v1122 = vpop.permute.xlu0 %1121
        %v1124 = vmul.f32 %v1118, %v1114
        %v1125 = vmul.f32 %v1122, %v1115
        %v1126 = vsel %vm476, %v1124, 0.0
        %v1127 = vsel %vm476, %v1125, 0.0
        %v1128 = vadd.f32 %v1126, %v1127
        %v1129 = vrot.slane %v1128, 4
        %v1130 = vadd.f32 %v1128, %v1129
        %v1131 = vrot.slane %v1130, 2
        %v1132 = vadd.f32 %v1130, %v1131
        %v1133 = vrot.slane %v1132, 1
        %v1134 = vadd.f32 %v1132, %v1133
        %s1135 = scalar_lea.vmem [#allocation7], %s1082
        %1136 = vst.msk [vmem:[%s1135] sm:$0x1] %vm915, %v1134
        %s1137 = sadd.s32 %s820, 5
        %s1138 = scalar_lea.vmem [#allocation3], %s1137
        %v1139 = vld [vmem:[%s1138] sm:$0x1]
        %s1140 = scalar_lea.vmem [#allocation4], %s1137
        %v1141 = vld [vmem:[%s1140] sm:$0x1]
        %v1142 = vmul.f32 %v1139, %v1141
        %v1143 = vlaneseq
        %v1144 = vshrl.u32 %v1143, 7
        %v1145 = vsub.s32 0, %v1144
        %v1146 = vrot.slane %v1139, %v1145
        %v1147 = vmul.f32 %v1146, %v821
        %v1148 = vmul.f32 %v1146, %v822
        %v1149 = vmul.f32 %v1147, 1.442695
        %v1150 = vpow.pop %v1149
        %v1151 = vmul.f32 %v1148, 1.442695
        %v1152 = vpow.pop %v1151
        %v1153 = vmul.f32 %v1150, %v1114
        %v1154 = vmul.f32 %v1152, %v1115
        %1155 = vset.pattern.permute.xlu0 5
        %1156 = vperm.xlu0 %1155, %v842
        %v1157 = vpop.permute.xlu0 %1156
        %1159 = vset.pattern.permute.xlu0 5
        %1160 = vperm.xlu0 %1159, %v843
        %v1161 = vpop.permute.xlu0 %1160
        %v1163 = vlaneseq
        %v1164 = vshrl.u32 %v1163, 7
        %v1165 = vsub.s32 0, %v1164
        %v1166 = vrot.slane %v1142, %v1165
        %v1167 = vmul.f32 %v1157, %v1166
        %v1168 = vmul.f32 %v1161, %v1166
        %v1169 = vadd.f32 %v1153, %v1167
        %v1170 = vadd.f32 %v1154, %v1168
        %1171 = vset.pattern.permute.xlu0 5
        %1172 = vperm.xlu0 %1171, %v844
        %v1173 = vpop.permute.xlu0 %1172
        %1175 = vset.pattern.permute.xlu0 5
        %1176 = vperm.xlu0 %1175, %v845
        %v1177 = vpop.permute.xlu0 %1176
        %v1179 = vmul.f32 %v1173, %v1169
        %v1180 = vmul.f32 %v1177, %v1170
        %v1181 = vsel %vm476, %v1179, 0.0
        %v1182 = vsel %vm476, %v1180, 0.0
        %v1183 = vadd.f32 %v1181, %v1182
        %v1184 = vrot.slane %v1183, 4
        %v1185 = vadd.f32 %v1183, %v1184
        %v1186 = vrot.slane %v1185, 2
        %v1187 = vadd.f32 %v1185, %v1186
        %v1188 = vrot.slane %v1187, 1
        %v1189 = vadd.f32 %v1187, %v1188
        %s1190 = scalar_lea.vmem [#allocation7], %s1137
        %1191 = vst.msk [vmem:[%s1190] sm:$0x1] %vm915, %v1189
        %s1192 = sadd.s32 %s820, 6
        %s1193 = scalar_lea.vmem [#allocation3], %s1192
        %v1194 = vld [vmem:[%s1193] sm:$0x1]
        %s1195 = scalar_lea.vmem [#allocation4], %s1192
        %v1196 = vld [vmem:[%s1195] sm:$0x1]
        %v1197 = vmul.f32 %v1194, %v1196
        %v1198 = vlaneseq
        %v1199 = vshrl.u32 %v1198, 7
        %v1200 = vsub.s32 0, %v1199
        %v1201 = vrot.slane %v1194, %v1200
        %v1202 = vmul.f32 %v1201, %v821
        %v1203 = vmul.f32 %v1201, %v822
        %v1204 = vmul.f32 %v1202, 1.442695
        %v1205 = vpow.pop %v1204
        %v1206 = vmul.f32 %v1203, 1.442695
        %v1207 = vpow.pop %v1206
        %v1208 = vmul.f32 %v1205, %v1169
        %v1209 = vmul.f32 %v1207, %v1170
        %1210 = vset.pattern.permute.xlu0 6
        %1211 = vperm.xlu0 %1210, %v842
        %v1212 = vpop.permute.xlu0 %1211
        %1214 = vset.pattern.permute.xlu0 6
        %1215 = vperm.xlu0 %1214, %v843
        %v1216 = vpop.permute.xlu0 %1215
        %v1218 = vlaneseq
        %v1219 = vshrl.u32 %v1218, 7
        %v1220 = vsub.s32 0, %v1219
        %v1221 = vrot.slane %v1197, %v1220
        %v1222 = vmul.f32 %v1212, %v1221
        %v1223 = vmul.f32 %v1216, %v1221
        %v1224 = vadd.f32 %v1208, %v1222
        %v1225 = vadd.f32 %v1209, %v1223
        %1226 = vset.pattern.permute.xlu0 6
        %1227 = vperm.xlu0 %1226, %v844
        %v1228 = vpop.permute.xlu0 %1227
        %1230 = vset.pattern.permute.xlu0 6
        %1231 = vperm.xlu0 %1230, %v845
        %v1232 = vpop.permute.xlu0 %1231
        %v1234 = vmul.f32 %v1228, %v1224
        %v1235 = vmul.f32 %v1232, %v1225
        %v1236 = vsel %vm476, %v1234, 0.0
        %v1237 = vsel %vm476, %v1235, 0.0
        %v1238 = vadd.f32 %v1236, %v1237
        %v1239 = vrot.slane %v1238, 4
        %v1240 = vadd.f32 %v1238, %v1239
        %v1241 = vrot.slane %v1240, 2
        %v1242 = vadd.f32 %v1240, %v1241
        %v1243 = vrot.slane %v1242, 1
        %v1244 = vadd.f32 %v1242, %v1243
        %s1245 = scalar_lea.vmem [#allocation7], %s1192
        %1246 = vst.msk [vmem:[%s1245] sm:$0x1] %vm915, %v1244
        %s1247 = sadd.s32 %s820, 7
        %s1248 = scalar_lea.vmem [#allocation3], %s1247
        %v1249 = vld [vmem:[%s1248] sm:$0x1]
        %s1250 = scalar_lea.vmem [#allocation4], %s1247
        %v1251 = vld [vmem:[%s1250] sm:$0x1]
        %v1252 = vmul.f32 %v1249, %v1251
        %v1253 = vlaneseq
        %v1254 = vshrl.u32 %v1253, 7
        %v1255 = vsub.s32 0, %v1254
        %v1256 = vrot.slane %v1249, %v1255
        %v1257 = vmul.f32 %v1256, %v821
        %v1258 = vmul.f32 %v1256, %v822
        %v1259 = vmul.f32 %v1257, 1.442695
        %v1260 = vpow.pop %v1259
        %v1261 = vmul.f32 %v1258, 1.442695
        %v1262 = vpow.pop %v1261
        %v1263 = vmul.f32 %v1260, %v1224
        %v1264 = vmul.f32 %v1262, %v1225
        %1265 = vset.pattern.permute.xlu0 7
        %1266 = vperm.xlu0 %1265, %v842
        %v1267 = vpop.permute.xlu0 %1266
        %1269 = vset.pattern.permute.xlu0 7
        %1270 = vperm.xlu0 %1269, %v843
        %v1271 = vpop.permute.xlu0 %1270
        %v1273 = vlaneseq
        %v1274 = vshrl.u32 %v1273, 7
        %v1275 = vsub.s32 0, %v1274
        %v1276 = vrot.slane %v1252, %v1275
        %v1277 = vmul.f32 %v1267, %v1276
        %v1278 = vmul.f32 %v1271, %v1276
        %v1279 = vadd.f32 %v1263, %v1277
        %v1280 = vadd.f32 %v1264, %v1278
        %1281 = vset.pattern.permute.xlu0 7
        %1282 = vperm.xlu0 %1281, %v844
        %v1283 = vpop.permute.xlu0 %1282
        %1285 = vset.pattern.permute.xlu0 7
        %1286 = vperm.xlu0 %1285, %v845
        %v1287 = vpop.permute.xlu0 %1286
        %v1289 = vmul.f32 %v1283, %v1279
        %v1290 = vmul.f32 %v1287, %v1280
        %v1291 = vsel %vm476, %v1289, 0.0
        %v1292 = vsel %vm476, %v1290, 0.0
        %v1293 = vadd.f32 %v1291, %v1292
        %v1294 = vrot.slane %v1293, 4
        %v1295 = vadd.f32 %v1293, %v1294
        %v1296 = vrot.slane %v1295, 2
        %v1297 = vadd.f32 %v1295, %v1296
        %v1298 = vrot.slane %v1297, 1
        %v1299 = vadd.f32 %v1297, %v1298
        %s1300 = scalar_lea.vmem [#allocation7], %s1247
        %1301 = vst.msk [vmem:[%s1300] sm:$0x1] %vm915, %v1299
        %s1302 = sadd.s32 %s820, 8
        %s1303 = scalar_lea.vmem [#allocation3], %s1302
        %v1304 = vld [vmem:[%s1303] sm:$0x1]
        %s1305 = scalar_lea.vmem [#allocation4], %s1302
        %v1306 = vld [vmem:[%s1305] sm:$0x1]
        %v1307 = vmul.f32 %v1304, %v1306
        %v1308 = vlaneseq
        %v1309 = vshrl.u32 %v1308, 7
        %v1310 = vsub.s32 0, %v1309
        %v1311 = vrot.slane %v1304, %v1310
        %v1312 = vmul.f32 %v1311, %v821
        %v1313 = vmul.f32 %v1311, %v822
        %v1314 = vmul.f32 %v1312, 1.442695
        %v1315 = vpow.pop %v1314
        %v1316 = vmul.f32 %v1313, 1.442695
        %v1317 = vpow.pop %v1316
        %v1318 = vmul.f32 %v1315, %v1279
        %v1319 = vmul.f32 %v1317, %v1280
        %1320 = vset.pattern.permute.xlu0 8
        %1321 = vperm.xlu0 %1320, %v842
        %v1322 = vpop.permute.xlu0 %1321
        %1324 = vset.pattern.permute.xlu0 8
        %1325 = vperm.xlu0 %1324, %v843
        %v1326 = vpop.permute.xlu0 %1325
        %v1328 = vlaneseq
        %v1329 = vshrl.u32 %v1328, 7
        %v1330 = vsub.s32 0, %v1329
        %v1331 = vrot.slane %v1307, %v1330
        %v1332 = vmul.f32 %v1322, %v1331
        %v1333 = vmul.f32 %v1326, %v1331
        %v1334 = vadd.f32 %v1318, %v1332
        %v1335 = vadd.f32 %v1319, %v1333
        %1336 = vset.pattern.permute.xlu0 8
        %1337 = vperm.xlu0 %1336, %v844
        %v1338 = vpop.permute.xlu0 %1337
        %1340 = vset.pattern.permute.xlu0 8
        %1341 = vperm.xlu0 %1340, %v845
        %v1342 = vpop.permute.xlu0 %1341
        %v1344 = vmul.f32 %v1338, %v1334
        %v1345 = vmul.f32 %v1342, %v1335
        %v1346 = vsel %vm476, %v1344, 0.0
        %v1347 = vsel %vm476, %v1345, 0.0
        %v1348 = vadd.f32 %v1346, %v1347
        %v1349 = vrot.slane %v1348, 4
        %v1350 = vadd.f32 %v1348, %v1349
        %v1351 = vrot.slane %v1350, 2
        %v1352 = vadd.f32 %v1350, %v1351
        %v1353 = vrot.slane %v1352, 1
        %v1354 = vadd.f32 %v1352, %v1353
        %s1355 = scalar_lea.vmem [#allocation7], %s1302
        %1356 = vst.msk [vmem:[%s1355] sm:$0x1] %vm915, %v1354
        %s1357 = sadd.s32 %s820, 9
        %s1358 = scalar_lea.vmem [#allocation3], %s1357
        %v1359 = vld [vmem:[%s1358] sm:$0x1]
        %s1360 = scalar_lea.vmem [#allocation4], %s1357
        %v1361 = vld [vmem:[%s1360] sm:$0x1]
        %v1362 = vmul.f32 %v1359, %v1361
        %v1363 = vlaneseq
        %v1364 = vshrl.u32 %v1363, 7
        %v1365 = vsub.s32 0, %v1364
        %v1366 = vrot.slane %v1359, %v1365
        %v1367 = vmul.f32 %v1366, %v821
        %v1368 = vmul.f32 %v1366, %v822
        %v1369 = vmul.f32 %v1367, 1.442695
        %v1370 = vpow.pop %v1369
        %v1371 = vmul.f32 %v1368, 1.442695
        %v1372 = vpow.pop %v1371
        %v1373 = vmul.f32 %v1370, %v1334
        %v1374 = vmul.f32 %v1372, %v1335
        %1375 = vset.pattern.permute.xlu0 9
        %1376 = vperm.xlu0 %1375, %v842
        %v1377 = vpop.permute.xlu0 %1376
        %1379 = vset.pattern.permute.xlu0 9
        %1380 = vperm.xlu0 %1379, %v843
        %v1381 = vpop.permute.xlu0 %1380
        %v1383 = vlaneseq
        %v1384 = vshrl.u32 %v1383, 7
        %v1385 = vsub.s32 0, %v1384
        %v1386 = vrot.slane %v1362, %v1385
        %v1387 = vmul.f32 %v1377, %v1386
        %v1388 = vmul.f32 %v1381, %v1386
        %v1389 = vadd.f32 %v1373, %v1387
        %v1390 = vadd.f32 %v1374, %v1388
        %1391 = vset.pattern.permute.xlu0 9
        %1392 = vperm.xlu0 %1391, %v844
        %v1393 = vpop.permute.xlu0 %1392
        %1395 = vset.pattern.permute.xlu0 9
        %1396 = vperm.xlu0 %1395, %v845
        %v1397 = vpop.permute.xlu0 %1396
        %v1399 = vmul.f32 %v1393, %v1389
        %v1400 = vmul.f32 %v1397, %v1390
        %v1401 = vsel %vm476, %v1399, 0.0
        %v1402 = vsel %vm476, %v1400, 0.0
        %v1403 = vadd.f32 %v1401, %v1402
        %v1404 = vrot.slane %v1403, 4
        %v1405 = vadd.f32 %v1403, %v1404
        %v1406 = vrot.slane %v1405, 2
        %v1407 = vadd.f32 %v1405, %v1406
        %v1408 = vrot.slane %v1407, 1
        %v1409 = vadd.f32 %v1407, %v1408
        %s1410 = scalar_lea.vmem [#allocation7], %s1357
        %1411 = vst.msk [vmem:[%s1410] sm:$0x1] %vm915, %v1409
        %s1412 = sadd.s32 %s820, 10
        %s1413 = scalar_lea.vmem [#allocation3], %s1412
        %v1414 = vld [vmem:[%s1413] sm:$0x1]
        %s1415 = scalar_lea.vmem [#allocation4], %s1412
        %v1416 = vld [vmem:[%s1415] sm:$0x1]
        %v1417 = vmul.f32 %v1414, %v1416
        %v1418 = vlaneseq
        %v1419 = vshrl.u32 %v1418, 7
        %v1420 = vsub.s32 0, %v1419
        %v1421 = vrot.slane %v1414, %v1420
        %v1422 = vmul.f32 %v1421, %v821
        %v1423 = vmul.f32 %v1421, %v822
        %v1424 = vmul.f32 %v1422, 1.442695
        %v1425 = vpow.pop %v1424
        %v1426 = vmul.f32 %v1423, 1.442695
        %v1427 = vpow.pop %v1426
        %v1428 = vmul.f32 %v1425, %v1389
        %v1429 = vmul.f32 %v1427, %v1390
        %1430 = vset.pattern.permute.xlu0 10
        %1431 = vperm.xlu0 %1430, %v842
        %v1432 = vpop.permute.xlu0 %1431
        %1434 = vset.pattern.permute.xlu0 10
        %1435 = vperm.xlu0 %1434, %v843
        %v1436 = vpop.permute.xlu0 %1435
        %v1438 = vlaneseq
        %v1439 = vshrl.u32 %v1438, 7
        %v1440 = vsub.s32 0, %v1439
        %v1441 = vrot.slane %v1417, %v1440
        %v1442 = vmul.f32 %v1432, %v1441
        %v1443 = vmul.f32 %v1436, %v1441
        %v1444 = vadd.f32 %v1428, %v1442
        %v1445 = vadd.f32 %v1429, %v1443
        %1446 = vset.pattern.permute.xlu0 10
        %1447 = vperm.xlu0 %1446, %v844
        %v1448 = vpop.permute.xlu0 %1447
        %1450 = vset.pattern.permute.xlu0 10
        %1451 = vperm.xlu0 %1450, %v845
        %v1452 = vpop.permute.xlu0 %1451
        %v1454 = vmul.f32 %v1448, %v1444
        %v1455 = vmul.f32 %v1452, %v1445
        %v1456 = vsel %vm476, %v1454, 0.0
        %v1457 = vsel %vm476, %v1455, 0.0
        %v1458 = vadd.f32 %v1456, %v1457
        %v1459 = vrot.slane %v1458, 4
        %v1460 = vadd.f32 %v1458, %v1459
        %v1461 = vrot.slane %v1460, 2
        %v1462 = vadd.f32 %v1460, %v1461
        %v1463 = vrot.slane %v1462, 1
        %v1464 = vadd.f32 %v1462, %v1463
        %s1465 = scalar_lea.vmem [#allocation7], %s1412
        %1466 = vst.msk [vmem:[%s1465] sm:$0x1] %vm915, %v1464
        %s1467 = sadd.s32 %s820, 11
        %s1468 = scalar_lea.vmem [#allocation3], %s1467
        %v1469 = vld [vmem:[%s1468] sm:$0x1]
        %s1470 = scalar_lea.vmem [#allocation4], %s1467
        %v1471 = vld [vmem:[%s1470] sm:$0x1]
        %v1472 = vmul.f32 %v1469, %v1471
        %v1473 = vlaneseq
        %v1474 = vshrl.u32 %v1473, 7
        %v1475 = vsub.s32 0, %v1474
        %v1476 = vrot.slane %v1469, %v1475
        %v1477 = vmul.f32 %v1476, %v821
        %v1478 = vmul.f32 %v1476, %v822
        %v1479 = vmul.f32 %v1477, 1.442695
        %v1480 = vpow.pop %v1479
        %v1481 = vmul.f32 %v1478, 1.442695
        %v1482 = vpow.pop %v1481
        %v1483 = vmul.f32 %v1480, %v1444
        %v1484 = vmul.f32 %v1482, %v1445
        %1485 = vset.pattern.permute.xlu0 11
        %1486 = vperm.xlu0 %1485, %v842
        %v1487 = vpop.permute.xlu0 %1486
        %1489 = vset.pattern.permute.xlu0 11
        %1490 = vperm.xlu0 %1489, %v843
        %v1491 = vpop.permute.xlu0 %1490
        %v1493 = vlaneseq
        %v1494 = vshrl.u32 %v1493, 7
        %v1495 = vsub.s32 0, %v1494
        %v1496 = vrot.slane %v1472, %v1495
        %v1497 = vmul.f32 %v1487, %v1496
        %v1498 = vmul.f32 %v1491, %v1496
        %v1499 = vadd.f32 %v1483, %v1497
        %v1500 = vadd.f32 %v1484, %v1498
        %1501 = vset.pattern.permute.xlu0 11
        %1502 = vperm.xlu0 %1501, %v844
        %v1503 = vpop.permute.xlu0 %1502
        %1505 = vset.pattern.permute.xlu0 11
        %1506 = vperm.xlu0 %1505, %v845
        %v1507 = vpop.permute.xlu0 %1506
        %v1509 = vmul.f32 %v1503, %v1499
        %v1510 = vmul.f32 %v1507, %v1500
        %v1511 = vsel %vm476, %v1509, 0.0
        %v1512 = vsel %vm476, %v1510, 0.0
        %v1513 = vadd.f32 %v1511, %v1512
        %v1514 = vrot.slane %v1513, 4
        %v1515 = vadd.f32 %v1513, %v1514
        %v1516 = vrot.slane %v1515, 2
        %v1517 = vadd.f32 %v1515, %v1516
        %v1518 = vrot.slane %v1517, 1
        %v1519 = vadd.f32 %v1517, %v1518
        %s1520 = scalar_lea.vmem [#allocation7], %s1467
        %1521 = vst.msk [vmem:[%s1520] sm:$0x1] %vm915, %v1519
        %s1522 = sadd.s32 %s820, 12
        %s1523 = scalar_lea.vmem [#allocation3], %s1522
        %v1524 = vld [vmem:[%s1523] sm:$0x1]
        %s1525 = scalar_lea.vmem [#allocation4], %s1522
        %v1526 = vld [vmem:[%s1525] sm:$0x1]
        %v1527 = vmul.f32 %v1524, %v1526
        %v1528 = vlaneseq
        %v1529 = vshrl.u32 %v1528, 7
        %v1530 = vsub.s32 0, %v1529
        %v1531 = vrot.slane %v1524, %v1530
        %v1532 = vmul.f32 %v1531, %v821
        %v1533 = vmul.f32 %v1531, %v822
        %v1534 = vmul.f32 %v1532, 1.442695
        %v1535 = vpow.pop %v1534
        %v1536 = vmul.f32 %v1533, 1.442695
        %v1537 = vpow.pop %v1536
        %v1538 = vmul.f32 %v1535, %v1499
        %v1539 = vmul.f32 %v1537, %v1500
        %1540 = vset.pattern.permute.xlu0 12
        %1541 = vperm.xlu0 %1540, %v842
        %v1542 = vpop.permute.xlu0 %1541
        %1544 = vset.pattern.permute.xlu0 12
        %1545 = vperm.xlu0 %1544, %v843
        %v1546 = vpop.permute.xlu0 %1545
        %v1548 = vlaneseq
        %v1549 = vshrl.u32 %v1548, 7
        %v1550 = vsub.s32 0, %v1549
        %v1551 = vrot.slane %v1527, %v1550
        %v1552 = vmul.f32 %v1542, %v1551
        %v1553 = vmul.f32 %v1546, %v1551
        %v1554 = vadd.f32 %v1538, %v1552
        %v1555 = vadd.f32 %v1539, %v1553
        %1556 = vset.pattern.permute.xlu0 12
        %1557 = vperm.xlu0 %1556, %v844
        %v1558 = vpop.permute.xlu0 %1557
        %1560 = vset.pattern.permute.xlu0 12
        %1561 = vperm.xlu0 %1560, %v845
        %v1562 = vpop.permute.xlu0 %1561
        %v1564 = vmul.f32 %v1558, %v1554
        %v1565 = vmul.f32 %v1562, %v1555
        %v1566 = vsel %vm476, %v1564, 0.0
        %v1567 = vsel %vm476, %v1565, 0.0
        %v1568 = vadd.f32 %v1566, %v1567
        %v1569 = vrot.slane %v1568, 4
        %v1570 = vadd.f32 %v1568, %v1569
        %v1571 = vrot.slane %v1570, 2
        %v1572 = vadd.f32 %v1570, %v1571
        %v1573 = vrot.slane %v1572, 1
        %v1574 = vadd.f32 %v1572, %v1573
        %s1575 = scalar_lea.vmem [#allocation7], %s1522
        %1576 = vst.msk [vmem:[%s1575] sm:$0x1] %vm915, %v1574
        %s1577 = sadd.s32 %s820, 13
        %s1578 = scalar_lea.vmem [#allocation3], %s1577
        %v1579 = vld [vmem:[%s1578] sm:$0x1]
        %s1580 = scalar_lea.vmem [#allocation4], %s1577
        %v1581 = vld [vmem:[%s1580] sm:$0x1]
        %v1582 = vmul.f32 %v1579, %v1581
        %v1583 = vlaneseq
        %v1584 = vshrl.u32 %v1583, 7
        %v1585 = vsub.s32 0, %v1584
        %v1586 = vrot.slane %v1579, %v1585
        %v1587 = vmul.f32 %v1586, %v821
        %v1588 = vmul.f32 %v1586, %v822
        %v1589 = vmul.f32 %v1587, 1.442695
        %v1590 = vpow.pop %v1589
        %v1591 = vmul.f32 %v1588, 1.442695
        %v1592 = vpow.pop %v1591
        %v1593 = vmul.f32 %v1590, %v1554
        %v1594 = vmul.f32 %v1592, %v1555
        %1595 = vset.pattern.permute.xlu0 13
        %1596 = vperm.xlu0 %1595, %v842
        %v1597 = vpop.permute.xlu0 %1596
        %1599 = vset.pattern.permute.xlu0 13
        %1600 = vperm.xlu0 %1599, %v843
        %v1601 = vpop.permute.xlu0 %1600
        %v1603 = vlaneseq
        %v1604 = vshrl.u32 %v1603, 7
        %v1605 = vsub.s32 0, %v1604
        %v1606 = vrot.slane %v1582, %v1605
        %v1607 = vmul.f32 %v1597, %v1606
        %v1608 = vmul.f32 %v1601, %v1606
        %v1609 = vadd.f32 %v1593, %v1607
        %v1610 = vadd.f32 %v1594, %v1608
        %1611 = vset.pattern.permute.xlu0 13
        %1612 = vperm.xlu0 %1611, %v844
        %v1613 = vpop.permute.xlu0 %1612
        %1615 = vset.pattern.permute.xlu0 13
        %1616 = vperm.xlu0 %1615, %v845
        %v1617 = vpop.permute.xlu0 %1616
        %v1619 = vmul.f32 %v1613, %v1609
        %v1620 = vmul.f32 %v1617, %v1610
        %v1621 = vsel %vm476, %v1619, 0.0
        %v1622 = vsel %vm476, %v1620, 0.0
        %v1623 = vadd.f32 %v1621, %v1622
        %v1624 = vrot.slane %v1623, 4
        %v1625 = vadd.f32 %v1623, %v1624
        %v1626 = vrot.slane %v1625, 2
        %v1627 = vadd.f32 %v1625, %v1626
        %v1628 = vrot.slane %v1627, 1
        %v1629 = vadd.f32 %v1627, %v1628
        %s1630 = scalar_lea.vmem [#allocation7], %s1577
        %1631 = vst.msk [vmem:[%s1630] sm:$0x1] %vm915, %v1629
        %s1632 = sadd.s32 %s820, 14
        %s1633 = scalar_lea.vmem [#allocation3], %s1632
        %v1634 = vld [vmem:[%s1633] sm:$0x1]
        %s1635 = scalar_lea.vmem [#allocation4], %s1632
        %v1636 = vld [vmem:[%s1635] sm:$0x1]
        %v1637 = vmul.f32 %v1634, %v1636
        %v1638 = vlaneseq
        %v1639 = vshrl.u32 %v1638, 7
        %v1640 = vsub.s32 0, %v1639
        %v1641 = vrot.slane %v1634, %v1640
        %v1642 = vmul.f32 %v1641, %v821
        %v1643 = vmul.f32 %v1641, %v822
        %v1644 = vmul.f32 %v1642, 1.442695
        %v1645 = vpow.pop %v1644
        %v1646 = vmul.f32 %v1643, 1.442695
        %v1647 = vpow.pop %v1646
        %v1648 = vmul.f32 %v1645, %v1609
        %v1649 = vmul.f32 %v1647, %v1610
        %1650 = vset.pattern.permute.xlu0 14
        %1651 = vperm.xlu0 %1650, %v842
        %v1652 = vpop.permute.xlu0 %1651
        %1654 = vset.pattern.permute.xlu0 14
        %1655 = vperm.xlu0 %1654, %v843
        %v1656 = vpop.permute.xlu0 %1655
        %v1658 = vlaneseq
        %v1659 = vshrl.u32 %v1658, 7
        %v1660 = vsub.s32 0, %v1659
        %v1661 = vrot.slane %v1637, %v1660
        %v1662 = vmul.f32 %v1652, %v1661
        %v1663 = vmul.f32 %v1656, %v1661
        %v1664 = vadd.f32 %v1648, %v1662
        %v1665 = vadd.f32 %v1649, %v1663
        %1666 = vset.pattern.permute.xlu0 14
        %1667 = vperm.xlu0 %1666, %v844
        %v1668 = vpop.permute.xlu0 %1667
        %1670 = vset.pattern.permute.xlu0 14
        %1671 = vperm.xlu0 %1670, %v845
        %v1672 = vpop.permute.xlu0 %1671
        %v1674 = vmul.f32 %v1668, %v1664
        %v1675 = vmul.f32 %v1672, %v1665
        %v1676 = vsel %vm476, %v1674, 0.0
        %v1677 = vsel %vm476, %v1675, 0.0
        %v1678 = vadd.f32 %v1676, %v1677
        %v1679 = vrot.slane %v1678, 4
        %v1680 = vadd.f32 %v1678, %v1679
        %v1681 = vrot.slane %v1680, 2
        %v1682 = vadd.f32 %v1680, %v1681
        %v1683 = vrot.slane %v1682, 1
        %v1684 = vadd.f32 %v1682, %v1683
        %s1685 = scalar_lea.vmem [#allocation7], %s1632
        %1686 = vst.msk [vmem:[%s1685] sm:$0x1] %vm915, %v1684
        %s1687 = sadd.s32 %s820, 15
        %s1688 = scalar_lea.vmem [#allocation3], %s1687
        %v1689 = vld [vmem:[%s1688] sm:$0x1]
        %s1690 = scalar_lea.vmem [#allocation4], %s1687
        %v1691 = vld [vmem:[%s1690] sm:$0x1]
        %v1692 = vmul.f32 %v1689, %v1691
        %v1693 = vlaneseq
        %v1694 = vshrl.u32 %v1693, 7
        %v1695 = vsub.s32 0, %v1694
        %v1696 = vrot.slane %v1689, %v1695
        %v1697 = vmul.f32 %v1696, %v821
        %v1698 = vmul.f32 %v1696, %v822
        %v1699 = vmul.f32 %v1697, 1.442695
        %v1700 = vpow.pop %v1699
        %v1701 = vmul.f32 %v1698, 1.442695
        %v1702 = vpow.pop %v1701
        %v1703 = vmul.f32 %v1700, %v1664
        %v1704 = vmul.f32 %v1702, %v1665
        %1705 = vset.pattern.permute.xlu0 15
        %1706 = vperm.xlu0 %1705, %v842
        %v1707 = vpop.permute.xlu0 %1706
        %1709 = vset.pattern.permute.xlu0 15
        %1710 = vperm.xlu0 %1709, %v843
        %v1711 = vpop.permute.xlu0 %1710
        %v1713 = vlaneseq
        %v1714 = vshrl.u32 %v1713, 7
        %v1715 = vsub.s32 0, %v1714
        %v1716 = vrot.slane %v1692, %v1715
        %v1717 = vmul.f32 %v1707, %v1716
        %v1718 = vmul.f32 %v1711, %v1716
        %v1719 = vadd.f32 %v1703, %v1717
        %v1720 = vadd.f32 %v1704, %v1718
        %1721 = vset.pattern.permute.xlu0 15
        %1722 = vperm.xlu0 %1721, %v844
        %v1723 = vpop.permute.xlu0 %1722
        %1725 = vset.pattern.permute.xlu0 15
        %1726 = vperm.xlu0 %1725, %v845
        %v1727 = vpop.permute.xlu0 %1726
        %v1729 = vmul.f32 %v1723, %v1719
        %v1730 = vmul.f32 %v1727, %v1720
        %v1731 = vsel %vm476, %v1729, 0.0
        %v1732 = vsel %vm476, %v1730, 0.0
        %v1733 = vadd.f32 %v1731, %v1732
        %v1734 = vrot.slane %v1733, 4
        %v1735 = vadd.f32 %v1733, %v1734
        %v1736 = vrot.slane %v1735, 2
        %v1737 = vadd.f32 %v1735, %v1736
        %v1738 = vrot.slane %v1737, 1
        %v1739 = vadd.f32 %v1737, %v1738
        %s1740 = scalar_lea.vmem [#allocation7], %s1687
        %1741 = vst.msk [vmem:[%s1740] sm:$0x1] %vm915, %v1739
      $region65: #{tpu_custom_call.1} parent=47 // loop_footer
        %s817 = sadd.s32 1, %s813
      $region66: #{tpu_custom_call.1} parent=47 // loop_footer_branch
        %812 = sbr.rel target = $region62
      $region67: #{tpu_custom_call.1} parent=47 // loop_exit
        _
      %1742 = vst.msk [vmem:[#allocation8] sm:$0xff] %vm476, %v818
      %1743 = vst.msk [vmem:[#allocation8 + $0x8] sm:$0xff] %vm476, %v819
      %v1744 = vld [vmem:[#allocation7] sm:$0xff]
      %v1745 = vld [vmem:[#allocation7 + $0x8] sm:$0xff]
      %v1746 = vld [vmem:[#allocation7 + $0x10] sm:$0xff]
      %v1747 = vld [vmem:[#allocation7 + $0x18] sm:$0xff]
      %v1748 = vld [vmem:[%s3 + $0x16] sm:$0x1]
      %v1749 = vld [vmem:[#allocation4] sm:$0xff]
      %v1750 = vld [vmem:[#allocation4 + $0x8] sm:$0xff]
      %v1751 = vld [vmem:[#allocation4 + $0x10] sm:$0xff]
      %v1752 = vld [vmem:[#allocation4 + $0x18] sm:$0xff]
      %v1753 = vlaneseq
      %v1754 = vshrl.u32 %v1753, 7
      %v1755 = vsub.s32 0, %v1754
      %v1756 = vrot.slane %v1748, %v1755
      %v1757 = vmul.f32 %v1756, %v1749
      %v1758 = vmul.f32 %v1756, %v1750
      %v1759 = vmul.f32 %v1756, %v1751
      %v1760 = vmul.f32 %v1756, %v1752
      %v1761 = vadd.f32 %v1744, %v1757
      %v1762 = vadd.f32 %v1745, %v1758
      %v1763 = vadd.f32 %v1746, %v1759
      %v1764 = vadd.f32 %v1747, %v1760
      %v1765 = vld [vmem:[#allocation5] sm:$0xff]
      %v1766 = vld [vmem:[#allocation5 + $0x8] sm:$0xff]
      %v1767 = vld [vmem:[#allocation5 + $0x10] sm:$0xff]
      %v1768 = vld [vmem:[#allocation5 + $0x18] sm:$0xff]
      %v1769 = vsub.f32 0.0, %v1765
      %v1770 = vsub.f32 0.0, %v1766
      %v1771 = vsub.f32 0.0, %v1767
      %v1772 = vsub.f32 0.0, %v1768
      %v1773 = vmul.f32 %v1769, 1.442695
      %v1774 = vpow.pop %v1773
      %v1775 = vmul.f32 %v1770, 1.442695
      %v1776 = vpow.pop %v1775
      %v1777 = vmul.f32 %v1771, 1.442695
      %v1778 = vpow.pop %v1777
      %v1779 = vmul.f32 %v1772, 1.442695
      %v1780 = vpow.pop %v1779
      %v1781 = vadd.f32 %v1774, 1.0
      %v1782 = vadd.f32 %v1776, 1.0
      %v1783 = vadd.f32 %v1778, 1.0
      %v1784 = vadd.f32 %v1780, 1.0
      %v1785 = vrcp.pop %v1781
      %v1786 = vmul.f32 1.0, %v1785
      %v1787 = vrcp.pop %v1782
      %v1788 = vmul.f32 1.0, %v1787
      %v1789 = vrcp.pop %v1783
      %v1790 = vmul.f32 1.0, %v1789
      %v1791 = vrcp.pop %v1784
      %v1792 = vmul.f32 1.0, %v1791
      %v1793 = vmul.f32 %v1765, %v1786
      %v1794 = vmul.f32 %v1766, %v1788
      %v1795 = vmul.f32 %v1767, %v1790
      %v1796 = vmul.f32 %v1768, %v1792
      %v1797 = vmul.f32 %v1761, %v1793
      %v1798 = vmul.f32 %v1762, %v1794
      %v1799 = vmul.f32 %v1763, %v1795
      %v1800 = vmul.f32 %v1764, %v1796
      %v1801 = vpack.c.bf16 %v1798, %v1797
      %v1802 = vpack.c.bf16 %v1800, %v1799
      %v1803 = vld [vmem:[%s6] sm:$0xf]
      %v1804 = vld [vmem:[%s6 + $0x4] sm:$0xf]
      %v1805 = vld [vmem:[%s6 + $0x8] sm:$0xf]
      %v1806 = vld [vmem:[%s6 + $0xc] sm:$0xf]
      %v1807 = vld [vmem:[%s306] sm:$0xff]
      %v1808 = vld [vmem:[%s306 + $0x8] sm:$0xff]
      %v1809 = vld [vmem:[%s306 + $0x10] sm:$0xff]
      %v1810 = vld [vmem:[%s306 + $0x18] sm:$0xff]
      %v1815 = vunpack.c.l.b16 %v1803
      %v1816 = vunpack.c.l.b16 %v1804
      %v1817 = vunpack.c.l.b16 %v1805
      %v1818 = vunpack.c.l.b16 %v1806
      %v1819 = vpack.c.b16 %v1816, %v1815
      %v1820 = vpack.c.b16 %v1818, %v1817
      %v1824 = vsel %vm476, %v1801, 0
      %v1827 = vsel %vm476, %v1802, 0
      %1829 = vmatprep.subr.bf16.mxu0 0
      %1830 = vmatpush1.bf16.msra.mxu0 %v1819
      %1831 = vmatprep.subr.bf16.mxu0 0
      %1832 = vmatpush1.bf16.msra.mxu0 %v1820
      %1833 = vmatprep.subr.bf16.mxu0 0
      %1834 = vmatpush1.bf16.msra.mxu0 0
      %1835 = vmatprep.subr.bf16.mxu0 0
      %1836 = vmatpush1.bf16.msra.mxu0 0
      %1837 = vmatprep.subr.bf16.mxu0 0
      %1838 = vmatpush1.bf16.msra.mxu0 0
      %1839 = vmatprep.subr.bf16.mxu0 0
      %1840 = vmatpush1.bf16.msra.mxu0 0
      %1841 = vmatprep.subr.bf16.mxu0 0
      %1842 = vmatpush1.bf16.msra.mxu0 0
      %1843 = vmatprep.subr.bf16.mxu0 0
      %1844 = vmatpush1.bf16.msra.mxu0 0
      %1845 = vmatprep.subr.bf16.mxu0 0
      %1846 = vmatpush1.bf16.msra.mxu0 0
      %1847 = vmatprep.subr.bf16.mxu0 0
      %1848 = vmatpush1.bf16.msra.mxu0 0
      %1849 = vmatprep.subr.bf16.mxu0 0
      %1850 = vmatpush1.bf16.msra.mxu0 0
      %1851 = vmatprep.subr.bf16.mxu0 0
      %1852 = vmatpush1.bf16.msra.mxu0 0
      %1853 = vmatprep.subr.bf16.mxu0 0
      %1854 = vmatpush1.bf16.msra.mxu0 0
      %1855 = vmatprep.subr.bf16.mxu0 0
      %1856 = vmatpush1.bf16.msra.mxu0 0
      %1857 = vmatprep.subr.bf16.mxu0 0
      %1858 = vmatpush1.bf16.msra.mxu0 0
      %1859 = vmatprep.subr.bf16.mxu0 0
      %1860 = vmatpush1.bf16.msra.mxu0 0
      %1861 = vmatprep.mubr.bf16.mxu0 0
      %1862 = vmatmul.mubr.bf16.gmra.mrb[0].mxu0 %v1824
      %v1863 = vpop.f32.mrb[0].mxu0
      %v1864 = vadd.f32 %v1807, %v1863
      %v1865 = vpop.f32.mrb[0].mxu0
      %v1866 = vpop.f32.mrb[0].mxu0
      %v1867 = vadd.f32 %v1808, %v1866
      %v1868 = vpop.f32.mrb[0].mxu0
      %1869 = vmatprep.mubr.bf16.mxu0 0
      %1870 = vmatmul.mubr.bf16.gmra.mrb[0].mxu0 %v1827
      %v1871 = vpop.f32.mrb[0].mxu0
      %v1872 = vadd.f32 %v1809, %v1871
      %v1873 = vpop.f32.mrb[0].mxu0
      %v1874 = vpop.f32.mrb[0].mxu0
      %v1875 = vadd.f32 %v1810, %v1874
      %v1876 = vpop.f32.mrb[0].mxu0
      %1877 = vdwg.mxu0
      %1878 = vst.msk [vmem:[%s316] sm:$0xff] %vm325, %v1864
      %1879 = vst.msk [vmem:[%s316 + $0x8] sm:$0xff] %vm325, %v1867
      %1880 = vst.msk [vmem:[%s316 + $0x10] sm:$0xff] %vm325, %v1872
      %1881 = vst.msk [vmem:[%s316 + $0x18] sm:$0xff] %vm325, %v1875
      %s1882 = smul.u32 4, %s23
      %p1883 = scmp.lt.s32.totalorder %s22, 1
      %s1884 = scalar_select %p1883, %s22, 1
      %p1885 = scmp.lt.s32.totalorder %s1882, 7
      %s1886 = scalar_select %p1885, %s1882, 7
      %s1887 = smul.addr %s1884, 8
      %s1888 = sadd.s32 %s1886, %s1887
      %s1889 = smul.addr %s1888, 8
      %s1890 = scalar_lea.vmem %s7, %s1889
      // Predicated region
      $region68: #{tpu_custom_call.1} parent=47 // pred_check
        %p1891 = pneg %p204
      $region69: #{tpu_custom_call.1} parent=47 // pred_check_branch
        %1893 = sbr.rel (%p1891) target = $region71
      $region70: #{tpu_custom_call.1} parent=47 // pred_region
        %s1894 = smul.u32 4, %s23
      $region71: #{tpu_custom_call.1} parent=47 // pred_fallthru
        _
    $region48: #{tpu_custom_call.1} parent=5 // pred_fallthru
      _
    %p1895 = scmp.le.s32.totalorder 2, %s13
    // Predicated region
    $region72: #{tpu_custom_call.1} parent=5 // pred_check
      %p1896 = pneg %p1895
    $region73: #{tpu_custom_call.1} parent=5 // pred_check_branch
      %1898 = sbr.rel (%p1896) target = $region75
    $region74: #{tpu_custom_call.1} parent=5 // pred_region
      %s1899 = ssub.s32 %s13, 2
      // Predicated region
      $region76: #{tpu_custom_call.1} parent=74 // pred_check
        %p1900 = pneg %p210
      $region77: #{tpu_custom_call.1} parent=74 // pred_check_branch
        %1902 = sbr.rel (%p1900) target = $region79
      $region78: #{tpu_custom_call.1} parent=74 // pred_region
        %s1903 = smul.u32 4, %s25
        %p1904 = scmp.lt.s32.totalorder %s24, 1
        %s1905 = scalar_select %p1904, %s24, 1
        %p1906 = scmp.lt.s32.totalorder %s1903, 7
        %s1907 = scalar_select %p1906, %s1903, 7
        %s1908 = smul.addr %s1905, 8
        %s1909 = sadd.s32 %s1907, %s1908
        %s1910 = smul.addr %s1909, 8
        %s1911 = scalar_lea.vmem %s7, %s1910
      $region79: #{tpu_custom_call.1} parent=74 // pred_fallthru
        _
    $region75: #{tpu_custom_call.1} parent=5 // pred_fallthru
      _
  $region6: #{tpu_custom_call.1} parent=0 // loop_footer
    %s17 = sadd.s32 1, %s13
  $region7: #{tpu_custom_call.1} parent=0 // loop_footer_branch
    %12 = sbr.rel target = $region3
  $region8: #{tpu_custom_call.1} parent=0 // loop_exit
    _

</llo_original>
